<compile_context>
chip_gen: v6e
topology: v6e:2x2x1
jax: 0.10.0
libtpu: 0.0.40
codegen_flags: <defaults>
</compile_context>

<pallas_src>
import jax
import jax.numpy as jnp
import numpy as np
from jax.experimental import pallas as pl
from jax.experimental.pallas import tpu as pltpu


# ----------------------- host-side constant factor builders ------------------ #

def _bilinear_1d(f):
    """1-D bilinear ConvTranspose kernel of length 2f (== DLA fill_up_weights)."""
    c = (2 * f - 1 - f % 2) / (2.0 * f)
    return np.array([1.0 - abs(i / f - c) for i in range(2 * f)], np.float64)


def _upsample_1d_matrix(f, n):
    """(n, f*n) matrix M s.t. out = in @ M is the 1-D bilinear ConvTranspose
    with kernel 2f, stride f, padding f//2 (output length f*n)."""
    k1 = _bilinear_1d(f)
    pad = f // 2
    m = np.zeros((n, f * n), np.float64)
    for i in range(n):
        for x in range(f * n):
            k = x + pad - f * i
            if 0 <= k < 2 * f:
                m[i, x] = k1[k]
    return m


def _upsample_kron(f, h, w):
    """(h*w, (f*h)*(f*w)): separable bilinear upsample as ONE matmul factor."""
    return np.kron(_upsample_1d_matrix(f, h),
                   _upsample_1d_matrix(f, w)).astype(np.float32)


def _tap_masks(h, w):
    """(9, h*w) 0/1 masks; mask[t, p] == 1 iff 3x3 tap t of flat pixel p stays
    inside the image (zero-padding semantics for a 'same' conv).  The masks also
    zero taps that would cross a row or read into a neighbouring image."""
    hh, ww = np.meshgrid(np.arange(h), np.arange(w), indexing="ij")
    rows = []
    for dh in (-1, 0, 1):
        for dw in (-1, 0, 1):
            ok = (hh + dh >= 0) & (hh + dh < h) & (ww + dw >= 0) & (ww + dw < w)
            rows.append(ok.reshape(-1).astype(np.float32))
    return np.stack(rows)


# ------------------------------- in-kernel ops ------------------------------- #

def _conv3x3_bn_relu(x_bf16, w_ref, mask_ref, bias_ref, wcols):
    """3x3 'same' conv + folded-BN bias + ReLU on a lane-dense (Cin, H*W) slab.

    9 accumulated (Co,Cin)@(Cin,H*W) bf16 MXU matmuls.  Shifted taps are
    constant-offset lane slices of a zero-margined copy of the slab (same data
    flow as roll+mask, but with guaranteed lowering); out-of-image taps are
    zeroed by the per-tap mask applied to the f32 (Co,H*W) product, so the f32
    accumulator and the final result stay fully lane-dense.
    """
    ci, hw = x_bf16.shape
    margin = wcols + 1                                   # >= max |dh*W + dw|
    zpad = jnp.zeros((ci, margin), x_bf16.dtype)
    xz = jnp.concatenate([zpad, x_bf16, zpad], axis=-1)  # (ci, hw + 2*margin) bf16
    acc = None
    t = 0
    for dh in (-1, 0, 1):
        for dw in (-1, 0, 1):
            d = dh * wcols + dw
            tap = xz[:, margin + d: margin + d + hw]     # (ci, hw) bf16
            r = jnp.dot(w_ref[t], tap, preferred_element_type=jnp.float32)
            if (dh, dw) != (0, 0):                       # centre tap never leaves the image
                r = r * mask_ref[t:t + 1, :]             # (1, hw) f32 broadcast
            acc = r if acc is None else acc + r
            t += 1
    return jnp.maximum(acc + bias_ref[...], 0.0)         # (co, hw) f32


# ------------------------------ fused IDAUp call ------------------------------ #

def ida_up_forward(params, layers, startp, endp):
    """Fused IDAUp forward: ONE pallas_call covering every pyramid level.
    Returns a new layers list with layers[startp+1:endp] replaced (matching the
    in-place mutation of the PyTorch module)."""
    layers = list(layers)
    nlev = endp - startp - 1
    if nlev <= 0:
        return layers

    base = layers[startp]                          # residual for the first level
    n, o, hb, wb = base.shape
    node_mask = jnp.asarray(_tap_masks(hb, wb))    # every node conv runs at base res

    inputs = [base.reshape(n, o, hb * wb), node_mask]
    in_specs = [
        pl.BlockSpec((1, o, hb * wb), lambda b: (b, 0, 0)),
        pl.BlockSpec((9, hb * wb), lambda b: (0, 0)),
    ]
    meta = []
    for i in range(startp + 1, endp):
        lp = params[i - startp]
        x = layers[i]
        _, ci, hi, wi = x.shape
        assert lp["f"] * hi == hb and lp["f"] * wi == wb
        inputs += [
            x.reshape(n, ci, hi * wi).astype(jnp.bfloat16),   # lane-dense bf16 slab
            lp["proj_w"], lp["proj_b"], lp["proj_mask"], lp["up_kron"],
            lp["node_w"], lp["node_b"],
        ]
        in_specs += [
            pl.BlockSpec((1, ci, hi * wi), lambda b: (b, 0, 0)),
            pl.BlockSpec((9, o, ci), lambda b: (0, 0, 0)),
            pl.BlockSpec((o, 1), lambda b: (0, 0)),
            pl.BlockSpec((9, hi * wi), lambda b: (0, 0)),
            pl.BlockSpec((hi * wi, hb * wb), lambda b: (0, 0)),
            pl.BlockSpec((9, o, o), lambda b: (0, 0, 0)),
            pl.BlockSpec((o, 1), lambda b: (0, 0)),
        ]
        meta.append((ci, hi, wi))

    def kernel(*refs):
        prev_ref, nmask_ref = refs[0], refs[1]
        out_refs = refs[2 + 7 * nlev:]
        prev = prev_ref[0]                                        # (o, hb*wb) f32
        for li, (ci, hi, wi) in enumerate(meta):
            (x_ref, wp_ref, bp_ref, mp_ref, u_ref,
             wn_ref, bn_ref) = refs[2 + 7 * li: 2 + 7 * (li + 1)]
            # proj_i: DeformConv (3x3 conv, BN scale pre-folded) + bias + ReLU
            p = _conv3x3_bn_relu(x_ref[0], wp_ref, mp_ref, bp_ref, wi)   # (o, hi*wi)
            # up_i: depthwise bilinear ConvTranspose2d == one Kronecker matmul
            up = jnp.dot(p.astype(jnp.bfloat16), u_ref[...],
                         preferred_element_type=jnp.float32)             # (o, hb*wb)
            # node_i: DeformConv on the residual sum (prev stays on-chip, f32)
            s = up + prev
            y = _conv3x3_bn_relu(s.astype(jnp.bfloat16), wn_ref, nmask_ref,
                                 bn_ref, wb)                              # (o, hb*wb)
            out_refs[li][0] = y.astype(out_refs[li].dtype)                # lane-dense store
            prev = y                                                      # chain to next level

    outs = pl.pallas_call(
        kernel,
        grid=(n,),
        in_specs=in_specs,
        out_specs=tuple(pl.BlockSpec((1, o, hb * wb), lambda b: (b, 0, 0))
                        for _ in range(nlev)),
        out_shape=tuple(jax.ShapeDtypeStruct((n, o, hb * wb), jnp.float32)
                        for _ in range(nlev)),
        compiler_params=pltpu.CompilerParams(
            dimension_semantics=("parallel",)),     # batch shards over v7x's 2 TCs
    )(*inputs)

    for li, i in enumerate(range(startp + 1, endp)):
        layers[i] = outs[li].reshape(n, o, hb, wb)  # free reshape back to NCHW
    return layers


# ------------------------------ parameter setup ------------------------------- #

def _fold_bn(gamma, beta, mean, var, eps=1e-5):
    scale = gamma / jnp.sqrt(var + eps)
    bias = beta - mean * scale
    return scale, bias


def _conv_to_taps(w_hwio, scale):
    """(3,3,Cin,Cout) HWIO conv weight with per-Cout BN scale folded in ->
    (9, Cout, Cin) bf16, tap-major: t = 3*(dh+1) + (dw+1)."""
    w = w_hwio * scale[None, None, None, :]
    co = w.shape[-1]
    return jnp.transpose(w, (0, 1, 3, 2)).reshape(9, co, -1).astype(jnp.bfloat16)


def init_ida_up_params(key, o, channels, up_f, spatial):
    """Deterministic synthetic parameters for IDAUp(o, channels, up_f).
    spatial[i] = (H, W) of pyramid level i."""
    params = {}
    for i in range(1, len(channels)):
        c = channels[i]
        f = int(up_f[i])
        hi, wi = spatial[i]
        keys = jax.random.split(jax.random.fold_in(key, i), 10)

        proj_w = 0.1 * jax.random.normal(keys[0], (3, 3, c, o), jnp.float32)
        proj_scale, proj_bias = _fold_bn(
            jax.random.uniform(keys[1], (o,), jnp.float32, 0.5, 1.5),
            0.05 * jax.random.normal(keys[2], (o,), jnp.float32),
            0.05 * jax.random.normal(keys[3], (o,), jnp.float32),
            jax.random.uniform(keys[4], (o,), jnp.float32, 0.5, 1.5))
        node_w = 0.1 * jax.random.normal(keys[5], (3, 3, o, o), jnp.float32)
        node_scale, node_bias = _fold_bn(
            jax.random.uniform(keys[6], (o,), jnp.float32, 0.5, 1.5),
            0.05 * jax.random.normal(keys[7], (o,), jnp.float32),
            0.05 * jax.random.normal(keys[8], (o,), jnp.float32),
            jax.random.uniform(keys[9], (o,), jnp.float32, 0.5, 1.5))

        params[i] = dict(
            f=f,
            # kernel-side tensors (BN scale folded into the bf16 MXU weights)
            proj_w=_conv_to_taps(proj_w, proj_scale),
            proj_b=proj_bias.reshape(o, 1),
            proj_mask=jnp.asarray(_tap_masks(hi, wi)),
            up_kron=jnp.asarray(_upsample_kron(f, hi, wi), jnp.bfloat16),
            node_w=_conv_to_taps(node_w, node_scale),
            node_b=node_bias.reshape(o, 1),
            # raw f32 pieces kept for the pure-JAX reference check
            ref=dict(proj_w=proj_w, proj_scale=proj_scale, proj_bias=proj_bias,
                     node_w=node_w, node_scale=node_scale, node_bias=node_bias),
        )
    return params


# ------------------------------ pure-JAX reference ---------------------------- #

def _ref_conv_bn_relu(x, w_hwio, scale, bias):
    y = jax.lax.conv_general_dilated(
        x, w_hwio, window_strides=(1, 1), padding=((1, 1), (1, 1)),
        dimension_numbers=("NCHW", "HWIO", "NCHW"),
        precision=jax.lax.Precision.HIGHEST)
    return jnp.maximum(y * scale[None, :, None, None] + bias[None, :, None, None], 0.0)


def _ref_upsample(p, f):
    _, _, h, w = p.shape
    mh = jnp.asarray(_upsample_1d_matrix(f, h), jnp.float32)
    mw = jnp.asarray(_upsample_1d_matrix(f, w), jnp.float32)
    return jnp.einsum("nchw,hy,wx->ncyx", p, mh, mw,
                      precision=jax.lax.Precision.HIGHEST)


def ida_up_reference(params, layers, startp, endp):
    layers = list(layers)
    for i in range(startp + 1, endp):
        lp = params[i - startp]
        rp = lp["ref"]
        p = _ref_conv_bn_relu(layers[i], rp["proj_w"], rp["proj_scale"], rp["proj_bias"])
        s = _ref_upsample(p, lp["f"]) + layers[i - 1]
        layers[i] = _ref_conv_bn_relu(s, rp["node_w"], rp["node_scale"], rp["node_bias"])
    return layers


# ------------------------------------- main ----------------------------------- #

if __name__ == "__main__":
    key = jax.random.PRNGKey(0)

    o = 8
    channels = [8, 16, 32]
    up_f = [1, 2, 4]
    n = 2
    startp, endp = 0, 3
    spatial = [(16, 16), (8, 8), (4, 4)]     # DLA pyramid: /1, /2, /4 of base

    params = init_ida_up_params(key, o, channels, up_f, spatial)

    # NCHW inputs
    k0, k1, k2 = jax.random.split(jax.random.fold_in(key, 1000), 3)
    layers = [
        jax.random.normal(k0, (n, channels[0]) + spatial[0], jnp.float32),
        jax.random.normal(k1, (n, channels[1]) + spatial[1], jnp.float32),
        jax.random.normal(k2, (n, channels[2]) + spatial[2], jnp.float32),
    ]

    out_layers = ida_up_forward(params, layers, startp, endp)
    for t in out_layers:
        jax.block_until_ready(t)

    assert out_layers[1].shape == (n, o, 16, 16)
    assert out_layers[2].shape == (n, o, 16, 16)

    # Loose structural check against a pure-JAX f32 reference (kernel uses bf16
    # MXU operands, so the tolerance is generous; a wrong tap/mask/Kron would be
    # O(1) off and is still caught).
    ref_layers = ida_up_reference(params, layers, startp, endp)
    for i in (1, 2):
        ok = bool(jnp.allclose(out_layers[i], ref_layers[i], atol=0.2, rtol=0.05))
        assert ok, f"level {i} mismatch vs reference"

    print("KERNEL_OK")
</pallas_src>

<mosaic_0001>
module attributes {stable_mosaic.version = 11 : i64} {
  func.func @kernel(%arg0: i32, %arg1: memref<1x8x256xf32, #tpu.memory_space<vmem>>, %arg2: memref<9x256xf32, #tpu.memory_space<vmem>>, %arg3: memref<1x16x64xbf16, #tpu.memory_space<vmem>>, %arg4: memref<9x8x16xbf16, #tpu.memory_space<vmem>>, %arg5: memref<8x1xf32, #tpu.memory_space<vmem>>, %arg6: memref<9x64xf32, #tpu.memory_space<vmem>>, %arg7: memref<64x256xbf16, #tpu.memory_space<vmem>>, %arg8: memref<9x8x8xbf16, #tpu.memory_space<vmem>>, %arg9: memref<8x1xf32, #tpu.memory_space<vmem>>, %arg10: memref<1x32x16xbf16, #tpu.memory_space<vmem>>, %arg11: memref<9x8x32xbf16, #tpu.memory_space<vmem>>, %arg12: memref<8x1xf32, #tpu.memory_space<vmem>>, %arg13: memref<9x16xf32, #tpu.memory_space<vmem>>, %arg14: memref<16x256xbf16, #tpu.memory_space<vmem>>, %arg15: memref<9x8x8xbf16, #tpu.memory_space<vmem>>, %arg16: memref<8x1xf32, #tpu.memory_space<vmem>>, %arg17: memref<1x8x256xf32, #tpu.memory_space<vmem>>, %arg18: memref<1x8x256xf32, #tpu.memory_space<vmem>>) attributes {dimension_semantics = [#tpu.dimension_semantics<parallel>], iteration_bounds = array<i64: 2>, scalar_prefetch = 0 : i64, scratch_operands = 0 : i64, tpu.core_type = #tpu.core_type<tc>, window_params = [{transform_indices = @transform_0, window_bounds = array<i64: 1, 8, 256>}, {pipeline_mode = #tpu.pipeline_mode<synchronous>, transform_indices = @transform_1, window_bounds = array<i64: 9, 256>}, {transform_indices = @transform_2, window_bounds = array<i64: 1, 16, 64>}, {pipeline_mode = #tpu.pipeline_mode<synchronous>, transform_indices = @transform_3, window_bounds = array<i64: 9, 8, 16>}, {pipeline_mode = #tpu.pipeline_mode<synchronous>, transform_indices = @transform_4, window_bounds = array<i64: 8, 1>}, {pipeline_mode = #tpu.pipeline_mode<synchronous>, transform_indices = @transform_5, window_bounds = array<i64: 9, 64>}, {pipeline_mode = #tpu.pipeline_mode<synchronous>, transform_indices = @transform_6, window_bounds = array<i64: 64, 256>}, {pipeline_mode = #tpu.pipeline_mode<synchronous>, transform_indices = @transform_7, window_bounds = array<i64: 9, 8, 8>}, {pipeline_mode = #tpu.pipeline_mode<synchronous>, transform_indices = @transform_8, window_bounds = array<i64: 8, 1>}, {transform_indices = @transform_9, window_bounds = array<i64: 1, 32, 16>}, {pipeline_mode = #tpu.pipeline_mode<synchronous>, transform_indices = @transform_10, window_bounds = array<i64: 9, 8, 32>}, {pipeline_mode = #tpu.pipeline_mode<synchronous>, transform_indices = @transform_11, window_bounds = array<i64: 8, 1>}, {pipeline_mode = #tpu.pipeline_mode<synchronous>, transform_indices = @transform_12, window_bounds = array<i64: 9, 16>}, {pipeline_mode = #tpu.pipeline_mode<synchronous>, transform_indices = @transform_13, window_bounds = array<i64: 16, 256>}, {pipeline_mode = #tpu.pipeline_mode<synchronous>, transform_indices = @transform_14, window_bounds = array<i64: 9, 8, 8>}, {pipeline_mode = #tpu.pipeline_mode<synchronous>, transform_indices = @transform_15, window_bounds = array<i64: 8, 1>}, {transform_indices = @transform_16, window_bounds = array<i64: 1, 8, 256>}, {transform_indices = @transform_17, window_bounds = array<i64: 1, 8, 256>}]} {
    %c0 = arith.constant 0 : index
    %c0_0 = arith.constant 0 : index
    %c0_1 = arith.constant 0 : index
    %0 = vector.load %arg1[%c0, %c0_0, %c0_1] : memref<1x8x256xf32, #tpu.memory_space<vmem>>, vector<1x8x256xf32>
    %1 = vector.shape_cast %0 : vector<1x8x256xf32> to vector<8x256xf32>
    %c0_2 = arith.constant 0 : index
    %c0_3 = arith.constant 0 : index
    %c0_4 = arith.constant 0 : index
    %2 = vector.load %arg3[%c0_2, %c0_3, %c0_4] : memref<1x16x64xbf16, #tpu.memory_space<vmem>>, vector<1x16x64xbf16>
    %3 = vector.shape_cast %2 : vector<1x16x64xbf16> to vector<16x64xbf16>
    %cst = arith.constant 0.000000e+00 : bf16
    %4 = vector.broadcast %cst : bf16 to vector<16x9xbf16>
    %5 = tpu.concatenate %4, %3, %4 in 1 : vector<16x9xbf16>, vector<16x64xbf16>, vector<16x9xbf16> -> vector<16x82xbf16>
    %6 = vector.extract_strided_slice %5 {offsets = [0, 0], sizes = [16, 64], strides = [1, 1]} : vector<16x82xbf16> to vector<16x64xbf16>
    %c0_5 = arith.constant 0 : index
    %c0_6 = arith.constant 0 : index
    %c0_7 = arith.constant 0 : index
    %7 = vector.load %arg4[%c0_5, %c0_6, %c0_7] : memref<9x8x16xbf16, #tpu.memory_space<vmem>>, vector<1x8x16xbf16>
    %8 = vector.shape_cast %7 : vector<1x8x16xbf16> to vector<8x16xbf16>
    %cst_8 = arith.constant dense<0.000000e+00> : vector<8x64xf32>
    %9 = tpu.matmul %8, %6, %cst_8 {dimension_numbers = #tpu.dot_dimension_numbers<[1], [0], [0], [1], [0, 0, 1, 1], [], []>} : vector<8x16xbf16>, vector<16x64xbf16>, vector<8x64xf32> -> vector<8x64xf32>
    %c0_9 = arith.constant 0 : index
    %c0_10 = arith.constant 0 : index
    %10 = vector.load %arg6[%c0_9, %c0_10] : memref<9x64xf32, #tpu.memory_space<vmem>>, vector<1x64xf32>
    %11 = vector.broadcast %10 : vector<1x64xf32> to vector<8x64xf32>
    %12 = arith.mulf %9, %11 : vector<8x64xf32>
    %13 = vector.extract_strided_slice %5 {offsets = [0, 1], sizes = [16, 64], strides = [1, 1]} : vector<16x82xbf16> to vector<16x64xbf16>
    %c1 = arith.constant 1 : index
    %c0_11 = arith.constant 0 : index
    %c0_12 = arith.constant 0 : index
    %14 = vector.load %arg4[%c1, %c0_11, %c0_12] : memref<9x8x16xbf16, #tpu.memory_space<vmem>>, vector<1x8x16xbf16>
    %15 = vector.shape_cast %14 : vector<1x8x16xbf16> to vector<8x16xbf16>
    %cst_13 = arith.constant dense<0.000000e+00> : vector<8x64xf32>
    %16 = tpu.matmul %15, %13, %cst_13 {dimension_numbers = #tpu.dot_dimension_numbers<[1], [0], [0], [1], [0, 0, 1, 1], [], []>} : vector<8x16xbf16>, vector<16x64xbf16>, vector<8x64xf32> -> vector<8x64xf32>
    %c1_14 = arith.constant 1 : index
    %c0_15 = arith.constant 0 : index
    %17 = vector.load %arg6[%c1_14, %c0_15] : memref<9x64xf32, #tpu.memory_space<vmem>>, vector<1x64xf32>
    %18 = vector.broadcast %17 : vector<1x64xf32> to vector<8x64xf32>
    %19 = arith.mulf %16, %18 : vector<8x64xf32>
    %20 = arith.addf %12, %19 : vector<8x64xf32>
    %21 = vector.extract_strided_slice %5 {offsets = [0, 2], sizes = [16, 64], strides = [1, 1]} : vector<16x82xbf16> to vector<16x64xbf16>
    %c2 = arith.constant 2 : index
    %c0_16 = arith.constant 0 : index
    %c0_17 = arith.constant 0 : index
    %22 = vector.load %arg4[%c2, %c0_16, %c0_17] : memref<9x8x16xbf16, #tpu.memory_space<vmem>>, vector<1x8x16xbf16>
    %23 = vector.shape_cast %22 : vector<1x8x16xbf16> to vector<8x16xbf16>
    %cst_18 = arith.constant dense<0.000000e+00> : vector<8x64xf32>
    %24 = tpu.matmul %23, %21, %cst_18 {dimension_numbers = #tpu.dot_dimension_numbers<[1], [0], [0], [1], [0, 0, 1, 1], [], []>} : vector<8x16xbf16>, vector<16x64xbf16>, vector<8x64xf32> -> vector<8x64xf32>
    %c2_19 = arith.constant 2 : index
    %c0_20 = arith.constant 0 : index
    %25 = vector.load %arg6[%c2_19, %c0_20] : memref<9x64xf32, #tpu.memory_space<vmem>>, vector<1x64xf32>
    %26 = vector.broadcast %25 : vector<1x64xf32> to vector<8x64xf32>
    %27 = arith.mulf %24, %26 : vector<8x64xf32>
    %28 = arith.addf %20, %27 : vector<8x64xf32>
    %29 = vector.extract_strided_slice %5 {offsets = [0, 8], sizes = [16, 64], strides = [1, 1]} : vector<16x82xbf16> to vector<16x64xbf16>
    %c3 = arith.constant 3 : index
    %c0_21 = arith.constant 0 : index
    %c0_22 = arith.constant 0 : index
    %30 = vector.load %arg4[%c3, %c0_21, %c0_22] : memref<9x8x16xbf16, #tpu.memory_space<vmem>>, vector<1x8x16xbf16>
    %31 = vector.shape_cast %30 : vector<1x8x16xbf16> to vector<8x16xbf16>
    %cst_23 = arith.constant dense<0.000000e+00> : vector<8x64xf32>
    %32 = tpu.matmul %31, %29, %cst_23 {dimension_numbers = #tpu.dot_dimension_numbers<[1], [0], [0], [1], [0, 0, 1, 1], [], []>} : vector<8x16xbf16>, vector<16x64xbf16>, vector<8x64xf32> -> vector<8x64xf32>
    %c3_24 = arith.constant 3 : index
    %c0_25 = arith.constant 0 : index
    %33 = vector.load %arg6[%c3_24, %c0_25] : memref<9x64xf32, #tpu.memory_space<vmem>>, vector<1x64xf32>
    %34 = vector.broadcast %33 : vector<1x64xf32> to vector<8x64xf32>
    %35 = arith.mulf %32, %34 : vector<8x64xf32>
    %36 = arith.addf %28, %35 : vector<8x64xf32>
    %37 = vector.extract_strided_slice %5 {offsets = [0, 9], sizes = [16, 64], strides = [1, 1]} : vector<16x82xbf16> to vector<16x64xbf16>
    %c4 = arith.constant 4 : index
    %c0_26 = arith.constant 0 : index
    %c0_27 = arith.constant 0 : index
    %38 = vector.load %arg4[%c4, %c0_26, %c0_27] : memref<9x8x16xbf16, #tpu.memory_space<vmem>>, vector<1x8x16xbf16>
    %39 = vector.shape_cast %38 : vector<1x8x16xbf16> to vector<8x16xbf16>
    %cst_28 = arith.constant dense<0.000000e+00> : vector<8x64xf32>
    %40 = tpu.matmul %39, %37, %cst_28 {dimension_numbers = #tpu.dot_dimension_numbers<[1], [0], [0], [1], [0, 0, 1, 1], [], []>} : vector<8x16xbf16>, vector<16x64xbf16>, vector<8x64xf32> -> vector<8x64xf32>
    %41 = arith.addf %36, %40 : vector<8x64xf32>
    %42 = vector.extract_strided_slice %5 {offsets = [0, 10], sizes = [16, 64], strides = [1, 1]} : vector<16x82xbf16> to vector<16x64xbf16>
    %c5 = arith.constant 5 : index
    %c0_29 = arith.constant 0 : index
    %c0_30 = arith.constant 0 : index
    %43 = vector.load %arg4[%c5, %c0_29, %c0_30] : memref<9x8x16xbf16, #tpu.memory_space<vmem>>, vector<1x8x16xbf16>
    %44 = vector.shape_cast %43 : vector<1x8x16xbf16> to vector<8x16xbf16>
    %cst_31 = arith.constant dense<0.000000e+00> : vector<8x64xf32>
    %45 = tpu.matmul %44, %42, %cst_31 {dimension_numbers = #tpu.dot_dimension_numbers<[1], [0], [0], [1], [0, 0, 1, 1], [], []>} : vector<8x16xbf16>, vector<16x64xbf16>, vector<8x64xf32> -> vector<8x64xf32>
    %c5_32 = arith.constant 5 : index
    %c0_33 = arith.constant 0 : index
    %46 = vector.load %arg6[%c5_32, %c0_33] : memref<9x64xf32, #tpu.memory_space<vmem>>, vector<1x64xf32>
    %47 = vector.broadcast %46 : vector<1x64xf32> to vector<8x64xf32>
    %48 = arith.mulf %45, %47 : vector<8x64xf32>
    %49 = arith.addf %41, %48 : vector<8x64xf32>
    %50 = vector.extract_strided_slice %5 {offsets = [0, 16], sizes = [16, 64], strides = [1, 1]} : vector<16x82xbf16> to vector<16x64xbf16>
    %c6 = arith.constant 6 : index
    %c0_34 = arith.constant 0 : index
    %c0_35 = arith.constant 0 : index
    %51 = vector.load %arg4[%c6, %c0_34, %c0_35] : memref<9x8x16xbf16, #tpu.memory_space<vmem>>, vector<1x8x16xbf16>
    %52 = vector.shape_cast %51 : vector<1x8x16xbf16> to vector<8x16xbf16>
    %cst_36 = arith.constant dense<0.000000e+00> : vector<8x64xf32>
    %53 = tpu.matmul %52, %50, %cst_36 {dimension_numbers = #tpu.dot_dimension_numbers<[1], [0], [0], [1], [0, 0, 1, 1], [], []>} : vector<8x16xbf16>, vector<16x64xbf16>, vector<8x64xf32> -> vector<8x64xf32>
    %c6_37 = arith.constant 6 : index
    %c0_38 = arith.constant 0 : index
    %54 = vector.load %arg6[%c6_37, %c0_38] : memref<9x64xf32, #tpu.memory_space<vmem>>, vector<1x64xf32>
    %55 = vector.broadcast %54 : vector<1x64xf32> to vector<8x64xf32>
    %56 = arith.mulf %53, %55 : vector<8x64xf32>
    %57 = arith.addf %49, %56 : vector<8x64xf32>
    %58 = vector.extract_strided_slice %5 {offsets = [0, 17], sizes = [16, 64], strides = [1, 1]} : vector<16x82xbf16> to vector<16x64xbf16>
    %c7 = arith.constant 7 : index
    %c0_39 = arith.constant 0 : index
    %c0_40 = arith.constant 0 : index
    %59 = vector.load %arg4[%c7, %c0_39, %c0_40] : memref<9x8x16xbf16, #tpu.memory_space<vmem>>, vector<1x8x16xbf16>
    %60 = vector.shape_cast %59 : vector<1x8x16xbf16> to vector<8x16xbf16>
    %cst_41 = arith.constant dense<0.000000e+00> : vector<8x64xf32>
    %61 = tpu.matmul %60, %58, %cst_41 {dimension_numbers = #tpu.dot_dimension_numbers<[1], [0], [0], [1], [0, 0, 1, 1], [], []>} : vector<8x16xbf16>, vector<16x64xbf16>, vector<8x64xf32> -> vector<8x64xf32>
    %c7_42 = arith.constant 7 : index
    %c0_43 = arith.constant 0 : index
    %62 = vector.load %arg6[%c7_42, %c0_43] : memref<9x64xf32, #tpu.memory_space<vmem>>, vector<1x64xf32>
    %63 = vector.broadcast %62 : vector<1x64xf32> to vector<8x64xf32>
    %64 = arith.mulf %61, %63 : vector<8x64xf32>
    %65 = arith.addf %57, %64 : vector<8x64xf32>
    %66 = vector.extract_strided_slice %5 {offsets = [0, 18], sizes = [16, 64], strides = [1, 1]} : vector<16x82xbf16> to vector<16x64xbf16>
    %c8 = arith.constant 8 : index
    %c0_44 = arith.constant 0 : index
    %c0_45 = arith.constant 0 : index
    %67 = vector.load %arg4[%c8, %c0_44, %c0_45] : memref<9x8x16xbf16, #tpu.memory_space<vmem>>, vector<1x8x16xbf16>
    %68 = vector.shape_cast %67 : vector<1x8x16xbf16> to vector<8x16xbf16>
    %cst_46 = arith.constant dense<0.000000e+00> : vector<8x64xf32>
    %69 = tpu.matmul %68, %66, %cst_46 {dimension_numbers = #tpu.dot_dimension_numbers<[1], [0], [0], [1], [0, 0, 1, 1], [], []>} : vector<8x16xbf16>, vector<16x64xbf16>, vector<8x64xf32> -> vector<8x64xf32>
    %c8_47 = arith.constant 8 : index
    %c0_48 = arith.constant 0 : index
    %70 = vector.load %arg6[%c8_47, %c0_48] : memref<9x64xf32, #tpu.memory_space<vmem>>, vector<1x64xf32>
    %71 = vector.broadcast %70 : vector<1x64xf32> to vector<8x64xf32>
    %72 = arith.mulf %69, %71 : vector<8x64xf32>
    %73 = arith.addf %65, %72 : vector<8x64xf32>
    %c0_49 = arith.constant 0 : index
    %c0_50 = arith.constant 0 : index
    %74 = vector.load %arg5[%c0_49, %c0_50] : memref<8x1xf32, #tpu.memory_space<vmem>>, vector<8x1xf32>
    %75 = vector.broadcast %74 : vector<8x1xf32> to vector<8x64xf32>
    %76 = arith.addf %73, %75 : vector<8x64xf32>
    %cst_51 = arith.constant 0.000000e+00 : f32
    %77 = vector.broadcast %cst_51 : f32 to vector<8x64xf32>
    %78 = arith.maximumf %76, %77 : vector<8x64xf32>
    %79 = arith.truncf %78 : vector<8x64xf32> to vector<8x64xbf16>
    %c0_52 = arith.constant 0 : index
    %c0_53 = arith.constant 0 : index
    %80 = vector.load %arg7[%c0_52, %c0_53] : memref<64x256xbf16, #tpu.memory_space<vmem>>, vector<64x256xbf16>
    %cst_54 = arith.constant dense<0.000000e+00> : vector<8x256xf32>
    %81 = tpu.matmul %79, %80, %cst_54 {dimension_numbers = #tpu.dot_dimension_numbers<[1], [0], [0], [1], [0, 0, 1, 1], [], []>} : vector<8x64xbf16>, vector<64x256xbf16>, vector<8x256xf32> -> vector<8x256xf32>
    %82 = arith.addf %81, %1 : vector<8x256xf32>
    %83 = arith.truncf %82 : vector<8x256xf32> to vector<8x256xbf16>
    %cst_55 = arith.constant 0.000000e+00 : bf16
    %84 = vector.broadcast %cst_55 : bf16 to vector<8x17xbf16>
    %85 = tpu.concatenate %84, %83, %84 in 1 : vector<8x17xbf16>, vector<8x256xbf16>, vector<8x17xbf16> -> vector<8x290xbf16>
    %86 = vector.extract_strided_slice %85 {offsets = [0, 0], sizes = [8, 256], strides = [1, 1]} : vector<8x290xbf16> to vector<8x256xbf16>
    %c0_56 = arith.constant 0 : index
    %c0_57 = arith.constant 0 : index
    %c0_58 = arith.constant 0 : index
    %87 = vector.load %arg8[%c0_56, %c0_57, %c0_58] : memref<9x8x8xbf16, #tpu.memory_space<vmem>>, vector<1x8x8xbf16>
    %88 = vector.shape_cast %87 : vector<1x8x8xbf16> to vector<8x8xbf16>
    %cst_59 = arith.constant dense<0.000000e+00> : vector<8x256xf32>
    %89 = tpu.matmul %88, %86, %cst_59 {dimension_numbers = #tpu.dot_dimension_numbers<[1], [0], [0], [1], [0, 0, 1, 1], [], []>} : vector<8x8xbf16>, vector<8x256xbf16>, vector<8x256xf32> -> vector<8x256xf32>
    %c0_60 = arith.constant 0 : index
    %c0_61 = arith.constant 0 : index
    %90 = vector.load %arg2[%c0_60, %c0_61] : memref<9x256xf32, #tpu.memory_space<vmem>>, vector<1x256xf32>
    %91 = vector.broadcast %90 : vector<1x256xf32> to vector<8x256xf32>
    %92 = arith.mulf %89, %91 : vector<8x256xf32>
    %93 = vector.extract_strided_slice %85 {offsets = [0, 1], sizes = [8, 256], strides = [1, 1]} : vector<8x290xbf16> to vector<8x256xbf16>
    %c1_62 = arith.constant 1 : index
    %c0_63 = arith.constant 0 : index
    %c0_64 = arith.constant 0 : index
    %94 = vector.load %arg8[%c1_62, %c0_63, %c0_64] : memref<9x8x8xbf16, #tpu.memory_space<vmem>>, vector<1x8x8xbf16>
    %95 = vector.shape_cast %94 : vector<1x8x8xbf16> to vector<8x8xbf16>
    %cst_65 = arith.constant dense<0.000000e+00> : vector<8x256xf32>
    %96 = tpu.matmul %95, %93, %cst_65 {dimension_numbers = #tpu.dot_dimension_numbers<[1], [0], [0], [1], [0, 0, 1, 1], [], []>} : vector<8x8xbf16>, vector<8x256xbf16>, vector<8x256xf32> -> vector<8x256xf32>
    %c1_66 = arith.constant 1 : index
    %c0_67 = arith.constant 0 : index
    %97 = vector.load %arg2[%c1_66, %c0_67] : memref<9x256xf32, #tpu.memory_space<vmem>>, vector<1x256xf32>
    %98 = vector.broadcast %97 : vector<1x256xf32> to vector<8x256xf32>
    %99 = arith.mulf %96, %98 : vector<8x256xf32>
    %100 = arith.addf %92, %99 : vector<8x256xf32>
    %101 = vector.extract_strided_slice %85 {offsets = [0, 2], sizes = [8, 256], strides = [1, 1]} : vector<8x290xbf16> to vector<8x256xbf16>
    %c2_68 = arith.constant 2 : index
    %c0_69 = arith.constant 0 : index
    %c0_70 = arith.constant 0 : index
    %102 = vector.load %arg8[%c2_68, %c0_69, %c0_70] : memref<9x8x8xbf16, #tpu.memory_space<vmem>>, vector<1x8x8xbf16>
    %103 = vector.shape_cast %102 : vector<1x8x8xbf16> to vector<8x8xbf16>
    %cst_71 = arith.constant dense<0.000000e+00> : vector<8x256xf32>
    %104 = tpu.matmul %103, %101, %cst_71 {dimension_numbers = #tpu.dot_dimension_numbers<[1], [0], [0], [1], [0, 0, 1, 1], [], []>} : vector<8x8xbf16>, vector<8x256xbf16>, vector<8x256xf32> -> vector<8x256xf32>
    %c2_72 = arith.constant 2 : index
    %c0_73 = arith.constant 0 : index
    %105 = vector.load %arg2[%c2_72, %c0_73] : memref<9x256xf32, #tpu.memory_space<vmem>>, vector<1x256xf32>
    %106 = vector.broadcast %105 : vector<1x256xf32> to vector<8x256xf32>
    %107 = arith.mulf %104, %106 : vector<8x256xf32>
    %108 = arith.addf %100, %107 : vector<8x256xf32>
    %109 = vector.extract_strided_slice %85 {offsets = [0, 16], sizes = [8, 256], strides = [1, 1]} : vector<8x290xbf16> to vector<8x256xbf16>
    %c3_74 = arith.constant 3 : index
    %c0_75 = arith.constant 0 : index
    %c0_76 = arith.constant 0 : index
    %110 = vector.load %arg8[%c3_74, %c0_75, %c0_76] : memref<9x8x8xbf16, #tpu.memory_space<vmem>>, vector<1x8x8xbf16>
    %111 = vector.shape_cast %110 : vector<1x8x8xbf16> to vector<8x8xbf16>
    %cst_77 = arith.constant dense<0.000000e+00> : vector<8x256xf32>
    %112 = tpu.matmul %111, %109, %cst_77 {dimension_numbers = #tpu.dot_dimension_numbers<[1], [0], [0], [1], [0, 0, 1, 1], [], []>} : vector<8x8xbf16>, vector<8x256xbf16>, vector<8x256xf32> -> vector<8x256xf32>
    %c3_78 = arith.constant 3 : index
    %c0_79 = arith.constant 0 : index
    %113 = vector.load %arg2[%c3_78, %c0_79] : memref<9x256xf32, #tpu.memory_space<vmem>>, vector<1x256xf32>
    %114 = vector.broadcast %113 : vector<1x256xf32> to vector<8x256xf32>
    %115 = arith.mulf %112, %114 : vector<8x256xf32>
    %116 = arith.addf %108, %115 : vector<8x256xf32>
    %117 = vector.extract_strided_slice %85 {offsets = [0, 17], sizes = [8, 256], strides = [1, 1]} : vector<8x290xbf16> to vector<8x256xbf16>
    %c4_80 = arith.constant 4 : index
    %c0_81 = arith.constant 0 : index
    %c0_82 = arith.constant 0 : index
    %118 = vector.load %arg8[%c4_80, %c0_81, %c0_82] : memref<9x8x8xbf16, #tpu.memory_space<vmem>>, vector<1x8x8xbf16>
    %119 = vector.shape_cast %118 : vector<1x8x8xbf16> to vector<8x8xbf16>
    %cst_83 = arith.constant dense<0.000000e+00> : vector<8x256xf32>
    %120 = tpu.matmul %119, %117, %cst_83 {dimension_numbers = #tpu.dot_dimension_numbers<[1], [0], [0], [1], [0, 0, 1, 1], [], []>} : vector<8x8xbf16>, vector<8x256xbf16>, vector<8x256xf32> -> vector<8x256xf32>
    %121 = arith.addf %116, %120 : vector<8x256xf32>
    %122 = vector.extract_strided_slice %85 {offsets = [0, 18], sizes = [8, 256], strides = [1, 1]} : vector<8x290xbf16> to vector<8x256xbf16>
    %c5_84 = arith.constant 5 : index
    %c0_85 = arith.constant 0 : index
    %c0_86 = arith.constant 0 : index
    %123 = vector.load %arg8[%c5_84, %c0_85, %c0_86] : memref<9x8x8xbf16, #tpu.memory_space<vmem>>, vector<1x8x8xbf16>
    %124 = vector.shape_cast %123 : vector<1x8x8xbf16> to vector<8x8xbf16>
    %cst_87 = arith.constant dense<0.000000e+00> : vector<8x256xf32>
    %125 = tpu.matmul %124, %122, %cst_87 {dimension_numbers = #tpu.dot_dimension_numbers<[1], [0], [0], [1], [0, 0, 1, 1], [], []>} : vector<8x8xbf16>, vector<8x256xbf16>, vector<8x256xf32> -> vector<8x256xf32>
    %c5_88 = arith.constant 5 : index
    %c0_89 = arith.constant 0 : index
    %126 = vector.load %arg2[%c5_88, %c0_89] : memref<9x256xf32, #tpu.memory_space<vmem>>, vector<1x256xf32>
    %127 = vector.broadcast %126 : vector<1x256xf32> to vector<8x256xf32>
    %128 = arith.mulf %125, %127 : vector<8x256xf32>
    %129 = arith.addf %121, %128 : vector<8x256xf32>
    %130 = vector.extract_strided_slice %85 {offsets = [0, 32], sizes = [8, 256], strides = [1, 1]} : vector<8x290xbf16> to vector<8x256xbf16>
    %c6_90 = arith.constant 6 : index
    %c0_91 = arith.constant 0 : index
    %c0_92 = arith.constant 0 : index
    %131 = vector.load %arg8[%c6_90, %c0_91, %c0_92] : memref<9x8x8xbf16, #tpu.memory_space<vmem>>, vector<1x8x8xbf16>
    %132 = vector.shape_cast %131 : vector<1x8x8xbf16> to vector<8x8xbf16>
    %cst_93 = arith.constant dense<0.000000e+00> : vector<8x256xf32>
    %133 = tpu.matmul %132, %130, %cst_93 {dimension_numbers = #tpu.dot_dimension_numbers<[1], [0], [0], [1], [0, 0, 1, 1], [], []>} : vector<8x8xbf16>, vector<8x256xbf16>, vector<8x256xf32> -> vector<8x256xf32>
    %c6_94 = arith.constant 6 : index
    %c0_95 = arith.constant 0 : index
    %134 = vector.load %arg2[%c6_94, %c0_95] : memref<9x256xf32, #tpu.memory_space<vmem>>, vector<1x256xf32>
    %135 = vector.broadcast %134 : vector<1x256xf32> to vector<8x256xf32>
    %136 = arith.mulf %133, %135 : vector<8x256xf32>
    %137 = arith.addf %129, %136 : vector<8x256xf32>
    %138 = vector.extract_strided_slice %85 {offsets = [0, 33], sizes = [8, 256], strides = [1, 1]} : vector<8x290xbf16> to vector<8x256xbf16>
    %c7_96 = arith.constant 7 : index
    %c0_97 = arith.constant 0 : index
    %c0_98 = arith.constant 0 : index
    %139 = vector.load %arg8[%c7_96, %c0_97, %c0_98] : memref<9x8x8xbf16, #tpu.memory_space<vmem>>, vector<1x8x8xbf16>
    %140 = vector.shape_cast %139 : vector<1x8x8xbf16> to vector<8x8xbf16>
    %cst_99 = arith.constant dense<0.000000e+00> : vector<8x256xf32>
    %141 = tpu.matmul %140, %138, %cst_99 {dimension_numbers = #tpu.dot_dimension_numbers<[1], [0], [0], [1], [0, 0, 1, 1], [], []>} : vector<8x8xbf16>, vector<8x256xbf16>, vector<8x256xf32> -> vector<8x256xf32>
    %c7_100 = arith.constant 7 : index
    %c0_101 = arith.constant 0 : index
    %142 = vector.load %arg2[%c7_100, %c0_101] : memref<9x256xf32, #tpu.memory_space<vmem>>, vector<1x256xf32>
    %143 = vector.broadcast %142 : vector<1x256xf32> to vector<8x256xf32>
    %144 = arith.mulf %141, %143 : vector<8x256xf32>
    %145 = arith.addf %137, %144 : vector<8x256xf32>
    %146 = vector.extract_strided_slice %85 {offsets = [0, 34], sizes = [8, 256], strides = [1, 1]} : vector<8x290xbf16> to vector<8x256xbf16>
    %c8_102 = arith.constant 8 : index
    %c0_103 = arith.constant 0 : index
    %c0_104 = arith.constant 0 : index
    %147 = vector.load %arg8[%c8_102, %c0_103, %c0_104] : memref<9x8x8xbf16, #tpu.memory_space<vmem>>, vector<1x8x8xbf16>
    %148 = vector.shape_cast %147 : vector<1x8x8xbf16> to vector<8x8xbf16>
    %cst_105 = arith.constant dense<0.000000e+00> : vector<8x256xf32>
    %149 = tpu.matmul %148, %146, %cst_105 {dimension_numbers = #tpu.dot_dimension_numbers<[1], [0], [0], [1], [0, 0, 1, 1], [], []>} : vector<8x8xbf16>, vector<8x256xbf16>, vector<8x256xf32> -> vector<8x256xf32>
    %c8_106 = arith.constant 8 : index
    %c0_107 = arith.constant 0 : index
    %150 = vector.load %arg2[%c8_106, %c0_107] : memref<9x256xf32, #tpu.memory_space<vmem>>, vector<1x256xf32>
    %151 = vector.broadcast %150 : vector<1x256xf32> to vector<8x256xf32>
    %152 = arith.mulf %149, %151 : vector<8x256xf32>
    %153 = arith.addf %145, %152 : vector<8x256xf32>
    %c0_108 = arith.constant 0 : index
    %c0_109 = arith.constant 0 : index
    %154 = vector.load %arg9[%c0_108, %c0_109] : memref<8x1xf32, #tpu.memory_space<vmem>>, vector<8x1xf32>
    %155 = vector.broadcast %154 : vector<8x1xf32> to vector<8x256xf32>
    %156 = arith.addf %153, %155 : vector<8x256xf32>
    %cst_110 = arith.constant 0.000000e+00 : f32
    %157 = vector.broadcast %cst_110 : f32 to vector<8x256xf32>
    %158 = arith.maximumf %156, %157 : vector<8x256xf32>
    %c0_111 = arith.constant 0 : index
    %c0_112 = arith.constant 0 : index
    %c0_113 = arith.constant 0 : index
    %159 = vector.load %arg17[%c0_111, %c0_112, %c0_113] : memref<1x8x256xf32, #tpu.memory_space<vmem>>, vector<1x8x256xf32>
    %160 = vector.shape_cast %159 : vector<1x8x256xf32> to vector<8x256xf32>
    %161 = vector.shape_cast %158 : vector<8x256xf32> to vector<1x8x256xf32>
    tpu.vector_store %arg17[%c0_111, %c0_112, %c0_113], %161 {strides = array<i32>} : memref<1x8x256xf32, #tpu.memory_space<vmem>>, vector<1x8x256xf32>,
    %c0_114 = arith.constant 0 : index
    %c0_115 = arith.constant 0 : index
    %c0_116 = arith.constant 0 : index
    %162 = vector.load %arg10[%c0_114, %c0_115, %c0_116] : memref<1x32x16xbf16, #tpu.memory_space<vmem>>, vector<1x32x16xbf16>
    %163 = vector.shape_cast %162 : vector<1x32x16xbf16> to vector<32x16xbf16>
    %cst_117 = arith.constant 0.000000e+00 : bf16
    %164 = vector.broadcast %cst_117 : bf16 to vector<32x5xbf16>
    %165 = tpu.concatenate %164, %163, %164 in 1 : vector<32x5xbf16>, vector<32x16xbf16>, vector<32x5xbf16> -> vector<32x26xbf16>
    %166 = vector.extract_strided_slice %165 {offsets = [0, 0], sizes = [32, 16], strides = [1, 1]} : vector<32x26xbf16> to vector<32x16xbf16>
    %c0_118 = arith.constant 0 : index
    %c0_119 = arith.constant 0 : index
    %c0_120 = arith.constant 0 : index
    %167 = vector.load %arg11[%c0_118, %c0_119, %c0_120] : memref<9x8x32xbf16, #tpu.memory_space<vmem>>, vector<1x8x32xbf16>
    %168 = vector.shape_cast %167 : vector<1x8x32xbf16> to vector<8x32xbf16>
    %cst_121 = arith.constant dense<0.000000e+00> : vector<8x16xf32>
    %169 = tpu.matmul %168, %166, %cst_121 {dimension_numbers = #tpu.dot_dimension_numbers<[1], [0], [0], [1], [0, 0, 1, 1], [], []>} : vector<8x32xbf16>, vector<32x16xbf16>, vector<8x16xf32> -> vector<8x16xf32>
    %c0_122 = arith.constant 0 : index
    %c0_123 = arith.constant 0 : index
    %170 = vector.load %arg13[%c0_122, %c0_123] : memref<9x16xf32, #tpu.memory_space<vmem>>, vector<1x16xf32>
    %171 = vector.broadcast %170 : vector<1x16xf32> to vector<8x16xf32>
    %172 = arith.mulf %169, %171 : vector<8x16xf32>
    %173 = vector.extract_strided_slice %165 {offsets = [0, 1], sizes = [32, 16], strides = [1, 1]} : vector<32x26xbf16> to vector<32x16xbf16>
    %c1_124 = arith.constant 1 : index
    %c0_125 = arith.constant 0 : index
    %c0_126 = arith.constant 0 : index
    %174 = vector.load %arg11[%c1_124, %c0_125, %c0_126] : memref<9x8x32xbf16, #tpu.memory_space<vmem>>, vector<1x8x32xbf16>
    %175 = vector.shape_cast %174 : vector<1x8x32xbf16> to vector<8x32xbf16>
    %cst_127 = arith.constant dense<0.000000e+00> : vector<8x16xf32>
    %176 = tpu.matmul %175, %173, %cst_127 {dimension_numbers = #tpu.dot_dimension_numbers<[1], [0], [0], [1], [0, 0, 1, 1], [], []>} : vector<8x32xbf16>, vector<32x16xbf16>, vector<8x16xf32> -> vector<8x16xf32>
    %c1_128 = arith.constant 1 : index
    %c0_129 = arith.constant 0 : index
    %177 = vector.load %arg13[%c1_128, %c0_129] : memref<9x16xf32, #tpu.memory_space<vmem>>, vector<1x16xf32>
    %178 = vector.broadcast %177 : vector<1x16xf32> to vector<8x16xf32>
    %179 = arith.mulf %176, %178 : vector<8x16xf32>
    %180 = arith.addf %172, %179 : vector<8x16xf32>
    %181 = vector.extract_strided_slice %165 {offsets = [0, 2], sizes = [32, 16], strides = [1, 1]} : vector<32x26xbf16> to vector<32x16xbf16>
    %c2_130 = arith.constant 2 : index
    %c0_131 = arith.constant 0 : index
    %c0_132 = arith.constant 0 : index
    %182 = vector.load %arg11[%c2_130, %c0_131, %c0_132] : memref<9x8x32xbf16, #tpu.memory_space<vmem>>, vector<1x8x32xbf16>
    %183 = vector.shape_cast %182 : vector<1x8x32xbf16> to vector<8x32xbf16>
    %cst_133 = arith.constant dense<0.000000e+00> : vector<8x16xf32>
    %184 = tpu.matmul %183, %181, %cst_133 {dimension_numbers = #tpu.dot_dimension_numbers<[1], [0], [0], [1], [0, 0, 1, 1], [], []>} : vector<8x32xbf16>, vector<32x16xbf16>, vector<8x16xf32> -> vector<8x16xf32>
    %c2_134 = arith.constant 2 : index
    %c0_135 = arith.constant 0 : index
    %185 = vector.load %arg13[%c2_134, %c0_135] : memref<9x16xf32, #tpu.memory_space<vmem>>, vector<1x16xf32>
    %186 = vector.broadcast %185 : vector<1x16xf32> to vector<8x16xf32>
    %187 = arith.mulf %184, %186 : vector<8x16xf32>
    %188 = arith.addf %180, %187 : vector<8x16xf32>
    %189 = vector.extract_strided_slice %165 {offsets = [0, 4], sizes = [32, 16], strides = [1, 1]} : vector<32x26xbf16> to vector<32x16xbf16>
    %c3_136 = arith.constant 3 : index
    %c0_137 = arith.constant 0 : index
    %c0_138 = arith.constant 0 : index
    %190 = vector.load %arg11[%c3_136, %c0_137, %c0_138] : memref<9x8x32xbf16, #tpu.memory_space<vmem>>, vector<1x8x32xbf16>
    %191 = vector.shape_cast %190 : vector<1x8x32xbf16> to vector<8x32xbf16>
    %cst_139 = arith.constant dense<0.000000e+00> : vector<8x16xf32>
    %192 = tpu.matmul %191, %189, %cst_139 {dimension_numbers = #tpu.dot_dimension_numbers<[1], [0], [0], [1], [0, 0, 1, 1], [], []>} : vector<8x32xbf16>, vector<32x16xbf16>, vector<8x16xf32> -> vector<8x16xf32>
    %c3_140 = arith.constant 3 : index
    %c0_141 = arith.constant 0 : index
    %193 = vector.load %arg13[%c3_140, %c0_141] : memref<9x16xf32, #tpu.memory_space<vmem>>, vector<1x16xf32>
    %194 = vector.broadcast %193 : vector<1x16xf32> to vector<8x16xf32>
    %195 = arith.mulf %192, %194 : vector<8x16xf32>
    %196 = arith.addf %188, %195 : vector<8x16xf32>
    %197 = vector.extract_strided_slice %165 {offsets = [0, 5], sizes = [32, 16], strides = [1, 1]} : vector<32x26xbf16> to vector<32x16xbf16>
    %c4_142 = arith.constant 4 : index
    %c0_143 = arith.constant 0 : index
    %c0_144 = arith.constant 0 : index
    %198 = vector.load %arg11[%c4_142, %c0_143, %c0_144] : memref<9x8x32xbf16, #tpu.memory_space<vmem>>, vector<1x8x32xbf16>
    %199 = vector.shape_cast %198 : vector<1x8x32xbf16> to vector<8x32xbf16>
    %cst_145 = arith.constant dense<0.000000e+00> : vector<8x16xf32>
    %200 = tpu.matmul %199, %197, %cst_145 {dimension_numbers = #tpu.dot_dimension_numbers<[1], [0], [0], [1], [0, 0, 1, 1], [], []>} : vector<8x32xbf16>, vector<32x16xbf16>, vector<8x16xf32> -> vector<8x16xf32>
    %201 = arith.addf %196, %200 : vector<8x16xf32>
    %202 = vector.extract_strided_slice %165 {offsets = [0, 6], sizes = [32, 16], strides = [1, 1]} : vector<32x26xbf16> to vector<32x16xbf16>
    %c5_146 = arith.constant 5 : index
    %c0_147 = arith.constant 0 : index
    %c0_148 = arith.constant 0 : index
    %203 = vector.load %arg11[%c5_146, %c0_147, %c0_148] : memref<9x8x32xbf16, #tpu.memory_space<vmem>>, vector<1x8x32xbf16>
    %204 = vector.shape_cast %203 : vector<1x8x32xbf16> to vector<8x32xbf16>
    %cst_149 = arith.constant dense<0.000000e+00> : vector<8x16xf32>
    %205 = tpu.matmul %204, %202, %cst_149 {dimension_numbers = #tpu.dot_dimension_numbers<[1], [0], [0], [1], [0, 0, 1, 1], [], []>} : vector<8x32xbf16>, vector<32x16xbf16>, vector<8x16xf32> -> vector<8x16xf32>
    %c5_150 = arith.constant 5 : index
    %c0_151 = arith.constant 0 : index
    %206 = vector.load %arg13[%c5_150, %c0_151] : memref<9x16xf32, #tpu.memory_space<vmem>>, vector<1x16xf32>
    %207 = vector.broadcast %206 : vector<1x16xf32> to vector<8x16xf32>
    %208 = arith.mulf %205, %207 : vector<8x16xf32>
    %209 = arith.addf %201, %208 : vector<8x16xf32>
    %210 = vector.extract_strided_slice %165 {offsets = [0, 8], sizes = [32, 16], strides = [1, 1]} : vector<32x26xbf16> to vector<32x16xbf16>
    %c6_152 = arith.constant 6 : index
    %c0_153 = arith.constant 0 : index
    %c0_154 = arith.constant 0 : index
    %211 = vector.load %arg11[%c6_152, %c0_153, %c0_154] : memref<9x8x32xbf16, #tpu.memory_space<vmem>>, vector<1x8x32xbf16>
    %212 = vector.shape_cast %211 : vector<1x8x32xbf16> to vector<8x32xbf16>
    %cst_155 = arith.constant dense<0.000000e+00> : vector<8x16xf32>
    %213 = tpu.matmul %212, %210, %cst_155 {dimension_numbers = #tpu.dot_dimension_numbers<[1], [0], [0], [1], [0, 0, 1, 1], [], []>} : vector<8x32xbf16>, vector<32x16xbf16>, vector<8x16xf32> -> vector<8x16xf32>
    %c6_156 = arith.constant 6 : index
    %c0_157 = arith.constant 0 : index
    %214 = vector.load %arg13[%c6_156, %c0_157] : memref<9x16xf32, #tpu.memory_space<vmem>>, vector<1x16xf32>
    %215 = vector.broadcast %214 : vector<1x16xf32> to vector<8x16xf32>
    %216 = arith.mulf %213, %215 : vector<8x16xf32>
    %217 = arith.addf %209, %216 : vector<8x16xf32>
    %218 = vector.extract_strided_slice %165 {offsets = [0, 9], sizes = [32, 16], strides = [1, 1]} : vector<32x26xbf16> to vector<32x16xbf16>
    %c7_158 = arith.constant 7 : index
    %c0_159 = arith.constant 0 : index
    %c0_160 = arith.constant 0 : index
    %219 = vector.load %arg11[%c7_158, %c0_159, %c0_160] : memref<9x8x32xbf16, #tpu.memory_space<vmem>>, vector<1x8x32xbf16>
    %220 = vector.shape_cast %219 : vector<1x8x32xbf16> to vector<8x32xbf16>
    %cst_161 = arith.constant dense<0.000000e+00> : vector<8x16xf32>
    %221 = tpu.matmul %220, %218, %cst_161 {dimension_numbers = #tpu.dot_dimension_numbers<[1], [0], [0], [1], [0, 0, 1, 1], [], []>} : vector<8x32xbf16>, vector<32x16xbf16>, vector<8x16xf32> -> vector<8x16xf32>
    %c7_162 = arith.constant 7 : index
    %c0_163 = arith.constant 0 : index
    %222 = vector.load %arg13[%c7_162, %c0_163] : memref<9x16xf32, #tpu.memory_space<vmem>>, vector<1x16xf32>
    %223 = vector.broadcast %222 : vector<1x16xf32> to vector<8x16xf32>
    %224 = arith.mulf %221, %223 : vector<8x16xf32>
    %225 = arith.addf %217, %224 : vector<8x16xf32>
    %226 = vector.extract_strided_slice %165 {offsets = [0, 10], sizes = [32, 16], strides = [1, 1]} : vector<32x26xbf16> to vector<32x16xbf16>
    %c8_164 = arith.constant 8 : index
    %c0_165 = arith.constant 0 : index
    %c0_166 = arith.constant 0 : index
    %227 = vector.load %arg11[%c8_164, %c0_165, %c0_166] : memref<9x8x32xbf16, #tpu.memory_space<vmem>>, vector<1x8x32xbf16>
    %228 = vector.shape_cast %227 : vector<1x8x32xbf16> to vector<8x32xbf16>
    %cst_167 = arith.constant dense<0.000000e+00> : vector<8x16xf32>
    %229 = tpu.matmul %228, %226, %cst_167 {dimension_numbers = #tpu.dot_dimension_numbers<[1], [0], [0], [1], [0, 0, 1, 1], [], []>} : vector<8x32xbf16>, vector<32x16xbf16>, vector<8x16xf32> -> vector<8x16xf32>
    %c8_168 = arith.constant 8 : index
    %c0_169 = arith.constant 0 : index
    %230 = vector.load %arg13[%c8_168, %c0_169] : memref<9x16xf32, #tpu.memory_space<vmem>>, vector<1x16xf32>
    %231 = vector.broadcast %230 : vector<1x16xf32> to vector<8x16xf32>
    %232 = arith.mulf %229, %231 : vector<8x16xf32>
    %233 = arith.addf %225, %232 : vector<8x16xf32>
    %c0_170 = arith.constant 0 : index
    %c0_171 = arith.constant 0 : index
    %234 = vector.load %arg12[%c0_170, %c0_171] : memref<8x1xf32, #tpu.memory_space<vmem>>, vector<8x1xf32>
    %235 = vector.broadcast %234 : vector<8x1xf32> to vector<8x16xf32>
    %236 = arith.addf %233, %235 : vector<8x16xf32>
    %cst_172 = arith.constant 0.000000e+00 : f32
    %237 = vector.broadcast %cst_172 : f32 to vector<8x16xf32>
    %238 = arith.maximumf %236, %237 : vector<8x16xf32>
    %239 = arith.truncf %238 : vector<8x16xf32> to vector<8x16xbf16>
    %c0_173 = arith.constant 0 : index
    %c0_174 = arith.constant 0 : index
    %240 = vector.load %arg14[%c0_173, %c0_174] : memref<16x256xbf16, #tpu.memory_space<vmem>>, vector<16x256xbf16>
    %cst_175 = arith.constant dense<0.000000e+00> : vector<8x256xf32>
    %241 = tpu.matmul %239, %240, %cst_175 {dimension_numbers = #tpu.dot_dimension_numbers<[1], [0], [0], [1], [0, 0, 1, 1], [], []>} : vector<8x16xbf16>, vector<16x256xbf16>, vector<8x256xf32> -> vector<8x256xf32>
    %242 = arith.addf %241, %158 : vector<8x256xf32>
    %243 = arith.truncf %242 : vector<8x256xf32> to vector<8x256xbf16>
    %cst_176 = arith.constant 0.000000e+00 : bf16
    %244 = vector.broadcast %cst_176 : bf16 to vector<8x17xbf16>
    %245 = tpu.concatenate %244, %243, %244 in 1 : vector<8x17xbf16>, vector<8x256xbf16>, vector<8x17xbf16> -> vector<8x290xbf16>
    %246 = vector.extract_strided_slice %245 {offsets = [0, 0], sizes = [8, 256], strides = [1, 1]} : vector<8x290xbf16> to vector<8x256xbf16>
    %c0_177 = arith.constant 0 : index
    %c0_178 = arith.constant 0 : index
    %c0_179 = arith.constant 0 : index
    %247 = vector.load %arg15[%c0_177, %c0_178, %c0_179] : memref<9x8x8xbf16, #tpu.memory_space<vmem>>, vector<1x8x8xbf16>
    %248 = vector.shape_cast %247 : vector<1x8x8xbf16> to vector<8x8xbf16>
    %cst_180 = arith.constant dense<0.000000e+00> : vector<8x256xf32>
    %249 = tpu.matmul %248, %246, %cst_180 {dimension_numbers = #tpu.dot_dimension_numbers<[1], [0], [0], [1], [0, 0, 1, 1], [], []>} : vector<8x8xbf16>, vector<8x256xbf16>, vector<8x256xf32> -> vector<8x256xf32>
    %c0_181 = arith.constant 0 : index
    %c0_182 = arith.constant 0 : index
    %250 = vector.load %arg2[%c0_181, %c0_182] : memref<9x256xf32, #tpu.memory_space<vmem>>, vector<1x256xf32>
    %251 = vector.broadcast %250 : vector<1x256xf32> to vector<8x256xf32>
    %252 = arith.mulf %249, %251 : vector<8x256xf32>
    %253 = vector.extract_strided_slice %245 {offsets = [0, 1], sizes = [8, 256], strides = [1, 1]} : vector<8x290xbf16> to vector<8x256xbf16>
    %c1_183 = arith.constant 1 : index
    %c0_184 = arith.constant 0 : index
    %c0_185 = arith.constant 0 : index
    %254 = vector.load %arg15[%c1_183, %c0_184, %c0_185] : memref<9x8x8xbf16, #tpu.memory_space<vmem>>, vector<1x8x8xbf16>
    %255 = vector.shape_cast %254 : vector<1x8x8xbf16> to vector<8x8xbf16>
    %cst_186 = arith.constant dense<0.000000e+00> : vector<8x256xf32>
    %256 = tpu.matmul %255, %253, %cst_186 {dimension_numbers = #tpu.dot_dimension_numbers<[1], [0], [0], [1], [0, 0, 1, 1], [], []>} : vector<8x8xbf16>, vector<8x256xbf16>, vector<8x256xf32> -> vector<8x256xf32>
    %c1_187 = arith.constant 1 : index
    %c0_188 = arith.constant 0 : index
    %257 = vector.load %arg2[%c1_187, %c0_188] : memref<9x256xf32, #tpu.memory_space<vmem>>, vector<1x256xf32>
    %258 = vector.broadcast %257 : vector<1x256xf32> to vector<8x256xf32>
    %259 = arith.mulf %256, %258 : vector<8x256xf32>
    %260 = arith.addf %252, %259 : vector<8x256xf32>
    %261 = vector.extract_strided_slice %245 {offsets = [0, 2], sizes = [8, 256], strides = [1, 1]} : vector<8x290xbf16> to vector<8x256xbf16>
    %c2_189 = arith.constant 2 : index
    %c0_190 = arith.constant 0 : index
    %c0_191 = arith.constant 0 : index
    %262 = vector.load %arg15[%c2_189, %c0_190, %c0_191] : memref<9x8x8xbf16, #tpu.memory_space<vmem>>, vector<1x8x8xbf16>
    %263 = vector.shape_cast %262 : vector<1x8x8xbf16> to vector<8x8xbf16>
    %cst_192 = arith.constant dense<0.000000e+00> : vector<8x256xf32>
    %264 = tpu.matmul %263, %261, %cst_192 {dimension_numbers = #tpu.dot_dimension_numbers<[1], [0], [0], [1], [0, 0, 1, 1], [], []>} : vector<8x8xbf16>, vector<8x256xbf16>, vector<8x256xf32> -> vector<8x256xf32>
    %c2_193 = arith.constant 2 : index
    %c0_194 = arith.constant 0 : index
    %265 = vector.load %arg2[%c2_193, %c0_194] : memref<9x256xf32, #tpu.memory_space<vmem>>, vector<1x256xf32>
    %266 = vector.broadcast %265 : vector<1x256xf32> to vector<8x256xf32>
    %267 = arith.mulf %264, %266 : vector<8x256xf32>
    %268 = arith.addf %260, %267 : vector<8x256xf32>
    %269 = vector.extract_strided_slice %245 {offsets = [0, 16], sizes = [8, 256], strides = [1, 1]} : vector<8x290xbf16> to vector<8x256xbf16>
    %c3_195 = arith.constant 3 : index
    %c0_196 = arith.constant 0 : index
    %c0_197 = arith.constant 0 : index
    %270 = vector.load %arg15[%c3_195, %c0_196, %c0_197] : memref<9x8x8xbf16, #tpu.memory_space<vmem>>, vector<1x8x8xbf16>
    %271 = vector.shape_cast %270 : vector<1x8x8xbf16> to vector<8x8xbf16>
    %cst_198 = arith.constant dense<0.000000e+00> : vector<8x256xf32>
    %272 = tpu.matmul %271, %269, %cst_198 {dimension_numbers = #tpu.dot_dimension_numbers<[1], [0], [0], [1], [0, 0, 1, 1], [], []>} : vector<8x8xbf16>, vector<8x256xbf16>, vector<8x256xf32> -> vector<8x256xf32>
    %c3_199 = arith.constant 3 : index
    %c0_200 = arith.constant 0 : index
    %273 = vector.load %arg2[%c3_199, %c0_200] : memref<9x256xf32, #tpu.memory_space<vmem>>, vector<1x256xf32>
    %274 = vector.broadcast %273 : vector<1x256xf32> to vector<8x256xf32>
    %275 = arith.mulf %272, %274 : vector<8x256xf32>
    %276 = arith.addf %268, %275 : vector<8x256xf32>
    %277 = vector.extract_strided_slice %245 {offsets = [0, 17], sizes = [8, 256], strides = [1, 1]} : vector<8x290xbf16> to vector<8x256xbf16>
    %c4_201 = arith.constant 4 : index
    %c0_202 = arith.constant 0 : index
    %c0_203 = arith.constant 0 : index
    %278 = vector.load %arg15[%c4_201, %c0_202, %c0_203] : memref<9x8x8xbf16, #tpu.memory_space<vmem>>, vector<1x8x8xbf16>
    %279 = vector.shape_cast %278 : vector<1x8x8xbf16> to vector<8x8xbf16>
    %cst_204 = arith.constant dense<0.000000e+00> : vector<8x256xf32>
    %280 = tpu.matmul %279, %277, %cst_204 {dimension_numbers = #tpu.dot_dimension_numbers<[1], [0], [0], [1], [0, 0, 1, 1], [], []>} : vector<8x8xbf16>, vector<8x256xbf16>, vector<8x256xf32> -> vector<8x256xf32>
    %281 = arith.addf %276, %280 : vector<8x256xf32>
    %282 = vector.extract_strided_slice %245 {offsets = [0, 18], sizes = [8, 256], strides = [1, 1]} : vector<8x290xbf16> to vector<8x256xbf16>
    %c5_205 = arith.constant 5 : index
    %c0_206 = arith.constant 0 : index
    %c0_207 = arith.constant 0 : index
    %283 = vector.load %arg15[%c5_205, %c0_206, %c0_207] : memref<9x8x8xbf16, #tpu.memory_space<vmem>>, vector<1x8x8xbf16>
    %284 = vector.shape_cast %283 : vector<1x8x8xbf16> to vector<8x8xbf16>
    %cst_208 = arith.constant dense<0.000000e+00> : vector<8x256xf32>
    %285 = tpu.matmul %284, %282, %cst_208 {dimension_numbers = #tpu.dot_dimension_numbers<[1], [0], [0], [1], [0, 0, 1, 1], [], []>} : vector<8x8xbf16>, vector<8x256xbf16>, vector<8x256xf32> -> vector<8x256xf32>
    %c5_209 = arith.constant 5 : index
    %c0_210 = arith.constant 0 : index
    %286 = vector.load %arg2[%c5_209, %c0_210] : memref<9x256xf32, #tpu.memory_space<vmem>>, vector<1x256xf32>
    %287 = vector.broadcast %286 : vector<1x256xf32> to vector<8x256xf32>
    %288 = arith.mulf %285, %287 : vector<8x256xf32>
    %289 = arith.addf %281, %288 : vector<8x256xf32>
    %290 = vector.extract_strided_slice %245 {offsets = [0, 32], sizes = [8, 256], strides = [1, 1]} : vector<8x290xbf16> to vector<8x256xbf16>
    %c6_211 = arith.constant 6 : index
    %c0_212 = arith.constant 0 : index
    %c0_213 = arith.constant 0 : index
    %291 = vector.load %arg15[%c6_211, %c0_212, %c0_213] : memref<9x8x8xbf16, #tpu.memory_space<vmem>>, vector<1x8x8xbf16>
    %292 = vector.shape_cast %291 : vector<1x8x8xbf16> to vector<8x8xbf16>
    %cst_214 = arith.constant dense<0.000000e+00> : vector<8x256xf32>
    %293 = tpu.matmul %292, %290, %cst_214 {dimension_numbers = #tpu.dot_dimension_numbers<[1], [0], [0], [1], [0, 0, 1, 1], [], []>} : vector<8x8xbf16>, vector<8x256xbf16>, vector<8x256xf32> -> vector<8x256xf32>
    %c6_215 = arith.constant 6 : index
    %c0_216 = arith.constant 0 : index
    %294 = vector.load %arg2[%c6_215, %c0_216] : memref<9x256xf32, #tpu.memory_space<vmem>>, vector<1x256xf32>
    %295 = vector.broadcast %294 : vector<1x256xf32> to vector<8x256xf32>
    %296 = arith.mulf %293, %295 : vector<8x256xf32>
    %297 = arith.addf %289, %296 : vector<8x256xf32>
    %298 = vector.extract_strided_slice %245 {offsets = [0, 33], sizes = [8, 256], strides = [1, 1]} : vector<8x290xbf16> to vector<8x256xbf16>
    %c7_217 = arith.constant 7 : index
    %c0_218 = arith.constant 0 : index
    %c0_219 = arith.constant 0 : index
    %299 = vector.load %arg15[%c7_217, %c0_218, %c0_219] : memref<9x8x8xbf16, #tpu.memory_space<vmem>>, vector<1x8x8xbf16>
    %300 = vector.shape_cast %299 : vector<1x8x8xbf16> to vector<8x8xbf16>
    %cst_220 = arith.constant dense<0.000000e+00> : vector<8x256xf32>
    %301 = tpu.matmul %300, %298, %cst_220 {dimension_numbers = #tpu.dot_dimension_numbers<[1], [0], [0], [1], [0, 0, 1, 1], [], []>} : vector<8x8xbf16>, vector<8x256xbf16>, vector<8x256xf32> -> vector<8x256xf32>
    %c7_221 = arith.constant 7 : index
    %c0_222 = arith.constant 0 : index
    %302 = vector.load %arg2[%c7_221, %c0_222] : memref<9x256xf32, #tpu.memory_space<vmem>>, vector<1x256xf32>
    %303 = vector.broadcast %302 : vector<1x256xf32> to vector<8x256xf32>
    %304 = arith.mulf %301, %303 : vector<8x256xf32>
    %305 = arith.addf %297, %304 : vector<8x256xf32>
    %306 = vector.extract_strided_slice %245 {offsets = [0, 34], sizes = [8, 256], strides = [1, 1]} : vector<8x290xbf16> to vector<8x256xbf16>
    %c8_223 = arith.constant 8 : index
    %c0_224 = arith.constant 0 : index
    %c0_225 = arith.constant 0 : index
    %307 = vector.load %arg15[%c8_223, %c0_224, %c0_225] : memref<9x8x8xbf16, #tpu.memory_space<vmem>>, vector<1x8x8xbf16>
    %308 = vector.shape_cast %307 : vector<1x8x8xbf16> to vector<8x8xbf16>
    %cst_226 = arith.constant dense<0.000000e+00> : vector<8x256xf32>
    %309 = tpu.matmul %308, %306, %cst_226 {dimension_numbers = #tpu.dot_dimension_numbers<[1], [0], [0], [1], [0, 0, 1, 1], [], []>} : vector<8x8xbf16>, vector<8x256xbf16>, vector<8x256xf32> -> vector<8x256xf32>
    %c8_227 = arith.constant 8 : index
    %c0_228 = arith.constant 0 : index
    %310 = vector.load %arg2[%c8_227, %c0_228] : memref<9x256xf32, #tpu.memory_space<vmem>>, vector<1x256xf32>
    %311 = vector.broadcast %310 : vector<1x256xf32> to vector<8x256xf32>
    %312 = arith.mulf %309, %311 : vector<8x256xf32>
    %313 = arith.addf %305, %312 : vector<8x256xf32>
    %c0_229 = arith.constant 0 : index
    %c0_230 = arith.constant 0 : index
    %314 = vector.load %arg16[%c0_229, %c0_230] : memref<8x1xf32, #tpu.memory_space<vmem>>, vector<8x1xf32>
    %315 = vector.broadcast %314 : vector<8x1xf32> to vector<8x256xf32>
    %316 = arith.addf %313, %315 : vector<8x256xf32>
    %cst_231 = arith.constant 0.000000e+00 : f32
    %317 = vector.broadcast %cst_231 : f32 to vector<8x256xf32>
    %318 = arith.maximumf %316, %317 : vector<8x256xf32>
    %c0_232 = arith.constant 0 : index
    %c0_233 = arith.constant 0 : index
    %c0_234 = arith.constant 0 : index
    %319 = vector.load %arg18[%c0_232, %c0_233, %c0_234] : memref<1x8x256xf32, #tpu.memory_space<vmem>>, vector<1x8x256xf32>
    %320 = vector.shape_cast %319 : vector<1x8x256xf32> to vector<8x256xf32>
    %321 = vector.shape_cast %318 : vector<8x256xf32> to vector<1x8x256xf32>
    tpu.vector_store %arg18[%c0_232, %c0_233, %c0_234], %321 {strides = array<i32>} : memref<1x8x256xf32, #tpu.memory_space<vmem>>, vector<1x8x256xf32>,
    return
  }
  func.func @transform_0(%arg0: i32) -> (i32, i32, i32) {
    %c0_i32 = arith.constant 0 : i32
    %c0_i32_0 = arith.constant 0 : i32
    %c0_i32_1 = arith.constant 0 : i32
    return %arg0, %c0_i32, %c0_i32_0 : i32, i32, i32
  }
  func.func @transform_1(%arg0: i32) -> (i32, i32) {
    %c0_i32 = arith.constant 0 : i32
    %c0_i32_0 = arith.constant 0 : i32
    %c0_i32_1 = arith.constant 0 : i32
    return %c0_i32, %c0_i32_0 : i32, i32
  }
  func.func @transform_2(%arg0: i32) -> (i32, i32, i32) {
    %c0_i32 = arith.constant 0 : i32
    %c0_i32_0 = arith.constant 0 : i32
    %c0_i32_1 = arith.constant 0 : i32
    return %arg0, %c0_i32, %c0_i32_0 : i32, i32, i32
  }
  func.func @transform_3(%arg0: i32) -> (i32, i32, i32) {
    %c0_i32 = arith.constant 0 : i32
    %c0_i32_0 = arith.constant 0 : i32
    %c0_i32_1 = arith.constant 0 : i32
    %c0_i32_2 = arith.constant 0 : i32
    return %c0_i32, %c0_i32_0, %c0_i32_1 : i32, i32, i32
  }
  func.func @transform_4(%arg0: i32) -> (i32, i32) {
    %c0_i32 = arith.constant 0 : i32
    %c0_i32_0 = arith.constant 0 : i32
    %c0_i32_1 = arith.constant 0 : i32
    return %c0_i32, %c0_i32_0 : i32, i32
  }
  func.func @transform_5(%arg0: i32) -> (i32, i32) {
    %c0_i32 = arith.constant 0 : i32
    %c0_i32_0 = arith.constant 0 : i32
    %c0_i32_1 = arith.constant 0 : i32
    return %c0_i32, %c0_i32_0 : i32, i32
  }
  func.func @transform_6(%arg0: i32) -> (i32, i32) {
    %c0_i32 = arith.constant 0 : i32
    %c0_i32_0 = arith.constant 0 : i32
    %c0_i32_1 = arith.constant 0 : i32
    return %c0_i32, %c0_i32_0 : i32, i32
  }
  func.func @transform_7(%arg0: i32) -> (i32, i32, i32) {
    %c0_i32 = arith.constant 0 : i32
    %c0_i32_0 = arith.constant 0 : i32
    %c0_i32_1 = arith.constant 0 : i32
    %c0_i32_2 = arith.constant 0 : i32
    return %c0_i32, %c0_i32_0, %c0_i32_1 : i32, i32, i32
  }
  func.func @transform_8(%arg0: i32) -> (i32, i32) {
    %c0_i32 = arith.constant 0 : i32
    %c0_i32_0 = arith.constant 0 : i32
    %c0_i32_1 = arith.constant 0 : i32
    return %c0_i32, %c0_i32_0 : i32, i32
  }
  func.func @transform_9(%arg0: i32) -> (i32, i32, i32) {
    %c0_i32 = arith.constant 0 : i32
    %c0_i32_0 = arith.constant 0 : i32
    %c0_i32_1 = arith.constant 0 : i32
    return %arg0, %c0_i32, %c0_i32_0 : i32, i32, i32
  }
  func.func @transform_10(%arg0: i32) -> (i32, i32, i32) {
    %c0_i32 = arith.constant 0 : i32
    %c0_i32_0 = arith.constant 0 : i32
    %c0_i32_1 = arith.constant 0 : i32
    %c0_i32_2 = arith.constant 0 : i32
    return %c0_i32, %c0_i32_0, %c0_i32_1 : i32, i32, i32
  }
  func.func @transform_11(%arg0: i32) -> (i32, i32) {
    %c0_i32 = arith.constant 0 : i32
    %c0_i32_0 = arith.constant 0 : i32
    %c0_i32_1 = arith.constant 0 : i32
    return %c0_i32, %c0_i32_0 : i32, i32
  }
  func.func @transform_12(%arg0: i32) -> (i32, i32) {
    %c0_i32 = arith.constant 0 : i32
    %c0_i32_0 = arith.constant 0 : i32
    %c0_i32_1 = arith.constant 0 : i32
    return %c0_i32, %c0_i32_0 : i32, i32
  }
  func.func @transform_13(%arg0: i32) -> (i32, i32) {
    %c0_i32 = arith.constant 0 : i32
    %c0_i32_0 = arith.constant 0 : i32
    %c0_i32_1 = arith.constant 0 : i32
    return %c0_i32, %c0_i32_0 : i32, i32
  }
  func.func @transform_14(%arg0: i32) -> (i32, i32, i32) {
    %c0_i32 = arith.constant 0 : i32
    %c0_i32_0 = arith.constant 0 : i32
    %c0_i32_1 = arith.constant 0 : i32
    %c0_i32_2 = arith.constant 0 : i32
    return %c0_i32, %c0_i32_0, %c0_i32_1 : i32, i32, i32
  }
  func.func @transform_15(%arg0: i32) -> (i32, i32) {
    %c0_i32 = arith.constant 0 : i32
    %c0_i32_0 = arith.constant 0 : i32
    %c0_i32_1 = arith.constant 0 : i32
    return %c0_i32, %c0_i32_0 : i32, i32
  }
  func.func @transform_16(%arg0: i32) -> (i32, i32, i32) {
    %c0_i32 = arith.constant 0 : i32
    %c0_i32_0 = arith.constant 0 : i32
    %c0_i32_1 = arith.constant 0 : i32
    return %arg0, %c0_i32, %c0_i32_0 : i32, i32, i32
  }
  func.func @transform_17(%arg0: i32) -> (i32, i32, i32) {
    %c0_i32 = arith.constant 0 : i32
    %c0_i32_0 = arith.constant 0 : i32
    %c0_i32_1 = arith.constant 0 : i32
    return %arg0, %c0_i32, %c0_i32_0 : i32, i32, i32
  }
}

</mosaic_0001>

<llo_original>
// kernel: tpu_custom_call.1
$region0: #{tpu_custom_call.1}
  #allocation0 [shape = 'u32[]', space=smem, size = 0x4, offset = 0x4, fixed_abs, tag = 'smem constant byte address 0x4 - core index']
  #allocation1 [shape = 'u32[144,128]{1,0:T(1,128)}', space=vmem, size = 0x12000, scoped, tag = 'internal scratch']
  %s0 = inlined_call_operand.vmem [shape: f32[2,8,256], index: 0, kind: input, shape index: {}]
  %s1 = inlined_call_operand.vmem [shape: f32[9,256], index: 1, kind: input, shape index: {}]
  %s2 = inlined_call_operand.hbm [shape: bf16[2,16,64], index: 2, kind: input, shape index: {}]
  %s3 = inlined_call_operand.vmem [shape: bf16[9,8,16], index: 3, kind: input, shape index: {}]
  %s4 = inlined_call_operand.vmem [shape: f32[8,1], index: 4, kind: input, shape index: {}]
  %s5 = inlined_call_operand.hbm [shape: f32[9,64], index: 5, kind: input, shape index: {}]
  %s6 = inlined_call_operand.vmem [shape: bf16[64,256], index: 6, kind: input, shape index: {}]
  %s7 = inlined_call_operand.vmem [shape: bf16[9,8,8], index: 7, kind: input, shape index: {}]
  %s8 = inlined_call_operand.vmem [shape: f32[8,1], index: 8, kind: input, shape index: {}]
  %s9 = inlined_call_operand.vmem [shape: bf16[2,32,16], index: 9, kind: input, shape index: {}]
  %s10 = inlined_call_operand.vmem [shape: bf16[9,8,32], index: 10, kind: input, shape index: {}]
  %s11 = inlined_call_operand.vmem [shape: f32[8,1], index: 11, kind: input, shape index: {}]
  %s12 = inlined_call_operand.hbm [shape: f32[9,16], index: 12, kind: input, shape index: {}]
  %s13 = inlined_call_operand.hbm [shape: bf16[16,256], index: 13, kind: input, shape index: {}]
  %s14 = inlined_call_operand.vmem [shape: bf16[9,8,8], index: 14, kind: input, shape index: {}]
  %s15 = inlined_call_operand.vmem [shape: f32[8,1], index: 15, kind: input, shape index: {}]
  %s16 = inlined_call_operand.hbm [shape: f32[2,8,256], index: 16, kind: output, shape index: {0}]
  %s17 = inlined_call_operand.hbm [shape: f32[2,8,256], index: 17, kind: output, shape index: {1}]
  %18 = xla_tuple %s16, %s17
  %s19 = sld [smem:[#allocation0]]
  $region121: #{tpu_custom_call.1} parent=0
    _
  %s21 = ssub.s32 1, %s19
  %s22 = scalar_select 0, %s21, %s19
  $region1: #{tpu_custom_call.1} parent=0
    #allocation2 [shape = 'u8[8192]{0}', space=vmem, size = 0x2000, scoped, tag = 'input window, operand 2']
    #allocation3 [shape = 's32[2]{0}', space=sflag, size = 0x8, scoped, tag = 'scoped memory for tpu_custom_call.1']
    #allocation4 [shape = 's32[2]{0}', space=sflag, size = 0x8, scoped, tag = 'scoped memory for tpu_custom_call.1']
    #allocation5 [shape = 'u8[8192]{0}', space=vmem, size = 0x2000, scoped, tag = 'input window, operand 5, single buffered']
    #allocation6 [shape = 's32[1]{0}', space=sflag, size = 0x4, scoped, tag = 'scoped memory for tpu_custom_call.1']
    #allocation7 [shape = 'u8[8192]{0}', space=vmem, size = 0x2000, scoped, tag = 'input window, operand 12, single buffered']
    #allocation8 [shape = 'u8[8192]{0}', space=vmem, size = 0x2000, scoped, tag = 'input window, operand 13, single buffered']
    #allocation9 [shape = 's32[1]{0}', space=sflag, size = 0x4, scoped, tag = 'scoped memory for tpu_custom_call.1']
    #allocation10 [shape = 'u8[16384]{0}', space=vmem, size = 0x4000, scoped, tag = 'output window, operand 0']
    #allocation11 [shape = 'u8[16384]{0}', space=vmem, size = 0x4000, scoped, tag = 'output window, operand 1']
    #allocation12 [shape = 's32[2]{0}', space=sflag, size = 0x8, scoped, tag = 'scoped memory for tpu_custom_call.1']
    %23 = vsyncpa [#allocation3], 0
    %s24 = scalar_lea.sflag [#allocation3], 1
    %25 = vsyncpa %s24, 0
    %26 = vsyncpa [#allocation6], 0
    %27 = vsyncpa [#allocation9], 0
    %28 = vsyncpa [#allocation4], 0
    %s29 = scalar_lea.sflag [#allocation4], 1
    %30 = vsyncpa %s29, 0
    %31 = vsyncpa [#allocation12], 0
    %s32 = scalar_lea.sflag [#allocation12], 1
    %33 = vsyncpa %s32, 0
    loop: start=0, step=1, limit=4
    $region2: #{tpu_custom_call.1} parent=1 // loop_pre_header
      _
    $region3: #{tpu_custom_call.1} parent=1 // loop_header
      %s35 = sphi 0, %s39
      %p36 = scmp.ge.s32.totalorder %s35, 4
      %s45 = sphi 0, %s47
      %s48 = sphi 0, %s45
      %s49 = sphi 0, %s48
      %s65 = sphi 0, %s49
      %s69 = sphi 0, %s69
      %s71 = sphi 0, %s69
      %s72 = sphi 0, %s71
      %s86 = sphi 0, %s72
      %s92 = sphi 0, %s94
      %s95 = sphi 0, %s92
      %s96 = sphi 0, %s95
      %s112 = sphi 0, %s96
      %s116 = sphi 0, %s116
      %s118 = sphi 0, %s116
      %s119 = sphi 0, %s118
      %s133 = sphi 0, %s119
      %s137 = sphi 0, %s137
      %s139 = sphi 0, %s137
      %s140 = sphi 0, %s139
      %s154 = sphi 0, %s140
      %s158 = sphi 0, %s158
      %s160 = sphi 0, %s158
      %s161 = sphi 0, %s160
      %s175 = sphi 0, %s161
      %s179 = sphi 0, %s179
      %s181 = sphi 0, %s179
      %s182 = sphi 0, %s181
      %s196 = sphi 0, %s182
      %s200 = sphi 0, %s200
      %s202 = sphi 0, %s200
      %s203 = sphi 0, %s202
      %s217 = sphi 0, %s203
      %s221 = sphi 0, %s221
      %s223 = sphi 0, %s221
      %s224 = sphi 0, %s223
      %s238 = sphi 0, %s224
      %s244 = sphi 0, %s246
      %s247 = sphi 0, %s244
      %s248 = sphi 0, %s247
      %s264 = sphi 0, %s248
      %s268 = sphi 0, %s268
      %s270 = sphi 0, %s268
      %s271 = sphi 0, %s270
      %s285 = sphi 0, %s271
      %s289 = sphi 0, %s289
      %s291 = sphi 0, %s289
      %s292 = sphi 0, %s291
      %s306 = sphi 0, %s292
      %s310 = sphi 0, %s310
      %s312 = sphi 0, %s310
      %s313 = sphi 0, %s312
      %s327 = sphi 0, %s313
      %s331 = sphi 0, %s331
      %s333 = sphi 0, %s331
      %s334 = sphi 0, %s333
      %s348 = sphi 0, %s334
      %s352 = sphi 0, %s352
      %s354 = sphi 0, %s352
      %s355 = sphi 0, %s354
      %s369 = sphi 0, %s355
      %s373 = sphi 0, %s373
      %s375 = sphi 0, %s373
      %s376 = sphi 0, %s375
      %s390 = sphi 0, %s376
      %s396 = sphi 0, %s398
      %s399 = sphi 0, %s396
      %s400 = sphi 0, %s399
      %s416 = sphi 0, %s400
      %s422 = sphi 0, %s424
      %s425 = sphi 0, %s422
      %s426 = sphi 0, %s425
      %s442 = sphi 0, %s426
    $region4: #{tpu_custom_call.1} parent=1 // loop_header_branch
      %38 = sbr.rel (%p36) target = $region8
    $region5: #{tpu_custom_call.1} parent=1 // loop_body
      %s40 = ssub.s32 %s35, 1
      %s41 = ssub.s32 %s35, 2
      %s42 = sadd.s32 %s35, 1
      %s43 = ssub.s32 %s35, %s42
      %p44 = scmp.eq.s32.totalorder %s43, 0
      %s46 = sadd.s32 %s45, 1
      %s47 = scalar_select %p44, %s45, %s46
      %p50 = pneg %p44
      %p51 = scmp.eq.s32.totalorder %s35, 1
      %p52 = por %p50, %p51
      %p53 = scmp.ne.s32.totalorder %s45, %s48
      %p54 = scmp.eq.s32.totalorder %s35, 0
      %p55 = por %p53, %p54
      %p56 = scmp.ne.s32.totalorder %s45, %s48
      %p57 = scmp.eq.s32.totalorder %s40, 1
      %p58 = por %p56, %p57
      %p59 = scmp.ne.s32.totalorder %s48, %s49
      %p60 = scmp.eq.s32.totalorder %s40, 0
      %p61 = por %p59, %p60
      %p62 = scmp.ne.s32.totalorder %s48, %s49
      %p63 = scmp.eq.s32.totalorder %s41, 1
      %p64 = por %p62, %p63
      %p66 = scmp.ne.s32.totalorder %s49, %s65
      %p67 = scmp.eq.s32.totalorder %s41, 0
      %p68 = por %p66, %p67
      %s70 = sadd.s32 %s69, 1
      %p73 = scmp.eq.s32.totalorder %s35, 1
      %p74 = scmp.ne.s32.totalorder %s69, %s71
      %p75 = scmp.eq.s32.totalorder %s35, 0
      %p76 = por %p74, %p75
      %p77 = scmp.ne.s32.totalorder %s69, %s71
      %p78 = scmp.eq.s32.totalorder %s40, 1
      %p79 = por %p77, %p78
      %p80 = scmp.ne.s32.totalorder %s71, %s72
      %p81 = scmp.eq.s32.totalorder %s40, 0
      %p82 = por %p80, %p81
      %p83 = scmp.ne.s32.totalorder %s71, %s72
      %p84 = scmp.eq.s32.totalorder %s41, 1
      %p85 = por %p83, %p84
      %p87 = scmp.ne.s32.totalorder %s72, %s86
      %p88 = scmp.eq.s32.totalorder %s41, 0
      %p89 = por %p87, %p88
      %s90 = ssub.s32 %s35, %s42
      %p91 = scmp.eq.s32.totalorder %s90, 0
      %s93 = sadd.s32 %s92, 1
      %s94 = scalar_select %p91, %s92, %s93
      %p97 = pneg %p91
      %p98 = scmp.eq.s32.totalorder %s35, 1
      %p99 = por %p97, %p98
      %p100 = scmp.ne.s32.totalorder %s92, %s95
      %p101 = scmp.eq.s32.totalorder %s35, 0
      %p102 = por %p100, %p101
      %p103 = scmp.ne.s32.totalorder %s92, %s95
      %p104 = scmp.eq.s32.totalorder %s40, 1
      %p105 = por %p103, %p104
      %p106 = scmp.ne.s32.totalorder %s95, %s96
      %p107 = scmp.eq.s32.totalorder %s40, 0
      %p108 = por %p106, %p107
      %p109 = scmp.ne.s32.totalorder %s95, %s96
      %p110 = scmp.eq.s32.totalorder %s41, 1
      %p111 = por %p109, %p110
      %p113 = scmp.ne.s32.totalorder %s96, %s112
      %p114 = scmp.eq.s32.totalorder %s41, 0
      %p115 = por %p113, %p114
      %s117 = sadd.s32 %s116, 1
      %p120 = scmp.eq.s32.totalorder %s35, 1
      %p121 = scmp.ne.s32.totalorder %s116, %s118
      %p122 = scmp.eq.s32.totalorder %s35, 0
      %p123 = por %p121, %p122
      %p124 = scmp.ne.s32.totalorder %s116, %s118
      %p125 = scmp.eq.s32.totalorder %s40, 1
      %p126 = por %p124, %p125
      %p127 = scmp.ne.s32.totalorder %s118, %s119
      %p128 = scmp.eq.s32.totalorder %s40, 0
      %p129 = por %p127, %p128
      %p130 = scmp.ne.s32.totalorder %s118, %s119
      %p131 = scmp.eq.s32.totalorder %s41, 1
      %p132 = por %p130, %p131
      %p134 = scmp.ne.s32.totalorder %s119, %s133
      %p135 = scmp.eq.s32.totalorder %s41, 0
      %p136 = por %p134, %p135
      %s138 = sadd.s32 %s137, 1
      %p141 = scmp.eq.s32.totalorder %s35, 1
      %p142 = scmp.ne.s32.totalorder %s137, %s139
      %p143 = scmp.eq.s32.totalorder %s35, 0
      %p144 = por %p142, %p143
      %p145 = scmp.ne.s32.totalorder %s137, %s139
      %p146 = scmp.eq.s32.totalorder %s40, 1
      %p147 = por %p145, %p146
      %p148 = scmp.ne.s32.totalorder %s139, %s140
      %p149 = scmp.eq.s32.totalorder %s40, 0
      %p150 = por %p148, %p149
      %p151 = scmp.ne.s32.totalorder %s139, %s140
      %p152 = scmp.eq.s32.totalorder %s41, 1
      %p153 = por %p151, %p152
      %p155 = scmp.ne.s32.totalorder %s140, %s154
      %p156 = scmp.eq.s32.totalorder %s41, 0
      %p157 = por %p155, %p156
      %s159 = sadd.s32 %s158, 1
      %p162 = scmp.eq.s32.totalorder %s35, 1
      %p163 = scmp.ne.s32.totalorder %s158, %s160
      %p164 = scmp.eq.s32.totalorder %s35, 0
      %p165 = por %p163, %p164
      %p166 = scmp.ne.s32.totalorder %s158, %s160
      %p167 = scmp.eq.s32.totalorder %s40, 1
      %p168 = por %p166, %p167
      %p169 = scmp.ne.s32.totalorder %s160, %s161
      %p170 = scmp.eq.s32.totalorder %s40, 0
      %p171 = por %p169, %p170
      %p172 = scmp.ne.s32.totalorder %s160, %s161
      %p173 = scmp.eq.s32.totalorder %s41, 1
      %p174 = por %p172, %p173
      %p176 = scmp.ne.s32.totalorder %s161, %s175
      %p177 = scmp.eq.s32.totalorder %s41, 0
      %p178 = por %p176, %p177
      %s180 = sadd.s32 %s179, 1
      %p183 = scmp.eq.s32.totalorder %s35, 1
      %p184 = scmp.ne.s32.totalorder %s179, %s181
      %p185 = scmp.eq.s32.totalorder %s35, 0
      %p186 = por %p184, %p185
      %p187 = scmp.ne.s32.totalorder %s179, %s181
      %p188 = scmp.eq.s32.totalorder %s40, 1
      %p189 = por %p187, %p188
      %p190 = scmp.ne.s32.totalorder %s181, %s182
      %p191 = scmp.eq.s32.totalorder %s40, 0
      %p192 = por %p190, %p191
      %p193 = scmp.ne.s32.totalorder %s181, %s182
      %p194 = scmp.eq.s32.totalorder %s41, 1
      %p195 = por %p193, %p194
      %p197 = scmp.ne.s32.totalorder %s182, %s196
      %p198 = scmp.eq.s32.totalorder %s41, 0
      %p199 = por %p197, %p198
      %s201 = sadd.s32 %s200, 1
      %p204 = scmp.eq.s32.totalorder %s35, 1
      %p205 = scmp.ne.s32.totalorder %s200, %s202
      %p206 = scmp.eq.s32.totalorder %s35, 0
      %p207 = por %p205, %p206
      %p208 = scmp.ne.s32.totalorder %s200, %s202
      %p209 = scmp.eq.s32.totalorder %s40, 1
      %p210 = por %p208, %p209
      %p211 = scmp.ne.s32.totalorder %s202, %s203
      %p212 = scmp.eq.s32.totalorder %s40, 0
      %p213 = por %p211, %p212
      %p214 = scmp.ne.s32.totalorder %s202, %s203
      %p215 = scmp.eq.s32.totalorder %s41, 1
      %p216 = por %p214, %p215
      %p218 = scmp.ne.s32.totalorder %s203, %s217
      %p219 = scmp.eq.s32.totalorder %s41, 0
      %p220 = por %p218, %p219
      %s222 = sadd.s32 %s221, 1
      %p225 = scmp.eq.s32.totalorder %s35, 1
      %p226 = scmp.ne.s32.totalorder %s221, %s223
      %p227 = scmp.eq.s32.totalorder %s35, 0
      %p228 = por %p226, %p227
      %p229 = scmp.ne.s32.totalorder %s221, %s223
      %p230 = scmp.eq.s32.totalorder %s40, 1
      %p231 = por %p229, %p230
      %p232 = scmp.ne.s32.totalorder %s223, %s224
      %p233 = scmp.eq.s32.totalorder %s40, 0
      %p234 = por %p232, %p233
      %p235 = scmp.ne.s32.totalorder %s223, %s224
      %p236 = scmp.eq.s32.totalorder %s41, 1
      %p237 = por %p235, %p236
      %p239 = scmp.ne.s32.totalorder %s224, %s238
      %p240 = scmp.eq.s32.totalorder %s41, 0
      %p241 = por %p239, %p240
      %s242 = ssub.s32 %s35, %s42
      %p243 = scmp.eq.s32.totalorder %s242, 0
      %s245 = sadd.s32 %s244, 1
      %s246 = scalar_select %p243, %s244, %s245
      %p249 = pneg %p243
      %p250 = scmp.eq.s32.totalorder %s35, 1
      %p251 = por %p249, %p250
      %p252 = scmp.ne.s32.totalorder %s244, %s247
      %p253 = scmp.eq.s32.totalorder %s35, 0
      %p254 = por %p252, %p253
      %p255 = scmp.ne.s32.totalorder %s244, %s247
      %p256 = scmp.eq.s32.totalorder %s40, 1
      %p257 = por %p255, %p256
      %p258 = scmp.ne.s32.totalorder %s247, %s248
      %p259 = scmp.eq.s32.totalorder %s40, 0
      %p260 = por %p258, %p259
      %p261 = scmp.ne.s32.totalorder %s247, %s248
      %p262 = scmp.eq.s32.totalorder %s41, 1
      %p263 = por %p261, %p262
      %p265 = scmp.ne.s32.totalorder %s248, %s264
      %p266 = scmp.eq.s32.totalorder %s41, 0
      %p267 = por %p265, %p266
      %s269 = sadd.s32 %s268, 1
      %p272 = scmp.eq.s32.totalorder %s35, 1
      %p273 = scmp.ne.s32.totalorder %s268, %s270
      %p274 = scmp.eq.s32.totalorder %s35, 0
      %p275 = por %p273, %p274
      %p276 = scmp.ne.s32.totalorder %s268, %s270
      %p277 = scmp.eq.s32.totalorder %s40, 1
      %p278 = por %p276, %p277
      %p279 = scmp.ne.s32.totalorder %s270, %s271
      %p280 = scmp.eq.s32.totalorder %s40, 0
      %p281 = por %p279, %p280
      %p282 = scmp.ne.s32.totalorder %s270, %s271
      %p283 = scmp.eq.s32.totalorder %s41, 1
      %p284 = por %p282, %p283
      %p286 = scmp.ne.s32.totalorder %s271, %s285
      %p287 = scmp.eq.s32.totalorder %s41, 0
      %p288 = por %p286, %p287
      %s290 = sadd.s32 %s289, 1
      %p293 = scmp.eq.s32.totalorder %s35, 1
      %p294 = scmp.ne.s32.totalorder %s289, %s291
      %p295 = scmp.eq.s32.totalorder %s35, 0
      %p296 = por %p294, %p295
      %p297 = scmp.ne.s32.totalorder %s289, %s291
      %p298 = scmp.eq.s32.totalorder %s40, 1
      %p299 = por %p297, %p298
      %p300 = scmp.ne.s32.totalorder %s291, %s292
      %p301 = scmp.eq.s32.totalorder %s40, 0
      %p302 = por %p300, %p301
      %p303 = scmp.ne.s32.totalorder %s291, %s292
      %p304 = scmp.eq.s32.totalorder %s41, 1
      %p305 = por %p303, %p304
      %p307 = scmp.ne.s32.totalorder %s292, %s306
      %p308 = scmp.eq.s32.totalorder %s41, 0
      %p309 = por %p307, %p308
      %s311 = sadd.s32 %s310, 1
      %p314 = scmp.eq.s32.totalorder %s35, 1
      %p315 = scmp.ne.s32.totalorder %s310, %s312
      %p316 = scmp.eq.s32.totalorder %s35, 0
      %p317 = por %p315, %p316
      %p318 = scmp.ne.s32.totalorder %s310, %s312
      %p319 = scmp.eq.s32.totalorder %s40, 1
      %p320 = por %p318, %p319
      %p321 = scmp.ne.s32.totalorder %s312, %s313
      %p322 = scmp.eq.s32.totalorder %s40, 0
      %p323 = por %p321, %p322
      %p324 = scmp.ne.s32.totalorder %s312, %s313
      %p325 = scmp.eq.s32.totalorder %s41, 1
      %p326 = por %p324, %p325
      %p328 = scmp.ne.s32.totalorder %s313, %s327
      %p329 = scmp.eq.s32.totalorder %s41, 0
      %p330 = por %p328, %p329
      %s332 = sadd.s32 %s331, 1
      %p335 = scmp.eq.s32.totalorder %s35, 1
      %p336 = scmp.ne.s32.totalorder %s331, %s333
      %p337 = scmp.eq.s32.totalorder %s35, 0
      %p338 = por %p336, %p337
      %p339 = scmp.ne.s32.totalorder %s331, %s333
      %p340 = scmp.eq.s32.totalorder %s40, 1
      %p341 = por %p339, %p340
      %p342 = scmp.ne.s32.totalorder %s333, %s334
      %p343 = scmp.eq.s32.totalorder %s40, 0
      %p344 = por %p342, %p343
      %p345 = scmp.ne.s32.totalorder %s333, %s334
      %p346 = scmp.eq.s32.totalorder %s41, 1
      %p347 = por %p345, %p346
      %p349 = scmp.ne.s32.totalorder %s334, %s348
      %p350 = scmp.eq.s32.totalorder %s41, 0
      %p351 = por %p349, %p350
      %s353 = sadd.s32 %s352, 1
      %p356 = scmp.eq.s32.totalorder %s35, 1
      %p357 = scmp.ne.s32.totalorder %s352, %s354
      %p358 = scmp.eq.s32.totalorder %s35, 0
      %p359 = por %p357, %p358
      %p360 = scmp.ne.s32.totalorder %s352, %s354
      %p361 = scmp.eq.s32.totalorder %s40, 1
      %p362 = por %p360, %p361
      %p363 = scmp.ne.s32.totalorder %s354, %s355
      %p364 = scmp.eq.s32.totalorder %s40, 0
      %p365 = por %p363, %p364
      %p366 = scmp.ne.s32.totalorder %s354, %s355
      %p367 = scmp.eq.s32.totalorder %s41, 1
      %p368 = por %p366, %p367
      %p370 = scmp.ne.s32.totalorder %s355, %s369
      %p371 = scmp.eq.s32.totalorder %s41, 0
      %p372 = por %p370, %p371
      %s374 = sadd.s32 %s373, 1
      %p377 = scmp.eq.s32.totalorder %s35, 1
      %p378 = scmp.ne.s32.totalorder %s373, %s375
      %p379 = scmp.eq.s32.totalorder %s35, 0
      %p380 = por %p378, %p379
      %p381 = scmp.ne.s32.totalorder %s373, %s375
      %p382 = scmp.eq.s32.totalorder %s40, 1
      %p383 = por %p381, %p382
      %p384 = scmp.ne.s32.totalorder %s375, %s376
      %p385 = scmp.eq.s32.totalorder %s40, 0
      %p386 = por %p384, %p385
      %p387 = scmp.ne.s32.totalorder %s375, %s376
      %p388 = scmp.eq.s32.totalorder %s41, 1
      %p389 = por %p387, %p388
      %p391 = scmp.ne.s32.totalorder %s376, %s390
      %p392 = scmp.eq.s32.totalorder %s41, 0
      %p393 = por %p391, %p392
      %s394 = ssub.s32 %s35, %s42
      %p395 = scmp.eq.s32.totalorder %s394, 0
      %s397 = sadd.s32 %s396, 1
      %s398 = scalar_select %p395, %s396, %s397
      %p401 = pneg %p395
      %p402 = scmp.eq.s32.totalorder %s35, 1
      %p403 = por %p401, %p402
      %p404 = scmp.ne.s32.totalorder %s396, %s399
      %p405 = scmp.eq.s32.totalorder %s35, 0
      %p406 = por %p404, %p405
      %p407 = scmp.ne.s32.totalorder %s396, %s399
      %p408 = scmp.eq.s32.totalorder %s40, 1
      %p409 = por %p407, %p408
      %p410 = scmp.ne.s32.totalorder %s399, %s400
      %p411 = scmp.eq.s32.totalorder %s40, 0
      %p412 = por %p410, %p411
      %p413 = scmp.ne.s32.totalorder %s399, %s400
      %p414 = scmp.eq.s32.totalorder %s41, 1
      %p415 = por %p413, %p414
      %p417 = scmp.ne.s32.totalorder %s400, %s416
      %p418 = scmp.eq.s32.totalorder %s41, 0
      %p419 = por %p417, %p418
      %s420 = ssub.s32 %s35, %s42
      %p421 = scmp.eq.s32.totalorder %s420, 0
      %s423 = sadd.s32 %s422, 1
      %s424 = scalar_select %p421, %s422, %s423
      %p427 = pneg %p421
      %p428 = scmp.eq.s32.totalorder %s35, 1
      %p429 = por %p427, %p428
      %p430 = scmp.ne.s32.totalorder %s422, %s425
      %p431 = scmp.eq.s32.totalorder %s35, 0
      %p432 = por %p430, %p431
      %p433 = scmp.ne.s32.totalorder %s422, %s425
      %p434 = scmp.eq.s32.totalorder %s40, 1
      %p435 = por %p433, %p434
      %p436 = scmp.ne.s32.totalorder %s425, %s426
      %p437 = scmp.eq.s32.totalorder %s40, 0
      %p438 = por %p436, %p437
      %p439 = scmp.ne.s32.totalorder %s425, %s426
      %p440 = scmp.eq.s32.totalorder %s41, 1
      %p441 = por %p439, %p440
      %p443 = scmp.ne.s32.totalorder %s426, %s442
      %p444 = scmp.eq.s32.totalorder %s41, 0
      %p445 = por %p443, %p444
      %p446 = scmp.le.s32.totalorder 1, %s35
      %p447 = scmp.lt.s32.totalorder %s35, 3
      %p448 = pnand %p446, %p447
      %p449 = pneg %p448
      // Predicated region
      $region9: #{tpu_custom_call.1} parent=5 // pred_check
        _
      $region10: #{tpu_custom_call.1} parent=5 // pred_check_branch
        %451 = sbr.rel (%p448) target = $region12
      $region11: #{tpu_custom_call.1} parent=5 // pred_region
        %s452 = ssub.s32 %s35, 1
        // Predicated region
        $region13: #{tpu_custom_call.1} parent=11 // pred_check
          %p453 = pneg %p82
        $region14: #{tpu_custom_call.1} parent=11 // pred_check_branch
          %455 = sbr.rel (%p453) target = $region16
        $region15: #{tpu_custom_call.1} parent=11 // pred_region
          _
        $region16: #{tpu_custom_call.1} parent=11 // pred_fallthru
          _
        // Predicated region
        $region17: #{tpu_custom_call.1} parent=11 // pred_check
          %p456 = pneg %p129
        $region18: #{tpu_custom_call.1} parent=11 // pred_check_branch
          %458 = sbr.rel (%p456) target = $region20
        $region19: #{tpu_custom_call.1} parent=11 // pred_region
          _
        $region20: #{tpu_custom_call.1} parent=11 // pred_fallthru
          _
        // Predicated region
        $region21: #{tpu_custom_call.1} parent=11 // pred_check
          %p459 = pneg %p150
        $region22: #{tpu_custom_call.1} parent=11 // pred_check_branch
          %461 = sbr.rel (%p459) target = $region24
        $region23: #{tpu_custom_call.1} parent=11 // pred_region
          _
        $region24: #{tpu_custom_call.1} parent=11 // pred_fallthru
          _
        // Predicated region
        $region25: #{tpu_custom_call.1} parent=11 // pred_check
          %p462 = pneg %p171
        $region26: #{tpu_custom_call.1} parent=11 // pred_check_branch
          %464 = sbr.rel (%p462) target = $region28
        $region27: #{tpu_custom_call.1} parent=11 // pred_region
          %s466 = ssub.s32 256, 256
          %467 = vsyncadd [#allocation6], %s466
          %s468 = sshll.u32 [#allocation5], 4
          %s469 = int_to_ptr.vmem [resolvable:$true] %s468
          %474 = dma.hbm_to_vmem [thread:$0]  %s5, 256, %s469, [#allocation6], 128, 128, 8
        $region28: #{tpu_custom_call.1} parent=11 // pred_fallthru
          _
        // Predicated region
        $region29: #{tpu_custom_call.1} parent=11 // pred_check
          %p475 = pneg %p192
        $region30: #{tpu_custom_call.1} parent=11 // pred_check_branch
          %477 = sbr.rel (%p475) target = $region32
        $region31: #{tpu_custom_call.1} parent=11 // pred_region
          _
        $region32: #{tpu_custom_call.1} parent=11 // pred_fallthru
          _
        // Predicated region
        $region33: #{tpu_custom_call.1} parent=11 // pred_check
          %p478 = pneg %p213
        $region34: #{tpu_custom_call.1} parent=11 // pred_check_branch
          %480 = sbr.rel (%p478) target = $region36
        $region35: #{tpu_custom_call.1} parent=11 // pred_region
          _
        $region36: #{tpu_custom_call.1} parent=11 // pred_fallthru
          _
        // Predicated region
        $region37: #{tpu_custom_call.1} parent=11 // pred_check
          %p481 = pneg %p234
        $region38: #{tpu_custom_call.1} parent=11 // pred_check_branch
          %483 = sbr.rel (%p481) target = $region40
        $region39: #{tpu_custom_call.1} parent=11 // pred_region
          _
        $region40: #{tpu_custom_call.1} parent=11 // pred_fallthru
          _
        // Predicated region
        $region41: #{tpu_custom_call.1} parent=11 // pred_check
          %p484 = pneg %p281
        $region42: #{tpu_custom_call.1} parent=11 // pred_check_branch
          %486 = sbr.rel (%p484) target = $region44
        $region43: #{tpu_custom_call.1} parent=11 // pred_region
          _
        $region44: #{tpu_custom_call.1} parent=11 // pred_fallthru
          _
        // Predicated region
        $region45: #{tpu_custom_call.1} parent=11 // pred_check
          %p487 = pneg %p302
        $region46: #{tpu_custom_call.1} parent=11 // pred_check_branch
          %489 = sbr.rel (%p487) target = $region48
        $region47: #{tpu_custom_call.1} parent=11 // pred_region
          _
        $region48: #{tpu_custom_call.1} parent=11 // pred_fallthru
          _
        // Predicated region
        $region49: #{tpu_custom_call.1} parent=11 // pred_check
          %p490 = pneg %p323
        $region50: #{tpu_custom_call.1} parent=11 // pred_check_branch
          %492 = sbr.rel (%p490) target = $region52
        $region51: #{tpu_custom_call.1} parent=11 // pred_region
          %s494 = ssub.s32 256, 256
          %495 = vsyncadd [#allocation6], %s494
          %s496 = sshll.u32 [#allocation7], 4
          %s497 = int_to_ptr.vmem [resolvable:$true] %s496
          %502 = dma.hbm_to_vmem [thread:$0]  %s12, 256, %s497, [#allocation6], 128, 128, 8
        $region52: #{tpu_custom_call.1} parent=11 // pred_fallthru
          _
        // Predicated region
        $region53: #{tpu_custom_call.1} parent=11 // pred_check
          %p503 = pneg %p344
        $region54: #{tpu_custom_call.1} parent=11 // pred_check_branch
          %505 = sbr.rel (%p503) target = $region56
        $region55: #{tpu_custom_call.1} parent=11 // pred_region
          %s507 = ssub.s32 256, 256
          %508 = vsyncadd [#allocation9], %s507
          %s509 = sshll.u32 [#allocation8], 4
          %s510 = int_to_ptr.vmem [resolvable:$true] %s509
          %515 = dma.hbm_to_vmem [thread:$0]  %s13, 256, %s510, [#allocation9], 128, 128, 8
        $region56: #{tpu_custom_call.1} parent=11 // pred_fallthru
          _
        // Predicated region
        $region57: #{tpu_custom_call.1} parent=11 // pred_check
          %p516 = pneg %p365
        $region58: #{tpu_custom_call.1} parent=11 // pred_check_branch
          %518 = sbr.rel (%p516) target = $region60
        $region59: #{tpu_custom_call.1} parent=11 // pred_region
          _
        $region60: #{tpu_custom_call.1} parent=11 // pred_fallthru
          _
        // Predicated region
        $region61: #{tpu_custom_call.1} parent=11 // pred_check
          %p519 = pneg %p386
        $region62: #{tpu_custom_call.1} parent=11 // pred_check_branch
          %521 = sbr.rel (%p519) target = $region64
        $region63: #{tpu_custom_call.1} parent=11 // pred_region
          _
        $region64: #{tpu_custom_call.1} parent=11 // pred_fallthru
          _
      $region12: #{tpu_custom_call.1} parent=5 // pred_fallthru
        _
      %p522 = scmp.lt.s32.totalorder %s35, 2
      // Predicated region
      $region65: #{tpu_custom_call.1} parent=5 // pred_check
        %p523 = pneg %p522
      $region66: #{tpu_custom_call.1} parent=5 // pred_check_branch
        %525 = sbr.rel (%p523) target = $region68
      $region67: #{tpu_custom_call.1} parent=5 // pred_region
        // Predicated region
        $region69: #{tpu_custom_call.1} parent=67 // pred_check
          %p526 = pneg %p55
        $region70: #{tpu_custom_call.1} parent=67 // pred_check_branch
          %528 = sbr.rel (%p526) target = $region72
        $region71: #{tpu_custom_call.1} parent=67 // pred_region
          %p529 = scmp.lt.s32.totalorder %s35, 1
          %s530 = scalar_select %p529, %s35, 1
          %s531 = smul.addr %s530, 2
          %s532 = smul.addr %s531, 8
          %s533 = scalar_lea.vmem %s0, %s532
        $region72: #{tpu_custom_call.1} parent=67 // pred_fallthru
          _
        // Predicated region
        $region73: #{tpu_custom_call.1} parent=67 // pred_check
          %p534 = pneg %p102
        $region74: #{tpu_custom_call.1} parent=67 // pred_check_branch
          %536 = sbr.rel (%p534) target = $region76
        $region75: #{tpu_custom_call.1} parent=67 // pred_region
          %s537 = sand.u32 %s92, 1
          %s538 = scalar_lea.sflag [#allocation3], %s537
          %s539 = sand.u32 %s92, 1
          %s540 = smul.addr %s539, 8
          %s541 = scalar_lea.vmem [#allocation2], %s540
          %s543 = ssub.s32 128, 128
          %544 = vsyncadd %s538, %s543
          %s545 = smul.addr %s35, 2
          %s546 = smul.addr %s545, 64
          %s547 = scalar_lea.hbm %s2, %s546
          %s548 = sshll.u32 %s541, 4
          %s549 = int_to_ptr.vmem [resolvable:$true] %s548
          %554 = dma.hbm_to_vmem [thread:$0]  %s547, 128, %s549, %s538, 64, 64, 4
        $region76: #{tpu_custom_call.1} parent=67 // pred_fallthru
          _
        // Predicated region
        $region77: #{tpu_custom_call.1} parent=67 // pred_check
          %p555 = pneg %p254
        $region78: #{tpu_custom_call.1} parent=67 // pred_check_branch
          %557 = sbr.rel (%p555) target = $region80
        $region79: #{tpu_custom_call.1} parent=67 // pred_region
          %p558 = scmp.lt.s32.totalorder %s35, 1
          %s559 = scalar_select %p558, %s35, 1
          %s560 = smul.addr %s559, 4
          %s561 = smul.addr %s560, 4
          %s562 = scalar_lea.vmem %s9, %s561
        $region80: #{tpu_custom_call.1} parent=67 // pred_fallthru
          _
      $region68: #{tpu_custom_call.1} parent=5 // pred_fallthru
        _
      %p563 = scmp.le.s32.totalorder 1, %s35
      %p564 = scmp.lt.s32.totalorder %s35, 3
      %p565 = pnand %p563, %p564
      %p566 = pneg %p565
      // Predicated region
      $region81: #{tpu_custom_call.1} parent=5 // pred_check
        _
      $region82: #{tpu_custom_call.1} parent=5 // pred_check_branch
        %568 = sbr.rel (%p565) target = $region84
      $region83: #{tpu_custom_call.1} parent=5 // pred_region
        %s569 = ssub.s32 %s35, 1
        %s570 = sand.u32 %s95, 1
        %s571 = scalar_lea.sflag [#allocation3], %s570
        %s572 = sand.u32 %s95, 1
        %s573 = smul.addr %s572, 8
        %s574 = scalar_lea.vmem [#allocation2], %s573
        // Predicated region
        $region85: #{tpu_custom_call.1} parent=83 // pred_check
          %p575 = pneg %p108
        $region86: #{tpu_custom_call.1} parent=83 // pred_check_branch
          %577 = sbr.rel (%p575) target = $region88
        $region87: #{tpu_custom_call.1} parent=83 // pred_region
          %578 = dma.done %s571, 128
        $region88: #{tpu_custom_call.1} parent=83 // pred_fallthru
          _
        // Predicated region
        $region89: #{tpu_custom_call.1} parent=83 // pred_check
          %p579 = pneg %p171
        $region90: #{tpu_custom_call.1} parent=83 // pred_check_branch
          %581 = sbr.rel (%p579) target = $region92
        $region91: #{tpu_custom_call.1} parent=83 // pred_region
          %582 = dma.done [#allocation6], 256
        $region92: #{tpu_custom_call.1} parent=83 // pred_fallthru
          _
        // Predicated region
        $region93: #{tpu_custom_call.1} parent=83 // pred_check
          %p583 = pneg %p323
        $region94: #{tpu_custom_call.1} parent=83 // pred_check_branch
          %585 = sbr.rel (%p583) target = $region96
        $region95: #{tpu_custom_call.1} parent=83 // pred_region
          %586 = dma.done [#allocation6], 256
        $region96: #{tpu_custom_call.1} parent=83 // pred_fallthru
          _
        // Predicated region
        $region97: #{tpu_custom_call.1} parent=83 // pred_check
          %p587 = pneg %p344
        $region98: #{tpu_custom_call.1} parent=83 // pred_check_branch
          %589 = sbr.rel (%p587) target = $region100
        $region99: #{tpu_custom_call.1} parent=83 // pred_region
          %590 = dma.done [#allocation9], 256
        $region100: #{tpu_custom_call.1} parent=83 // pred_fallthru
          _
        %p591 = scmp.lt.s32.totalorder %s40, 1
        %s592 = scalar_select %p591, %s40, 1
        %s593 = smul.addr %s592, 2
        %s594 = smul.addr %s593, 8
        %s595 = scalar_lea.vmem %s0, %s594
        %p596 = pneg %p61
        %p597 = pneg %p58
        %p598 = pneg %p82
        %p599 = pneg %p79
        %s600 = sand.u32 %s95, 1
        %s601 = scalar_lea.sflag [#allocation3], %s600
        %s602 = sand.u32 %s95, 1
        %s603 = smul.addr %s602, 8
        %s604 = scalar_lea.vmem [#allocation2], %s603
        %p605 = pneg %p108
        %p606 = pneg %p105
        %p607 = pneg %p129
        %p608 = pneg %p126
        %p609 = pneg %p150
        %p610 = pneg %p147
        %p611 = pneg %p171
        %p612 = pneg %p168
        %p613 = pneg %p192
        %p614 = pneg %p189
        %p615 = pneg %p213
        %p616 = pneg %p210
        %p617 = pneg %p234
        %p618 = pneg %p231
        %p619 = scmp.lt.s32.totalorder %s40, 1
        %s620 = scalar_select %p619, %s40, 1
        %s621 = smul.addr %s620, 4
        %s622 = smul.addr %s621, 4
        %s623 = scalar_lea.vmem %s9, %s622
        %p624 = pneg %p260
        %p625 = pneg %p257
        %p626 = pneg %p281
        %p627 = pneg %p278
        %p628 = pneg %p302
        %p629 = pneg %p299
        %p630 = pneg %p323
        %p631 = pneg %p320
        %p632 = pneg %p344
        %p633 = pneg %p341
        %p634 = pneg %p365
        %p635 = pneg %p362
        %p636 = pneg %p386
        %p637 = pneg %p383
        %p638 = pneg %p412
        %p639 = pneg %p409
        %s640 = sand.u32 %s399, 1
        %s641 = scalar_lea.sflag [#allocation4], %s640
        %s642 = sand.u32 %s399, 1
        %s643 = smul.addr %s642, 16
        %s644 = scalar_lea.vmem [#allocation10], %s643
        %p645 = pneg %p438
        %p646 = pneg %p435
        %s647 = sand.u32 %s425, 1
        %s648 = scalar_lea.sflag [#allocation12], %s647
        %s649 = sand.u32 %s425, 1
        %s650 = smul.addr %s649, 16
        %s651 = scalar_lea.vmem [#allocation11], %s650
        %p652 = scmp.lt.s32.totalorder %s40, 1
        %s653 = scalar_select %p652, %s40, 1
        %s654 = smul.addr %s653, 2
        %s655 = smul.addr %s654, 8
        %s656 = scalar_lea.vmem %s0, %s655
        %p657 = scmp.lt.s32.totalorder %s40, 1
        %s658 = scalar_select %p657, %s40, 1
        %s659 = smul.addr %s658, 4
        %s660 = smul.addr %s659, 4
        %s661 = scalar_lea.vmem %s9, %s660
        %v663 = vld [vmem:[%s656] sm:$0xff]
        %v664 = vld [vmem:[%s656 + $0x8] sm:$0xff]
        %v665 = vld [vmem:[%s574] sm:$0xf]
        %v666 = vld [vmem:[%s574 + $0x4] sm:$0xf]
        %v669 = vunpack.c.l.b16 %v665
        %v670 = vunpack.c.l.b16 %v666
        %v671 = vpack.c.b16 %v670, %v669
        %672 = vrot.lane.b32.xlu0 %v671, 9
        %v673 = vpop.permute.xlu0 %672
        %vm674 = vcmask 72704
        %v677 = vsel %vm674, 0, %v673
        %vm678 = vcmask 596992
        %v679 = vsel %vm678, %v677, 0
        %v681 = vld [vmem:[%s3] sm:$0xf]
        %vm682 = vcmask 130048
        %v684 = vsel %vm682, %v681, 0
        %686 = vmatprep.subr.bf16.mxu0 0
        %687 = vmatpush1.bf16.msra.mxu0 0
        %688 = vmatprep.subr.bf16.mxu0 0
        %689 = vmatpush1.bf16.msra.mxu0 0
        %690 = vmatprep.subr.bf16.mxu0 0
        %691 = vmatpush1.bf16.msra.mxu0 0
        %692 = vmatprep.subr.bf16.mxu0 0
        %693 = vmatpush1.bf16.msra.mxu0 0
        %694 = vmatprep.subr.bf16.mxu0 0
        %695 = vmatpush1.bf16.msra.mxu0 0
        %696 = vmatprep.subr.bf16.mxu0 0
        %697 = vmatpush1.bf16.msra.mxu0 0
        %698 = vmatprep.subr.bf16.mxu0 0
        %699 = vmatpush1.bf16.msra.mxu0 0
        %700 = vmatprep.subr.bf16.mxu0 0
        %701 = vmatpush1.bf16.msra.mxu0 %v679
        %702 = vmatprep.subr.bf16.mxu0 0
        %703 = vmatpush2.bf16.msra.mxu0 0
        %704 = vmatprep.subr.bf16.mxu0 0
        %705 = vmatpush2.bf16.msra.mxu0 0
        %706 = vmatprep.subr.bf16.mxu0 0
        %707 = vmatpush2.bf16.msra.mxu0 0
        %708 = vmatprep.subr.bf16.mxu0 0
        %709 = vmatpush2.bf16.msra.mxu0 0
        %710 = vmatprep.subr.bf16.mxu0 0
        %711 = vmatpush2.bf16.msra.mxu0 0
        %712 = vmatprep.subr.bf16.mxu0 0
        %713 = vmatpush2.bf16.msra.mxu0 0
        %714 = vmatprep.subr.bf16.mxu0 0
        %715 = vmatpush2.bf16.msra.mxu0 0
        %716 = vmatprep.subr.bf16.mxu0 0
        %717 = vmatpush2.bf16.msra.mxu0 0
        %718 = vmatprep.mubr.bf16.mxu0 0
        %719 = vmatmul.mubr.bf16.gmra.mxu0 %v684
        %v720 = vpop.f32.mrf.mxu0
        %v721 = vadd.f32 0.0, %v720
        %v722 = vpop.f32.mrf.mxu0
        %v723 = vpop.f32.mrf.mxu0
        %v724 = vpop.f32.mrf.mxu0
        %725 = vdwg.mxu0
        %v726 = vld [vmem:[#allocation5] sm:$0x1]
        %v727 = vlaneseq
        %v728 = vshrl.u32 %v727, 7
        %v729 = vsub.s32 0, %v728
        %v730 = vrot.slane %v726, %v729
        %v731 = vmul.f32 %v721, %v730
        %s732 = scalar_lea.vmem %s3, 4
        %v733 = vld [vmem:[%s732] sm:$0xf]
        %735 = vrot.lane.b32.xlu0 %v679, 127
        %v736 = vpop.permute.xlu0 %735
        %v739 = vsel %vm682, %v733, 0
        %741 = vmatprep.subr.bf16.mxu0 0
        %742 = vmatpush1.bf16.msra.mxu0 0
        %743 = vmatprep.subr.bf16.mxu0 0
        %744 = vmatpush1.bf16.msra.mxu0 0
        %745 = vmatprep.subr.bf16.mxu0 0
        %746 = vmatpush1.bf16.msra.mxu0 0
        %747 = vmatprep.subr.bf16.mxu0 0
        %748 = vmatpush1.bf16.msra.mxu0 0
        %749 = vmatprep.subr.bf16.mxu0 0
        %750 = vmatpush1.bf16.msra.mxu0 0
        %751 = vmatprep.subr.bf16.mxu0 0
        %752 = vmatpush1.bf16.msra.mxu0 0
        %753 = vmatprep.subr.bf16.mxu0 0
        %754 = vmatpush1.bf16.msra.mxu0 0
        %755 = vmatprep.subr.bf16.mxu0 0
        %756 = vmatpush1.bf16.msra.mxu0 %v736
        %757 = vmatprep.subr.bf16.mxu0 0
        %758 = vmatpush2.bf16.msra.mxu0 0
        %759 = vmatprep.subr.bf16.mxu0 0
        %760 = vmatpush2.bf16.msra.mxu0 0
        %761 = vmatprep.subr.bf16.mxu0 0
        %762 = vmatpush2.bf16.msra.mxu0 0
        %763 = vmatprep.subr.bf16.mxu0 0
        %764 = vmatpush2.bf16.msra.mxu0 0
        %765 = vmatprep.subr.bf16.mxu0 0
        %766 = vmatpush2.bf16.msra.mxu0 0
        %767 = vmatprep.subr.bf16.mxu0 0
        %768 = vmatpush2.bf16.msra.mxu0 0
        %769 = vmatprep.subr.bf16.mxu0 0
        %770 = vmatpush2.bf16.msra.mxu0 0
        %771 = vmatprep.subr.bf16.mxu0 0
        %772 = vmatpush2.bf16.msra.mxu0 0
        %773 = vmatprep.mubr.bf16.mxu0 0
        %774 = vmatmul.mubr.bf16.gmra.mxu0 %v739
        %v775 = vpop.f32.mrf.mxu0
        %v776 = vadd.f32 0.0, %v775
        %v777 = vpop.f32.mrf.mxu0
        %v778 = vpop.f32.mrf.mxu0
        %v779 = vpop.f32.mrf.mxu0
        %780 = vdwg.mxu0
        %v781 = vld [vmem:[#allocation5 + $0x1] sm:$0x1]
        %v782 = vlaneseq
        %v783 = vshrl.u32 %v782, 7
        %v784 = vsub.s32 0, %v783
        %v785 = vrot.slane %v781, %v784
        %v786 = vmul.f32 %v776, %v785
        %v787 = vadd.f32 %v731, %v786
        %s788 = scalar_lea.vmem %s3, 8
        %v789 = vld [vmem:[%s788] sm:$0xf]
        %790 = vrot.lane.b32.xlu0 %v679, 126
        %v791 = vpop.permute.xlu0 %790
        %v794 = vsel %vm682, %v789, 0
        %796 = vmatprep.subr.bf16.mxu0 0
        %797 = vmatpush1.bf16.msra.mxu0 0
        %798 = vmatprep.subr.bf16.mxu0 0
        %799 = vmatpush1.bf16.msra.mxu0 0
        %800 = vmatprep.subr.bf16.mxu0 0
        %801 = vmatpush1.bf16.msra.mxu0 0
        %802 = vmatprep.subr.bf16.mxu0 0
        %803 = vmatpush1.bf16.msra.mxu0 0
        %804 = vmatprep.subr.bf16.mxu0 0
        %805 = vmatpush1.bf16.msra.mxu0 0
        %806 = vmatprep.subr.bf16.mxu0 0
        %807 = vmatpush1.bf16.msra.mxu0 0
        %808 = vmatprep.subr.bf16.mxu0 0
        %809 = vmatpush1.bf16.msra.mxu0 0
        %810 = vmatprep.subr.bf16.mxu0 0
        %811 = vmatpush1.bf16.msra.mxu0 %v791
        %812 = vmatprep.subr.bf16.mxu0 0
        %813 = vmatpush2.bf16.msra.mxu0 0
        %814 = vmatprep.subr.bf16.mxu0 0
        %815 = vmatpush2.bf16.msra.mxu0 0
        %816 = vmatprep.subr.bf16.mxu0 0
        %817 = vmatpush2.bf16.msra.mxu0 0
        %818 = vmatprep.subr.bf16.mxu0 0
        %819 = vmatpush2.bf16.msra.mxu0 0
        %820 = vmatprep.subr.bf16.mxu0 0
        %821 = vmatpush2.bf16.msra.mxu0 0
        %822 = vmatprep.subr.bf16.mxu0 0
        %823 = vmatpush2.bf16.msra.mxu0 0
        %824 = vmatprep.subr.bf16.mxu0 0
        %825 = vmatpush2.bf16.msra.mxu0 0
        %826 = vmatprep.subr.bf16.mxu0 0
        %827 = vmatpush2.bf16.msra.mxu0 0
        %828 = vmatprep.mubr.bf16.mxu0 0
        %829 = vmatmul.mubr.bf16.gmra.mxu0 %v794
        %v830 = vpop.f32.mrf.mxu0
        %v831 = vadd.f32 0.0, %v830
        %v832 = vpop.f32.mrf.mxu0
        %v833 = vpop.f32.mrf.mxu0
        %v834 = vpop.f32.mrf.mxu0
        %835 = vdwg.mxu0
        %v836 = vld [vmem:[#allocation5 + $0x2] sm:$0x1]
        %v837 = vlaneseq
        %v838 = vshrl.u32 %v837, 7
        %v839 = vsub.s32 0, %v838
        %v840 = vrot.slane %v836, %v839
        %v841 = vmul.f32 %v831, %v840
        %v842 = vadd.f32 %v787, %v841
        %s843 = scalar_lea.vmem %s3, 12
        %v844 = vld [vmem:[%s843] sm:$0xf]
        %845 = vrot.lane.b32.xlu0 %v679, 120
        %v846 = vpop.permute.xlu0 %845
        %v849 = vsel %vm682, %v844, 0
        %851 = vmatprep.subr.bf16.mxu0 0
        %852 = vmatpush1.bf16.msra.mxu0 0
        %853 = vmatprep.subr.bf16.mxu0 0
        %854 = vmatpush1.bf16.msra.mxu0 0
        %855 = vmatprep.subr.bf16.mxu0 0
        %856 = vmatpush1.bf16.msra.mxu0 0
        %857 = vmatprep.subr.bf16.mxu0 0
        %858 = vmatpush1.bf16.msra.mxu0 0
        %859 = vmatprep.subr.bf16.mxu0 0
        %860 = vmatpush1.bf16.msra.mxu0 0
        %861 = vmatprep.subr.bf16.mxu0 0
        %862 = vmatpush1.bf16.msra.mxu0 0
        %863 = vmatprep.subr.bf16.mxu0 0
        %864 = vmatpush1.bf16.msra.mxu0 0
        %865 = vmatprep.subr.bf16.mxu0 0
        %866 = vmatpush1.bf16.msra.mxu0 %v846
        %867 = vmatprep.subr.bf16.mxu0 0
        %868 = vmatpush2.bf16.msra.mxu0 0
        %869 = vmatprep.subr.bf16.mxu0 0
        %870 = vmatpush2.bf16.msra.mxu0 0
        %871 = vmatprep.subr.bf16.mxu0 0
        %872 = vmatpush2.bf16.msra.mxu0 0
        %873 = vmatprep.subr.bf16.mxu0 0
        %874 = vmatpush2.bf16.msra.mxu0 0
        %875 = vmatprep.subr.bf16.mxu0 0
        %876 = vmatpush2.bf16.msra.mxu0 0
        %877 = vmatprep.subr.bf16.mxu0 0
        %878 = vmatpush2.bf16.msra.mxu0 0
        %879 = vmatprep.subr.bf16.mxu0 0
        %880 = vmatpush2.bf16.msra.mxu0 0
        %881 = vmatprep.subr.bf16.mxu0 0
        %882 = vmatpush2.bf16.msra.mxu0 0
        %883 = vmatprep.mubr.bf16.mxu0 0
        %884 = vmatmul.mubr.bf16.gmra.mxu0 %v849
        %v885 = vpop.f32.mrf.mxu0
        %v886 = vadd.f32 0.0, %v885
        %v887 = vpop.f32.mrf.mxu0
        %v888 = vpop.f32.mrf.mxu0
        %v889 = vpop.f32.mrf.mxu0
        %890 = vdwg.mxu0
        %v891 = vld [vmem:[#allocation5 + $0x3] sm:$0x1]
        %v892 = vlaneseq
        %v893 = vshrl.u32 %v892, 7
        %v894 = vsub.s32 0, %v893
        %v895 = vrot.slane %v891, %v894
        %v896 = vmul.f32 %v886, %v895
        %v897 = vadd.f32 %v842, %v896
        %s898 = scalar_lea.vmem %s3, 16
        %v899 = vld [vmem:[%s898] sm:$0xf]
        %900 = vrot.lane.b32.xlu0 %v679, 119
        %v901 = vpop.permute.xlu0 %900
        %v904 = vsel %vm682, %v899, 0
        %906 = vmatprep.subr.bf16.mxu0 0
        %907 = vmatpush1.bf16.msra.mxu0 0
        %908 = vmatprep.subr.bf16.mxu0 0
        %909 = vmatpush1.bf16.msra.mxu0 0
        %910 = vmatprep.subr.bf16.mxu0 0
        %911 = vmatpush1.bf16.msra.mxu0 0
        %912 = vmatprep.subr.bf16.mxu0 0
        %913 = vmatpush1.bf16.msra.mxu0 0
        %914 = vmatprep.subr.bf16.mxu0 0
        %915 = vmatpush1.bf16.msra.mxu0 0
        %916 = vmatprep.subr.bf16.mxu0 0
        %917 = vmatpush1.bf16.msra.mxu0 0
        %918 = vmatprep.subr.bf16.mxu0 0
        %919 = vmatpush1.bf16.msra.mxu0 0
        %920 = vmatprep.subr.bf16.mxu0 0
        %921 = vmatpush1.bf16.msra.mxu0 %v901
        %922 = vmatprep.subr.bf16.mxu0 0
        %923 = vmatpush2.bf16.msra.mxu0 0
        %924 = vmatprep.subr.bf16.mxu0 0
        %925 = vmatpush2.bf16.msra.mxu0 0
        %926 = vmatprep.subr.bf16.mxu0 0
        %927 = vmatpush2.bf16.msra.mxu0 0
        %928 = vmatprep.subr.bf16.mxu0 0
        %929 = vmatpush2.bf16.msra.mxu0 0
        %930 = vmatprep.subr.bf16.mxu0 0
        %931 = vmatpush2.bf16.msra.mxu0 0
        %932 = vmatprep.subr.bf16.mxu0 0
        %933 = vmatpush2.bf16.msra.mxu0 0
        %934 = vmatprep.subr.bf16.mxu0 0
        %935 = vmatpush2.bf16.msra.mxu0 0
        %936 = vmatprep.subr.bf16.mxu0 0
        %937 = vmatpush2.bf16.msra.mxu0 0
        %938 = vmatprep.mubr.bf16.mxu0 0
        %939 = vmatmul.mubr.bf16.gmra.mxu0 %v904
        %v940 = vpop.f32.mrf.mxu0
        %v941 = vadd.f32 0.0, %v940
        %v942 = vpop.f32.mrf.mxu0
        %v943 = vpop.f32.mrf.mxu0
        %v944 = vpop.f32.mrf.mxu0
        %945 = vdwg.mxu0
        %v946 = vadd.f32 %v897, %v941
        %s947 = scalar_lea.vmem %s3, 20
        %v948 = vld [vmem:[%s947] sm:$0xf]
        %949 = vrot.lane.b32.xlu0 %v679, 118
        %v950 = vpop.permute.xlu0 %949
        %v953 = vsel %vm682, %v948, 0
        %955 = vmatprep.subr.bf16.mxu0 0
        %956 = vmatpush1.bf16.msra.mxu0 0
        %957 = vmatprep.subr.bf16.mxu0 0
        %958 = vmatpush1.bf16.msra.mxu0 0
        %959 = vmatprep.subr.bf16.mxu0 0
        %960 = vmatpush1.bf16.msra.mxu0 0
        %961 = vmatprep.subr.bf16.mxu0 0
        %962 = vmatpush1.bf16.msra.mxu0 0
        %963 = vmatprep.subr.bf16.mxu0 0
        %964 = vmatpush1.bf16.msra.mxu0 0
        %965 = vmatprep.subr.bf16.mxu0 0
        %966 = vmatpush1.bf16.msra.mxu0 0
        %967 = vmatprep.subr.bf16.mxu0 0
        %968 = vmatpush1.bf16.msra.mxu0 0
        %969 = vmatprep.subr.bf16.mxu0 0
        %970 = vmatpush1.bf16.msra.mxu0 %v950
        %971 = vmatprep.subr.bf16.mxu0 0
        %972 = vmatpush2.bf16.msra.mxu0 0
        %973 = vmatprep.subr.bf16.mxu0 0
        %974 = vmatpush2.bf16.msra.mxu0 0
        %975 = vmatprep.subr.bf16.mxu0 0
        %976 = vmatpush2.bf16.msra.mxu0 0
        %977 = vmatprep.subr.bf16.mxu0 0
        %978 = vmatpush2.bf16.msra.mxu0 0
        %979 = vmatprep.subr.bf16.mxu0 0
        %980 = vmatpush2.bf16.msra.mxu0 0
        %981 = vmatprep.subr.bf16.mxu0 0
        %982 = vmatpush2.bf16.msra.mxu0 0
        %983 = vmatprep.subr.bf16.mxu0 0
        %984 = vmatpush2.bf16.msra.mxu0 0
        %985 = vmatprep.subr.bf16.mxu0 0
        %986 = vmatpush2.bf16.msra.mxu0 0
        %987 = vmatprep.mubr.bf16.mxu0 0
        %988 = vmatmul.mubr.bf16.gmra.mxu0 %v953
        %v989 = vpop.f32.mrf.mxu0
        %v990 = vadd.f32 0.0, %v989
        %v991 = vpop.f32.mrf.mxu0
        %v992 = vpop.f32.mrf.mxu0
        %v993 = vpop.f32.mrf.mxu0
        %994 = vdwg.mxu0
        %v995 = vld [vmem:[#allocation5 + $0x5] sm:$0x1]
        %v996 = vlaneseq
        %v997 = vshrl.u32 %v996, 7
        %v998 = vsub.s32 0, %v997
        %v999 = vrot.slane %v995, %v998
        %v1000 = vmul.f32 %v990, %v999
        %v1001 = vadd.f32 %v946, %v1000
        %s1002 = scalar_lea.vmem %s3, 24
        %v1003 = vld [vmem:[%s1002] sm:$0xf]
        %1004 = vrot.lane.b32.xlu0 %v679, 112
        %v1005 = vpop.permute.xlu0 %1004
        %v1008 = vsel %vm682, %v1003, 0
        %1010 = vmatprep.subr.bf16.mxu0 0
        %1011 = vmatpush1.bf16.msra.mxu0 0
        %1012 = vmatprep.subr.bf16.mxu0 0
        %1013 = vmatpush1.bf16.msra.mxu0 0
        %1014 = vmatprep.subr.bf16.mxu0 0
        %1015 = vmatpush1.bf16.msra.mxu0 0
        %1016 = vmatprep.subr.bf16.mxu0 0
        %1017 = vmatpush1.bf16.msra.mxu0 0
        %1018 = vmatprep.subr.bf16.mxu0 0
        %1019 = vmatpush1.bf16.msra.mxu0 0
        %1020 = vmatprep.subr.bf16.mxu0 0
        %1021 = vmatpush1.bf16.msra.mxu0 0
        %1022 = vmatprep.subr.bf16.mxu0 0
        %1023 = vmatpush1.bf16.msra.mxu0 0
        %1024 = vmatprep.subr.bf16.mxu0 0
        %1025 = vmatpush1.bf16.msra.mxu0 %v1005
        %1026 = vmatprep.subr.bf16.mxu0 0
        %1027 = vmatpush2.bf16.msra.mxu0 0
        %1028 = vmatprep.subr.bf16.mxu0 0
        %1029 = vmatpush2.bf16.msra.mxu0 0
        %1030 = vmatprep.subr.bf16.mxu0 0
        %1031 = vmatpush2.bf16.msra.mxu0 0
        %1032 = vmatprep.subr.bf16.mxu0 0
        %1033 = vmatpush2.bf16.msra.mxu0 0
        %1034 = vmatprep.subr.bf16.mxu0 0
        %1035 = vmatpush2.bf16.msra.mxu0 0
        %1036 = vmatprep.subr.bf16.mxu0 0
        %1037 = vmatpush2.bf16.msra.mxu0 0
        %1038 = vmatprep.subr.bf16.mxu0 0
        %1039 = vmatpush2.bf16.msra.mxu0 0
        %1040 = vmatprep.subr.bf16.mxu0 0
        %1041 = vmatpush2.bf16.msra.mxu0 0
        %1042 = vmatprep.mubr.bf16.mxu0 0
        %1043 = vmatmul.mubr.bf16.gmra.mxu0 %v1008
        %v1044 = vpop.f32.mrf.mxu0
        %v1045 = vadd.f32 0.0, %v1044
        %v1046 = vpop.f32.mrf.mxu0
        %v1047 = vpop.f32.mrf.mxu0
        %v1048 = vpop.f32.mrf.mxu0
        %1049 = vdwg.mxu0
        %v1050 = vld [vmem:[#allocation5 + $0x6] sm:$0x1]
        %v1051 = vlaneseq
        %v1052 = vshrl.u32 %v1051, 7
        %v1053 = vsub.s32 0, %v1052
        %v1054 = vrot.slane %v1050, %v1053
        %v1055 = vmul.f32 %v1045, %v1054
        %v1056 = vadd.f32 %v1001, %v1055
        %s1057 = scalar_lea.vmem %s3, 28
        %v1058 = vld [vmem:[%s1057] sm:$0xf]
        %1059 = vrot.lane.b32.xlu0 %v679, 111
        %v1060 = vpop.permute.xlu0 %1059
        %v1063 = vsel %vm682, %v1058, 0
        %1065 = vmatprep.subr.bf16.mxu0 0
        %1066 = vmatpush1.bf16.msra.mxu0 0
        %1067 = vmatprep.subr.bf16.mxu0 0
        %1068 = vmatpush1.bf16.msra.mxu0 0
        %1069 = vmatprep.subr.bf16.mxu0 0
        %1070 = vmatpush1.bf16.msra.mxu0 0
        %1071 = vmatprep.subr.bf16.mxu0 0
        %1072 = vmatpush1.bf16.msra.mxu0 0
        %1073 = vmatprep.subr.bf16.mxu0 0
        %1074 = vmatpush1.bf16.msra.mxu0 0
        %1075 = vmatprep.subr.bf16.mxu0 0
        %1076 = vmatpush1.bf16.msra.mxu0 0
        %1077 = vmatprep.subr.bf16.mxu0 0
        %1078 = vmatpush1.bf16.msra.mxu0 0
        %1079 = vmatprep.subr.bf16.mxu0 0
        %1080 = vmatpush1.bf16.msra.mxu0 %v1060
        %1081 = vmatprep.subr.bf16.mxu0 0
        %1082 = vmatpush2.bf16.msra.mxu0 0
        %1083 = vmatprep.subr.bf16.mxu0 0
        %1084 = vmatpush2.bf16.msra.mxu0 0
        %1085 = vmatprep.subr.bf16.mxu0 0
        %1086 = vmatpush2.bf16.msra.mxu0 0
        %1087 = vmatprep.subr.bf16.mxu0 0
        %1088 = vmatpush2.bf16.msra.mxu0 0
        %1089 = vmatprep.subr.bf16.mxu0 0
        %1090 = vmatpush2.bf16.msra.mxu0 0
        %1091 = vmatprep.subr.bf16.mxu0 0
        %1092 = vmatpush2.bf16.msra.mxu0 0
        %1093 = vmatprep.subr.bf16.mxu0 0
        %1094 = vmatpush2.bf16.msra.mxu0 0
        %1095 = vmatprep.subr.bf16.mxu0 0
        %1096 = vmatpush2.bf16.msra.mxu0 0
        %1097 = vmatprep.mubr.bf16.mxu0 0
        %1098 = vmatmul.mubr.bf16.gmra.mxu0 %v1063
        %v1099 = vpop.f32.mrf.mxu0
        %v1100 = vadd.f32 0.0, %v1099
        %v1101 = vpop.f32.mrf.mxu0
        %v1102 = vpop.f32.mrf.mxu0
        %v1103 = vpop.f32.mrf.mxu0
        %1104 = vdwg.mxu0
        %v1105 = vld [vmem:[#allocation5 + $0x7] sm:$0x1]
        %v1106 = vlaneseq
        %v1107 = vshrl.u32 %v1106, 7
        %v1108 = vsub.s32 0, %v1107
        %v1109 = vrot.slane %v1105, %v1108
        %v1110 = vmul.f32 %v1100, %v1109
        %v1111 = vadd.f32 %v1056, %v1110
        %s1112 = scalar_lea.vmem %s3, 32
        %v1113 = vld [vmem:[%s1112] sm:$0xf]
        %1114 = vrot.lane.b32.xlu0 %v679, 110
        %v1115 = vpop.permute.xlu0 %1114
        %v1118 = vsel %vm682, %v1113, 0
        %1120 = vmatprep.subr.bf16.mxu0 0
        %1121 = vmatpush1.bf16.msra.mxu0 0
        %1122 = vmatprep.subr.bf16.mxu0 0
        %1123 = vmatpush1.bf16.msra.mxu0 0
        %1124 = vmatprep.subr.bf16.mxu0 0
        %1125 = vmatpush1.bf16.msra.mxu0 0
        %1126 = vmatprep.subr.bf16.mxu0 0
        %1127 = vmatpush1.bf16.msra.mxu0 0
        %1128 = vmatprep.subr.bf16.mxu0 0
        %1129 = vmatpush1.bf16.msra.mxu0 0
        %1130 = vmatprep.subr.bf16.mxu0 0
        %1131 = vmatpush1.bf16.msra.mxu0 0
        %1132 = vmatprep.subr.bf16.mxu0 0
        %1133 = vmatpush1.bf16.msra.mxu0 0
        %1134 = vmatprep.subr.bf16.mxu0 0
        %1135 = vmatpush1.bf16.msra.mxu0 %v1115
        %1136 = vmatprep.subr.bf16.mxu0 0
        %1137 = vmatpush2.bf16.msra.mxu0 0
        %1138 = vmatprep.subr.bf16.mxu0 0
        %1139 = vmatpush2.bf16.msra.mxu0 0
        %1140 = vmatprep.subr.bf16.mxu0 0
        %1141 = vmatpush2.bf16.msra.mxu0 0
        %1142 = vmatprep.subr.bf16.mxu0 0
        %1143 = vmatpush2.bf16.msra.mxu0 0
        %1144 = vmatprep.subr.bf16.mxu0 0
        %1145 = vmatpush2.bf16.msra.mxu0 0
        %1146 = vmatprep.subr.bf16.mxu0 0
        %1147 = vmatpush2.bf16.msra.mxu0 0
        %1148 = vmatprep.subr.bf16.mxu0 0
        %1149 = vmatpush2.bf16.msra.mxu0 0
        %1150 = vmatprep.subr.bf16.mxu0 0
        %1151 = vmatpush2.bf16.msra.mxu0 0
        %1152 = vmatprep.mubr.bf16.mxu0 0
        %1153 = vmatmul.mubr.bf16.gmra.mxu0 %v1118
        %v1154 = vpop.f32.mrf.mxu0
        %v1155 = vadd.f32 0.0, %v1154
        %v1156 = vpop.f32.mrf.mxu0
        %v1157 = vpop.f32.mrf.mxu0
        %v1158 = vpop.f32.mrf.mxu0
        %1159 = vdwg.mxu0
        %v1160 = vld [vmem:[#allocation5 + $0x8] sm:$0x1]
        %v1161 = vlaneseq
        %v1162 = vshrl.u32 %v1161, 7
        %v1163 = vsub.s32 0, %v1162
        %v1164 = vrot.slane %v1160, %v1163
        %v1165 = vmul.f32 %v1155, %v1164
        %v1166 = vadd.f32 %v1111, %v1165
        %v1167 = vld [vmem:[%s4] sm:$0xff]
        %1169 = vset.pattern.permute.xlu0 0
        %1170 = vperm.xlu0 %1169, %v1167
        %v1171 = vpop.permute.xlu0 %1170
        %v1173 = vadd.f32 %v1166, %v1171
        %v1174 = vmax.f32 %v1173, 0.0
        %v1175 = vpack.c.bf16 %v1174, %v1174
        %v1176 = vld [vmem:[%s6] sm:$0xff]
        %v1177 = vld [vmem:[%s6 + $0x8] sm:$0xff]
        %v1178 = vld [vmem:[%s6 + $0x10] sm:$0xff]
        %v1179 = vld [vmem:[%s6 + $0x18] sm:$0xff]
        %v1180 = vld [vmem:[%s6 + $0x20] sm:$0xff]
        %v1181 = vld [vmem:[%s6 + $0x28] sm:$0xff]
        %v1182 = vld [vmem:[%s6 + $0x30] sm:$0xff]
        %v1183 = vld [vmem:[%s6 + $0x38] sm:$0xff]
        %v1192 = vunpack.c.l.b16 %v1176
        %v1193 = vunpack.c.h.b16 %v1176
        %v1194 = vunpack.c.l.b16 %v1177
        %v1195 = vunpack.c.h.b16 %v1177
        %v1196 = vunpack.c.l.b16 %v1178
        %v1197 = vunpack.c.h.b16 %v1178
        %v1198 = vunpack.c.l.b16 %v1179
        %v1199 = vunpack.c.h.b16 %v1179
        %v1200 = vunpack.c.l.b16 %v1180
        %v1201 = vunpack.c.h.b16 %v1180
        %v1202 = vunpack.c.l.b16 %v1181
        %v1203 = vunpack.c.h.b16 %v1181
        %v1204 = vunpack.c.l.b16 %v1182
        %v1205 = vunpack.c.h.b16 %v1182
        %v1206 = vunpack.c.l.b16 %v1183
        %v1207 = vunpack.c.h.b16 %v1183
        %v1208 = vpack.c.b16 %v1194, %v1192
        %v1209 = vpack.c.b16 %v1195, %v1193
        %v1210 = vpack.c.b16 %v1198, %v1196
        %v1211 = vpack.c.b16 %v1199, %v1197
        %v1212 = vpack.c.b16 %v1202, %v1200
        %v1213 = vpack.c.b16 %v1203, %v1201
        %v1214 = vpack.c.b16 %v1206, %v1204
        %v1215 = vpack.c.b16 %v1207, %v1205
        %vm1224 = vcmask 523264
        %v1226 = vsel %vm1224, %v1175, 0
        %1228 = vmatprep.subr.bf16.mxu0 0
        %1229 = vmatpush1.bf16.msra.mxu0 0
        %1230 = vmatprep.subr.bf16.mxu0 0
        %1231 = vmatpush1.bf16.msra.mxu0 0
        %1232 = vmatprep.subr.bf16.mxu0 0
        %1233 = vmatpush1.bf16.msra.mxu0 0
        %1234 = vmatprep.subr.bf16.mxu0 0
        %1235 = vmatpush1.bf16.msra.mxu0 0
        %1236 = vmatprep.subr.bf16.mxu0 %v1215
        %1237 = vmatpush1.bf16.msra.mxu0 %v1214
        %1238 = vmatprep.subr.bf16.mxu0 %v1213
        %1239 = vmatpush1.bf16.msra.mxu0 %v1212
        %1240 = vmatprep.subr.bf16.mxu0 %v1211
        %1241 = vmatpush1.bf16.msra.mxu0 %v1210
        %1242 = vmatprep.subr.bf16.mxu0 %v1209
        %1243 = vmatpush1.bf16.msra.mxu0 %v1208
        %1244 = vmatprep.subr.bf16.mxu0 0
        %1245 = vmatpush2.bf16.msra.mxu0 0
        %1246 = vmatprep.subr.bf16.mxu0 0
        %1247 = vmatpush2.bf16.msra.mxu0 0
        %1248 = vmatprep.subr.bf16.mxu0 0
        %1249 = vmatpush2.bf16.msra.mxu0 0
        %1250 = vmatprep.subr.bf16.mxu0 0
        %1251 = vmatpush2.bf16.msra.mxu0 0
        %1252 = vmatprep.subr.bf16.mxu0 0
        %1253 = vmatpush2.bf16.msra.mxu0 0
        %1254 = vmatprep.subr.bf16.mxu0 0
        %1255 = vmatpush2.bf16.msra.mxu0 0
        %1256 = vmatprep.subr.bf16.mxu0 0
        %1257 = vmatpush2.bf16.msra.mxu0 0
        %1258 = vmatprep.subr.bf16.mxu0 0
        %1259 = vmatpush2.bf16.msra.mxu0 0
        %1260 = vmatprep.mubr.bf16.mxu0 0
        %1261 = vmatmul.mubr.bf16.gmra.mxu0 %v1226
        %v1262 = vpop.f32.mrf.mxu0
        %v1263 = vadd.f32 %v663, %v1262
        %v1264 = vpop.f32.mrf.mxu0
        %v1265 = vadd.f32 %v664, %v1264
        %v1266 = vpop.f32.mrf.mxu0
        %v1267 = vpop.f32.mrf.mxu0
        %1268 = vdwg.mxu0
        %v1269 = vpack.c.bf16 %v1263, %v1263
        %v1270 = vpack.c.bf16 %v1265, %v1265
        %1273 = vrot.lane.b32.xlu0 %v1269, 17
        %v1274 = vpop.permute.xlu0 %1273
        %1275 = vrot.lane.b32.xlu0 %v1270, 17
        %v1276 = vpop.permute.xlu0 %1275
        %vm1277 = vcmask 138240
        %v1278 = vsel %vm1277, %v1274, %v1276
        %vm1279 = vcmask 138240
        %v1281 = vsel %vm1279, 0, %v1274
        %v1283 = vsel %vm1279, %v1276, 0
        %v1284 = vld [vmem:[%s7] sm:$0xf]
        %vm1285 = vcmask 64512
        %v1287 = vsel %vm1285, %v1284, 0
        %vm1289 = vcmask 1043456
        %v1290 = vsel %vm1289, %v1281, 0
        %v1293 = vsel %vm1289, %v1278, 0
        %1295 = vmatprep.subr.bf16.mxu0 0
        %1296 = vmatpush1.bf16.msra.mxu0 0
        %1297 = vmatprep.subr.bf16.mxu0 0
        %1298 = vmatpush1.bf16.msra.mxu0 0
        %1299 = vmatprep.subr.bf16.mxu0 0
        %1300 = vmatpush1.bf16.msra.mxu0 0
        %1301 = vmatprep.subr.bf16.mxu0 0
        %1302 = vmatpush1.bf16.msra.mxu0 0
        %1303 = vmatprep.subr.bf16.mxu0 0
        %1304 = vmatpush1.bf16.msra.mxu0 0
        %1305 = vmatprep.subr.bf16.mxu0 0
        %1306 = vmatpush1.bf16.msra.mxu0 0
        %1307 = vmatprep.subr.bf16.mxu0 0
        %1308 = vmatpush1.bf16.msra.mxu0 0
        %1309 = vmatprep.subr.bf16.mxu0 %v1293
        %1310 = vmatpush1.bf16.msra.mxu0 %v1290
        %1311 = vmatprep.subr.bf16.mxu0 0
        %1312 = vmatpush2.bf16.msra.mxu0 0
        %1313 = vmatprep.subr.bf16.mxu0 0
        %1314 = vmatpush2.bf16.msra.mxu0 0
        %1315 = vmatprep.subr.bf16.mxu0 0
        %1316 = vmatpush2.bf16.msra.mxu0 0
        %1317 = vmatprep.subr.bf16.mxu0 0
        %1318 = vmatpush2.bf16.msra.mxu0 0
        %1319 = vmatprep.subr.bf16.mxu0 0
        %1320 = vmatpush2.bf16.msra.mxu0 0
        %1321 = vmatprep.subr.bf16.mxu0 0
        %1322 = vmatpush2.bf16.msra.mxu0 0
        %1323 = vmatprep.subr.bf16.mxu0 0
        %1324 = vmatpush2.bf16.msra.mxu0 0
        %1325 = vmatprep.subr.bf16.mxu0 0
        %1326 = vmatpush2.bf16.msra.mxu0 0
        %1327 = vmatprep.mubr.bf16.mxu0 0
        %1328 = vmatmul.mubr.bf16.gmra.mxu0 %v1287
        %v1329 = vpop.f32.mrf.mxu0
        %v1330 = vadd.f32 0.0, %v1329
        %v1331 = vpop.f32.mrf.mxu0
        %v1332 = vadd.f32 0.0, %v1331
        %v1333 = vpop.f32.mrf.mxu0
        %v1334 = vpop.f32.mrf.mxu0
        %1335 = vdwg.mxu0
        %v1336 = vld [vmem:[%s1] ss:$8 sm:$0x3]
        %v1338 = vlaneseq
        %v1339 = vshrl.u32 %v1338, 7
        %v1340 = vsub.s32 0, %v1339
        %v1341 = vrot.slane %v1336, %v1340
        %v1342 = vlaneseq
        %v1343 = vshrl.u32 %v1342, 7
        %v1344 = vsub.s32 1, %v1343
        %v1345 = vrot.slane %v1336, %v1344
        %v1348 = vmul.f32 %v1330, %v1341
        %v1349 = vmul.f32 %v1332, %v1345
        %s1350 = scalar_lea.vmem %s7, 4
        %v1351 = vld [vmem:[%s1350] sm:$0xf]
        %1354 = vrot.lane.b32.xlu0 %v1281, 127
        %v1355 = vpop.permute.xlu0 %1354
        %1356 = vrot.lane.b32.xlu0 %v1278, 127
        %v1357 = vpop.permute.xlu0 %1356
        %1358 = vrot.lane.b32.xlu0 %v1283, 127
        %v1359 = vpop.permute.xlu0 %1358
        %vm1360 = vcmask 1039360
        %v1361 = vsel %vm1360, %v1355, %v1357
        %v1362 = vsel %vm1360, %v1357, %v1359
        %v1364 = vsel %vm1285, %v1351, 0
        %v1367 = vsel %vm1289, %v1361, 0
        %v1370 = vsel %vm1289, %v1362, 0
        %1372 = vmatprep.subr.bf16.mxu0 0
        %1373 = vmatpush1.bf16.msra.mxu0 0
        %1374 = vmatprep.subr.bf16.mxu0 0
        %1375 = vmatpush1.bf16.msra.mxu0 0
        %1376 = vmatprep.subr.bf16.mxu0 0
        %1377 = vmatpush1.bf16.msra.mxu0 0
        %1378 = vmatprep.subr.bf16.mxu0 0
        %1379 = vmatpush1.bf16.msra.mxu0 0
        %1380 = vmatprep.subr.bf16.mxu0 0
        %1381 = vmatpush1.bf16.msra.mxu0 0
        %1382 = vmatprep.subr.bf16.mxu0 0
        %1383 = vmatpush1.bf16.msra.mxu0 0
        %1384 = vmatprep.subr.bf16.mxu0 0
        %1385 = vmatpush1.bf16.msra.mxu0 0
        %1386 = vmatprep.subr.bf16.mxu0 %v1370
        %1387 = vmatpush1.bf16.msra.mxu0 %v1367
        %1388 = vmatprep.subr.bf16.mxu0 0
        %1389 = vmatpush2.bf16.msra.mxu0 0
        %1390 = vmatprep.subr.bf16.mxu0 0
        %1391 = vmatpush2.bf16.msra.mxu0 0
        %1392 = vmatprep.subr.bf16.mxu0 0
        %1393 = vmatpush2.bf16.msra.mxu0 0
        %1394 = vmatprep.subr.bf16.mxu0 0
        %1395 = vmatpush2.bf16.msra.mxu0 0
        %1396 = vmatprep.subr.bf16.mxu0 0
        %1397 = vmatpush2.bf16.msra.mxu0 0
        %1398 = vmatprep.subr.bf16.mxu0 0
        %1399 = vmatpush2.bf16.msra.mxu0 0
        %1400 = vmatprep.subr.bf16.mxu0 0
        %1401 = vmatpush2.bf16.msra.mxu0 0
        %1402 = vmatprep.subr.bf16.mxu0 0
        %1403 = vmatpush2.bf16.msra.mxu0 0
        %1404 = vmatprep.mubr.bf16.mxu0 0
        %1405 = vmatmul.mubr.bf16.gmra.mxu0 %v1364
        %v1406 = vpop.f32.mrf.mxu0
        %v1407 = vadd.f32 0.0, %v1406
        %v1408 = vpop.f32.mrf.mxu0
        %v1409 = vadd.f32 0.0, %v1408
        %v1410 = vpop.f32.mrf.mxu0
        %v1411 = vpop.f32.mrf.mxu0
        %1412 = vdwg.mxu0
        %s1413 = scalar_lea.vmem %s1, 1
        %v1414 = vld [vmem:[%s1413] ss:$8 sm:$0x3]
        %v1416 = vlaneseq
        %v1417 = vshrl.u32 %v1416, 7
        %v1418 = vsub.s32 0, %v1417
        %v1419 = vrot.slane %v1414, %v1418
        %v1420 = vlaneseq
        %v1421 = vshrl.u32 %v1420, 7
        %v1422 = vsub.s32 1, %v1421
        %v1423 = vrot.slane %v1414, %v1422
        %v1426 = vmul.f32 %v1407, %v1419
        %v1427 = vmul.f32 %v1409, %v1423
        %v1428 = vadd.f32 %v1348, %v1426
        %v1429 = vadd.f32 %v1349, %v1427
        %s1430 = scalar_lea.vmem %s7, 8
        %v1431 = vld [vmem:[%s1430] sm:$0xf]
        %1432 = vrot.lane.b32.xlu0 %v1281, 126
        %v1433 = vpop.permute.xlu0 %1432
        %1434 = vrot.lane.b32.xlu0 %v1278, 126
        %v1435 = vpop.permute.xlu0 %1434
        %1436 = vrot.lane.b32.xlu0 %v1283, 126
        %v1437 = vpop.permute.xlu0 %1436
        %vm1438 = vcmask 1031168
        %v1439 = vsel %vm1438, %v1433, %v1435
        %v1440 = vsel %vm1438, %v1435, %v1437
        %v1442 = vsel %vm1285, %v1431, 0
        %v1445 = vsel %vm1289, %v1439, 0
        %v1448 = vsel %vm1289, %v1440, 0
        %1450 = vmatprep.subr.bf16.mxu0 0
        %1451 = vmatpush1.bf16.msra.mxu0 0
        %1452 = vmatprep.subr.bf16.mxu0 0
        %1453 = vmatpush1.bf16.msra.mxu0 0
        %1454 = vmatprep.subr.bf16.mxu0 0
        %1455 = vmatpush1.bf16.msra.mxu0 0
        %1456 = vmatprep.subr.bf16.mxu0 0
        %1457 = vmatpush1.bf16.msra.mxu0 0
        %1458 = vmatprep.subr.bf16.mxu0 0
        %1459 = vmatpush1.bf16.msra.mxu0 0
        %1460 = vmatprep.subr.bf16.mxu0 0
        %1461 = vmatpush1.bf16.msra.mxu0 0
        %1462 = vmatprep.subr.bf16.mxu0 0
        %1463 = vmatpush1.bf16.msra.mxu0 0
        %1464 = vmatprep.subr.bf16.mxu0 %v1448
        %1465 = vmatpush1.bf16.msra.mxu0 %v1445
        %1466 = vmatprep.subr.bf16.mxu0 0
        %1467 = vmatpush2.bf16.msra.mxu0 0
        %1468 = vmatprep.subr.bf16.mxu0 0
        %1469 = vmatpush2.bf16.msra.mxu0 0
        %1470 = vmatprep.subr.bf16.mxu0 0
        %1471 = vmatpush2.bf16.msra.mxu0 0
        %1472 = vmatprep.subr.bf16.mxu0 0
        %1473 = vmatpush2.bf16.msra.mxu0 0
        %1474 = vmatprep.subr.bf16.mxu0 0
        %1475 = vmatpush2.bf16.msra.mxu0 0
        %1476 = vmatprep.subr.bf16.mxu0 0
        %1477 = vmatpush2.bf16.msra.mxu0 0
        %1478 = vmatprep.subr.bf16.mxu0 0
        %1479 = vmatpush2.bf16.msra.mxu0 0
        %1480 = vmatprep.subr.bf16.mxu0 0
        %1481 = vmatpush2.bf16.msra.mxu0 0
        %1482 = vmatprep.mubr.bf16.mxu0 0
        %1483 = vmatmul.mubr.bf16.gmra.mxu0 %v1442
        %v1484 = vpop.f32.mrf.mxu0
        %v1485 = vadd.f32 0.0, %v1484
        %v1486 = vpop.f32.mrf.mxu0
        %v1487 = vadd.f32 0.0, %v1486
        %v1488 = vpop.f32.mrf.mxu0
        %v1489 = vpop.f32.mrf.mxu0
        %1490 = vdwg.mxu0
        %s1491 = scalar_lea.vmem %s1, 2
        %v1492 = vld [vmem:[%s1491] ss:$8 sm:$0x3]
        %v1494 = vlaneseq
        %v1495 = vshrl.u32 %v1494, 7
        %v1496 = vsub.s32 0, %v1495
        %v1497 = vrot.slane %v1492, %v1496
        %v1498 = vlaneseq
        %v1499 = vshrl.u32 %v1498, 7
        %v1500 = vsub.s32 1, %v1499
        %v1501 = vrot.slane %v1492, %v1500
        %v1504 = vmul.f32 %v1485, %v1497
        %v1505 = vmul.f32 %v1487, %v1501
        %v1506 = vadd.f32 %v1428, %v1504
        %v1507 = vadd.f32 %v1429, %v1505
        %s1508 = scalar_lea.vmem %s7, 12
        %v1509 = vld [vmem:[%s1508] sm:$0xf]
        %1510 = vrot.lane.b32.xlu0 %v1281, 112
        %v1511 = vpop.permute.xlu0 %1510
        %1512 = vrot.lane.b32.xlu0 %v1278, 112
        %v1513 = vpop.permute.xlu0 %1512
        %1514 = vrot.lane.b32.xlu0 %v1283, 112
        %v1515 = vpop.permute.xlu0 %1514
        %vm1516 = vcmask 916480
        %v1517 = vsel %vm1516, %v1511, %v1513
        %v1518 = vsel %vm1516, %v1513, %v1515
        %v1520 = vsel %vm1285, %v1509, 0
        %v1523 = vsel %vm1289, %v1517, 0
        %v1526 = vsel %vm1289, %v1518, 0
        %1528 = vmatprep.subr.bf16.mxu0 0
        %1529 = vmatpush1.bf16.msra.mxu0 0
        %1530 = vmatprep.subr.bf16.mxu0 0
        %1531 = vmatpush1.bf16.msra.mxu0 0
        %1532 = vmatprep.subr.bf16.mxu0 0
        %1533 = vmatpush1.bf16.msra.mxu0 0
        %1534 = vmatprep.subr.bf16.mxu0 0
        %1535 = vmatpush1.bf16.msra.mxu0 0
        %1536 = vmatprep.subr.bf16.mxu0 0
        %1537 = vmatpush1.bf16.msra.mxu0 0
        %1538 = vmatprep.subr.bf16.mxu0 0
        %1539 = vmatpush1.bf16.msra.mxu0 0
        %1540 = vmatprep.subr.bf16.mxu0 0
        %1541 = vmatpush1.bf16.msra.mxu0 0
        %1542 = vmatprep.subr.bf16.mxu0 %v1526
        %1543 = vmatpush1.bf16.msra.mxu0 %v1523
        %1544 = vmatprep.subr.bf16.mxu0 0
        %1545 = vmatpush2.bf16.msra.mxu0 0
        %1546 = vmatprep.subr.bf16.mxu0 0
        %1547 = vmatpush2.bf16.msra.mxu0 0
        %1548 = vmatprep.subr.bf16.mxu0 0
        %1549 = vmatpush2.bf16.msra.mxu0 0
        %1550 = vmatprep.subr.bf16.mxu0 0
        %1551 = vmatpush2.bf16.msra.mxu0 0
        %1552 = vmatprep.subr.bf16.mxu0 0
        %1553 = vmatpush2.bf16.msra.mxu0 0
        %1554 = vmatprep.subr.bf16.mxu0 0
        %1555 = vmatpush2.bf16.msra.mxu0 0
        %1556 = vmatprep.subr.bf16.mxu0 0
        %1557 = vmatpush2.bf16.msra.mxu0 0
        %1558 = vmatprep.subr.bf16.mxu0 0
        %1559 = vmatpush2.bf16.msra.mxu0 0
        %1560 = vmatprep.mubr.bf16.mxu0 0
        %1561 = vmatmul.mubr.bf16.gmra.mxu0 %v1520
        %v1562 = vpop.f32.mrf.mxu0
        %v1563 = vadd.f32 0.0, %v1562
        %v1564 = vpop.f32.mrf.mxu0
        %v1565 = vadd.f32 0.0, %v1564
        %v1566 = vpop.f32.mrf.mxu0
        %v1567 = vpop.f32.mrf.mxu0
        %1568 = vdwg.mxu0
        %s1569 = scalar_lea.vmem %s1, 3
        %v1570 = vld [vmem:[%s1569] ss:$8 sm:$0x3]
        %v1572 = vlaneseq
        %v1573 = vshrl.u32 %v1572, 7
        %v1574 = vsub.s32 0, %v1573
        %v1575 = vrot.slane %v1570, %v1574
        %v1576 = vlaneseq
        %v1577 = vshrl.u32 %v1576, 7
        %v1578 = vsub.s32 1, %v1577
        %v1579 = vrot.slane %v1570, %v1578
        %v1582 = vmul.f32 %v1563, %v1575
        %v1583 = vmul.f32 %v1565, %v1579
        %v1584 = vadd.f32 %v1506, %v1582
        %v1585 = vadd.f32 %v1507, %v1583
        %s1586 = scalar_lea.vmem %s7, 16
        %v1587 = vld [vmem:[%s1586] sm:$0xf]
        %1588 = vrot.lane.b32.xlu0 %v1281, 111
        %v1589 = vpop.permute.xlu0 %1588
        %1590 = vrot.lane.b32.xlu0 %v1278, 111
        %v1591 = vpop.permute.xlu0 %1590
        %1592 = vrot.lane.b32.xlu0 %v1283, 111
        %v1593 = vpop.permute.xlu0 %1592
        %vm1594 = vcmask 908288
        %v1595 = vsel %vm1594, %v1589, %v1591
        %v1596 = vsel %vm1594, %v1591, %v1593
        %v1598 = vsel %vm1285, %v1587, 0
        %v1601 = vsel %vm1289, %v1595, 0
        %v1604 = vsel %vm1289, %v1596, 0
        %1606 = vmatprep.subr.bf16.mxu0 0
        %1607 = vmatpush1.bf16.msra.mxu0 0
        %1608 = vmatprep.subr.bf16.mxu0 0
        %1609 = vmatpush1.bf16.msra.mxu0 0
        %1610 = vmatprep.subr.bf16.mxu0 0
        %1611 = vmatpush1.bf16.msra.mxu0 0
        %1612 = vmatprep.subr.bf16.mxu0 0
        %1613 = vmatpush1.bf16.msra.mxu0 0
        %1614 = vmatprep.subr.bf16.mxu0 0
        %1615 = vmatpush1.bf16.msra.mxu0 0
        %1616 = vmatprep.subr.bf16.mxu0 0
        %1617 = vmatpush1.bf16.msra.mxu0 0
        %1618 = vmatprep.subr.bf16.mxu0 0
        %1619 = vmatpush1.bf16.msra.mxu0 0
        %1620 = vmatprep.subr.bf16.mxu0 %v1604
        %1621 = vmatpush1.bf16.msra.mxu0 %v1601
        %1622 = vmatprep.subr.bf16.mxu0 0
        %1623 = vmatpush2.bf16.msra.mxu0 0
        %1624 = vmatprep.subr.bf16.mxu0 0
        %1625 = vmatpush2.bf16.msra.mxu0 0
        %1626 = vmatprep.subr.bf16.mxu0 0
        %1627 = vmatpush2.bf16.msra.mxu0 0
        %1628 = vmatprep.subr.bf16.mxu0 0
        %1629 = vmatpush2.bf16.msra.mxu0 0
        %1630 = vmatprep.subr.bf16.mxu0 0
        %1631 = vmatpush2.bf16.msra.mxu0 0
        %1632 = vmatprep.subr.bf16.mxu0 0
        %1633 = vmatpush2.bf16.msra.mxu0 0
        %1634 = vmatprep.subr.bf16.mxu0 0
        %1635 = vmatpush2.bf16.msra.mxu0 0
        %1636 = vmatprep.subr.bf16.mxu0 0
        %1637 = vmatpush2.bf16.msra.mxu0 0
        %1638 = vmatprep.mubr.bf16.mxu0 0
        %1639 = vmatmul.mubr.bf16.gmra.mxu0 %v1598
        %v1640 = vpop.f32.mrf.mxu0
        %v1641 = vadd.f32 0.0, %v1640
        %v1642 = vpop.f32.mrf.mxu0
        %v1643 = vadd.f32 0.0, %v1642
        %v1644 = vpop.f32.mrf.mxu0
        %v1645 = vpop.f32.mrf.mxu0
        %1646 = vdwg.mxu0
        %v1647 = vadd.f32 %v1584, %v1641
        %v1648 = vadd.f32 %v1585, %v1643
        %s1649 = scalar_lea.vmem %s7, 20
        %v1650 = vld [vmem:[%s1649] sm:$0xf]
        %1651 = vrot.lane.b32.xlu0 %v1281, 110
        %v1652 = vpop.permute.xlu0 %1651
        %1653 = vrot.lane.b32.xlu0 %v1278, 110
        %v1654 = vpop.permute.xlu0 %1653
        %1655 = vrot.lane.b32.xlu0 %v1283, 110
        %v1656 = vpop.permute.xlu0 %1655
        %vm1657 = vcmask 900096
        %v1658 = vsel %vm1657, %v1652, %v1654
        %v1659 = vsel %vm1657, %v1654, %v1656
        %v1661 = vsel %vm1285, %v1650, 0
        %v1664 = vsel %vm1289, %v1658, 0
        %v1667 = vsel %vm1289, %v1659, 0
        %1669 = vmatprep.subr.bf16.mxu0 0
        %1670 = vmatpush1.bf16.msra.mxu0 0
        %1671 = vmatprep.subr.bf16.mxu0 0
        %1672 = vmatpush1.bf16.msra.mxu0 0
        %1673 = vmatprep.subr.bf16.mxu0 0
        %1674 = vmatpush1.bf16.msra.mxu0 0
        %1675 = vmatprep.subr.bf16.mxu0 0
        %1676 = vmatpush1.bf16.msra.mxu0 0
        %1677 = vmatprep.subr.bf16.mxu0 0
        %1678 = vmatpush1.bf16.msra.mxu0 0
        %1679 = vmatprep.subr.bf16.mxu0 0
        %1680 = vmatpush1.bf16.msra.mxu0 0
        %1681 = vmatprep.subr.bf16.mxu0 0
        %1682 = vmatpush1.bf16.msra.mxu0 0
        %1683 = vmatprep.subr.bf16.mxu0 %v1667
        %1684 = vmatpush1.bf16.msra.mxu0 %v1664
        %1685 = vmatprep.subr.bf16.mxu0 0
        %1686 = vmatpush2.bf16.msra.mxu0 0
        %1687 = vmatprep.subr.bf16.mxu0 0
        %1688 = vmatpush2.bf16.msra.mxu0 0
        %1689 = vmatprep.subr.bf16.mxu0 0
        %1690 = vmatpush2.bf16.msra.mxu0 0
        %1691 = vmatprep.subr.bf16.mxu0 0
        %1692 = vmatpush2.bf16.msra.mxu0 0
        %1693 = vmatprep.subr.bf16.mxu0 0
        %1694 = vmatpush2.bf16.msra.mxu0 0
        %1695 = vmatprep.subr.bf16.mxu0 0
        %1696 = vmatpush2.bf16.msra.mxu0 0
        %1697 = vmatprep.subr.bf16.mxu0 0
        %1698 = vmatpush2.bf16.msra.mxu0 0
        %1699 = vmatprep.subr.bf16.mxu0 0
        %1700 = vmatpush2.bf16.msra.mxu0 0
        %1701 = vmatprep.mubr.bf16.mxu0 0
        %1702 = vmatmul.mubr.bf16.gmra.mxu0 %v1661
        %v1703 = vpop.f32.mrf.mxu0
        %v1704 = vadd.f32 0.0, %v1703
        %v1705 = vpop.f32.mrf.mxu0
        %v1706 = vadd.f32 0.0, %v1705
        %v1707 = vpop.f32.mrf.mxu0
        %v1708 = vpop.f32.mrf.mxu0
        %1709 = vdwg.mxu0
        %s1710 = scalar_lea.vmem %s1, 5
        %v1711 = vld [vmem:[%s1710] ss:$8 sm:$0x3]
        %v1713 = vlaneseq
        %v1714 = vshrl.u32 %v1713, 7
        %v1715 = vsub.s32 0, %v1714
        %v1716 = vrot.slane %v1711, %v1715
        %v1717 = vlaneseq
        %v1718 = vshrl.u32 %v1717, 7
        %v1719 = vsub.s32 1, %v1718
        %v1720 = vrot.slane %v1711, %v1719
        %v1723 = vmul.f32 %v1704, %v1716
        %v1724 = vmul.f32 %v1706, %v1720
        %v1725 = vadd.f32 %v1647, %v1723
        %v1726 = vadd.f32 %v1648, %v1724
        %s1727 = scalar_lea.vmem %s7, 24
        %v1728 = vld [vmem:[%s1727] sm:$0xf]
        %1729 = vrot.lane.b32.xlu0 %v1281, 96
        %v1730 = vpop.permute.xlu0 %1729
        %1731 = vrot.lane.b32.xlu0 %v1278, 96
        %v1732 = vpop.permute.xlu0 %1731
        %1733 = vrot.lane.b32.xlu0 %v1283, 96
        %v1734 = vpop.permute.xlu0 %1733
        %vm1735 = vcmask 785408
        %v1736 = vsel %vm1735, %v1730, %v1732
        %v1737 = vsel %vm1735, %v1732, %v1734
        %v1739 = vsel %vm1285, %v1728, 0
        %v1742 = vsel %vm1289, %v1736, 0
        %v1745 = vsel %vm1289, %v1737, 0
        %1747 = vmatprep.subr.bf16.mxu0 0
        %1748 = vmatpush1.bf16.msra.mxu0 0
        %1749 = vmatprep.subr.bf16.mxu0 0
        %1750 = vmatpush1.bf16.msra.mxu0 0
        %1751 = vmatprep.subr.bf16.mxu0 0
        %1752 = vmatpush1.bf16.msra.mxu0 0
        %1753 = vmatprep.subr.bf16.mxu0 0
        %1754 = vmatpush1.bf16.msra.mxu0 0
        %1755 = vmatprep.subr.bf16.mxu0 0
        %1756 = vmatpush1.bf16.msra.mxu0 0
        %1757 = vmatprep.subr.bf16.mxu0 0
        %1758 = vmatpush1.bf16.msra.mxu0 0
        %1759 = vmatprep.subr.bf16.mxu0 0
        %1760 = vmatpush1.bf16.msra.mxu0 0
        %1761 = vmatprep.subr.bf16.mxu0 %v1745
        %1762 = vmatpush1.bf16.msra.mxu0 %v1742
        %1763 = vmatprep.subr.bf16.mxu0 0
        %1764 = vmatpush2.bf16.msra.mxu0 0
        %1765 = vmatprep.subr.bf16.mxu0 0
        %1766 = vmatpush2.bf16.msra.mxu0 0
        %1767 = vmatprep.subr.bf16.mxu0 0
        %1768 = vmatpush2.bf16.msra.mxu0 0
        %1769 = vmatprep.subr.bf16.mxu0 0
        %1770 = vmatpush2.bf16.msra.mxu0 0
        %1771 = vmatprep.subr.bf16.mxu0 0
        %1772 = vmatpush2.bf16.msra.mxu0 0
        %1773 = vmatprep.subr.bf16.mxu0 0
        %1774 = vmatpush2.bf16.msra.mxu0 0
        %1775 = vmatprep.subr.bf16.mxu0 0
        %1776 = vmatpush2.bf16.msra.mxu0 0
        %1777 = vmatprep.subr.bf16.mxu0 0
        %1778 = vmatpush2.bf16.msra.mxu0 0
        %1779 = vmatprep.mubr.bf16.mxu0 0
        %1780 = vmatmul.mubr.bf16.gmra.mxu0 %v1739
        %v1781 = vpop.f32.mrf.mxu0
        %v1782 = vadd.f32 0.0, %v1781
        %v1783 = vpop.f32.mrf.mxu0
        %v1784 = vadd.f32 0.0, %v1783
        %v1785 = vpop.f32.mrf.mxu0
        %v1786 = vpop.f32.mrf.mxu0
        %1787 = vdwg.mxu0
        %s1788 = scalar_lea.vmem %s1, 6
        %v1789 = vld [vmem:[%s1788] ss:$8 sm:$0x3]
        %v1791 = vlaneseq
        %v1792 = vshrl.u32 %v1791, 7
        %v1793 = vsub.s32 0, %v1792
        %v1794 = vrot.slane %v1789, %v1793
        %v1795 = vlaneseq
        %v1796 = vshrl.u32 %v1795, 7
        %v1797 = vsub.s32 1, %v1796
        %v1798 = vrot.slane %v1789, %v1797
        %v1801 = vmul.f32 %v1782, %v1794
        %v1802 = vmul.f32 %v1784, %v1798
        %v1803 = vadd.f32 %v1725, %v1801
        %v1804 = vadd.f32 %v1726, %v1802
        %s1805 = scalar_lea.vmem %s7, 28
        %v1806 = vld [vmem:[%s1805] sm:$0xf]
        %1807 = vrot.lane.b32.xlu0 %v1281, 95
        %v1808 = vpop.permute.xlu0 %1807
        %1809 = vrot.lane.b32.xlu0 %v1278, 95
        %v1810 = vpop.permute.xlu0 %1809
        %1811 = vrot.lane.b32.xlu0 %v1283, 95
        %v1812 = vpop.permute.xlu0 %1811
        %vm1813 = vcmask 777216
        %v1814 = vsel %vm1813, %v1808, %v1810
        %v1815 = vsel %vm1813, %v1810, %v1812
        %v1817 = vsel %vm1285, %v1806, 0
        %v1820 = vsel %vm1289, %v1814, 0
        %v1823 = vsel %vm1289, %v1815, 0
        %1825 = vmatprep.subr.bf16.mxu0 0
        %1826 = vmatpush1.bf16.msra.mxu0 0
        %1827 = vmatprep.subr.bf16.mxu0 0
        %1828 = vmatpush1.bf16.msra.mxu0 0
        %1829 = vmatprep.subr.bf16.mxu0 0
        %1830 = vmatpush1.bf16.msra.mxu0 0
        %1831 = vmatprep.subr.bf16.mxu0 0
        %1832 = vmatpush1.bf16.msra.mxu0 0
        %1833 = vmatprep.subr.bf16.mxu0 0
        %1834 = vmatpush1.bf16.msra.mxu0 0
        %1835 = vmatprep.subr.bf16.mxu0 0
        %1836 = vmatpush1.bf16.msra.mxu0 0
        %1837 = vmatprep.subr.bf16.mxu0 0
        %1838 = vmatpush1.bf16.msra.mxu0 0
        %1839 = vmatprep.subr.bf16.mxu0 %v1823
        %1840 = vmatpush1.bf16.msra.mxu0 %v1820
        %1841 = vmatprep.subr.bf16.mxu0 0
        %1842 = vmatpush2.bf16.msra.mxu0 0
        %1843 = vmatprep.subr.bf16.mxu0 0
        %1844 = vmatpush2.bf16.msra.mxu0 0
        %1845 = vmatprep.subr.bf16.mxu0 0
        %1846 = vmatpush2.bf16.msra.mxu0 0
        %1847 = vmatprep.subr.bf16.mxu0 0
        %1848 = vmatpush2.bf16.msra.mxu0 0
        %1849 = vmatprep.subr.bf16.mxu0 0
        %1850 = vmatpush2.bf16.msra.mxu0 0
        %1851 = vmatprep.subr.bf16.mxu0 0
        %1852 = vmatpush2.bf16.msra.mxu0 0
        %1853 = vmatprep.subr.bf16.mxu0 0
        %1854 = vmatpush2.bf16.msra.mxu0 0
        %1855 = vmatprep.subr.bf16.mxu0 0
        %1856 = vmatpush2.bf16.msra.mxu0 0
        %1857 = vmatprep.mubr.bf16.mxu0 0
        %1858 = vmatmul.mubr.bf16.gmra.mxu0 %v1817
        %v1859 = vpop.f32.mrf.mxu0
        %v1860 = vadd.f32 0.0, %v1859
        %v1861 = vpop.f32.mrf.mxu0
        %v1862 = vadd.f32 0.0, %v1861
        %v1863 = vpop.f32.mrf.mxu0
        %v1864 = vpop.f32.mrf.mxu0
        %1865 = vdwg.mxu0
        %s1866 = scalar_lea.vmem %s1, 7
        %v1867 = vld [vmem:[%s1866] ss:$8 sm:$0x3]
        %v1869 = vlaneseq
        %v1870 = vshrl.u32 %v1869, 7
        %v1871 = vsub.s32 0, %v1870
        %v1872 = vrot.slane %v1867, %v1871
        %v1873 = vlaneseq
        %v1874 = vshrl.u32 %v1873, 7
        %v1875 = vsub.s32 1, %v1874
        %v1876 = vrot.slane %v1867, %v1875
        %v1879 = vmul.f32 %v1860, %v1872
        %v1880 = vmul.f32 %v1862, %v1876
        %v1881 = vadd.f32 %v1803, %v1879
        %v1882 = vadd.f32 %v1804, %v1880
        %s1883 = scalar_lea.vmem %s7, 32
        %v1884 = vld [vmem:[%s1883] sm:$0xf]
        %1885 = vrot.lane.b32.xlu0 %v1281, 94
        %v1886 = vpop.permute.xlu0 %1885
        %1887 = vrot.lane.b32.xlu0 %v1278, 94
        %v1888 = vpop.permute.xlu0 %1887
        %1889 = vrot.lane.b32.xlu0 %v1283, 94
        %v1890 = vpop.permute.xlu0 %1889
        %vm1891 = vcmask 769024
        %v1892 = vsel %vm1891, %v1886, %v1888
        %v1893 = vsel %vm1891, %v1888, %v1890
        %v1895 = vsel %vm1285, %v1884, 0
        %v1898 = vsel %vm1289, %v1892, 0
        %v1901 = vsel %vm1289, %v1893, 0
        %1903 = vmatprep.subr.bf16.mxu0 0
        %1904 = vmatpush1.bf16.msra.mxu0 0
        %1905 = vmatprep.subr.bf16.mxu0 0
        %1906 = vmatpush1.bf16.msra.mxu0 0
        %1907 = vmatprep.subr.bf16.mxu0 0
        %1908 = vmatpush1.bf16.msra.mxu0 0
        %1909 = vmatprep.subr.bf16.mxu0 0
        %1910 = vmatpush1.bf16.msra.mxu0 0
        %1911 = vmatprep.subr.bf16.mxu0 0
        %1912 = vmatpush1.bf16.msra.mxu0 0
        %1913 = vmatprep.subr.bf16.mxu0 0
        %1914 = vmatpush1.bf16.msra.mxu0 0
        %1915 = vmatprep.subr.bf16.mxu0 0
        %1916 = vmatpush1.bf16.msra.mxu0 0
        %1917 = vmatprep.subr.bf16.mxu0 %v1901
        %1918 = vmatpush1.bf16.msra.mxu0 %v1898
        %1919 = vmatprep.subr.bf16.mxu0 0
        %1920 = vmatpush2.bf16.msra.mxu0 0
        %1921 = vmatprep.subr.bf16.mxu0 0
        %1922 = vmatpush2.bf16.msra.mxu0 0
        %1923 = vmatprep.subr.bf16.mxu0 0
        %1924 = vmatpush2.bf16.msra.mxu0 0
        %1925 = vmatprep.subr.bf16.mxu0 0
        %1926 = vmatpush2.bf16.msra.mxu0 0
        %1927 = vmatprep.subr.bf16.mxu0 0
        %1928 = vmatpush2.bf16.msra.mxu0 0
        %1929 = vmatprep.subr.bf16.mxu0 0
        %1930 = vmatpush2.bf16.msra.mxu0 0
        %1931 = vmatprep.subr.bf16.mxu0 0
        %1932 = vmatpush2.bf16.msra.mxu0 0
        %1933 = vmatprep.subr.bf16.mxu0 0
        %1934 = vmatpush2.bf16.msra.mxu0 0
        %1935 = vmatprep.mubr.bf16.mxu0 0
        %1936 = vmatmul.mubr.bf16.gmra.mxu0 %v1895
        %v1937 = vpop.f32.mrf.mxu0
        %v1938 = vadd.f32 0.0, %v1937
        %v1939 = vpop.f32.mrf.mxu0
        %v1940 = vadd.f32 0.0, %v1939
        %v1941 = vpop.f32.mrf.mxu0
        %v1942 = vpop.f32.mrf.mxu0
        %1943 = vdwg.mxu0
        %s1944 = scalar_lea.vmem %s1, 16
        %v1945 = vld [vmem:[%s1944] ss:$8 sm:$0x3]
        %v1947 = vlaneseq
        %v1948 = vshrl.u32 %v1947, 7
        %v1949 = vsub.s32 0, %v1948
        %v1950 = vrot.slane %v1945, %v1949
        %v1951 = vlaneseq
        %v1952 = vshrl.u32 %v1951, 7
        %v1953 = vsub.s32 1, %v1952
        %v1954 = vrot.slane %v1945, %v1953
        %v1957 = vmul.f32 %v1938, %v1950
        %v1958 = vmul.f32 %v1940, %v1954
        %v1959 = vadd.f32 %v1881, %v1957
        %v1960 = vadd.f32 %v1882, %v1958
        %v1961 = vld [vmem:[%s8] sm:$0xff]
        %1963 = vset.pattern.permute.xlu0 0
        %1964 = vperm.xlu0 %1963, %v1961
        %v1965 = vpop.permute.xlu0 %1964
        %v1967 = vadd.f32 %v1959, %v1965
        %v1968 = vadd.f32 %v1960, %v1965
        %v1969 = vmax.f32 %v1967, 0.0
        %v1970 = vmax.f32 %v1968, 0.0
        %1971 = vst [vmem:[%s644] sm:$0xff] %v1969
        %1972 = vst [vmem:[%s644 + $0x8] sm:$0xff] %v1970
        %v1973 = vld [vmem:[%s661] sm:$0xf]
        %v1974 = vld [vmem:[%s661 + $0x4] sm:$0xf]
        %v1975 = vld [vmem:[%s661 + $0x8] sm:$0xf]
        %v1976 = vld [vmem:[%s661 + $0xc] sm:$0xf]
        %v1981 = vunpack.c.l.b16 %v1973
        %v1982 = vunpack.c.l.b16 %v1974
        %v1983 = vunpack.c.l.b16 %v1975
        %v1984 = vunpack.c.l.b16 %v1976
        %v1985 = vpack.c.b16 %v1982, %v1981
        %v1986 = vpack.c.b16 %v1984, %v1983
        %1987 = vrot.lane.b32.xlu0 %v1985, 5
        %v1988 = vpop.permute.xlu0 %1987
        %1989 = vrot.lane.b32.xlu0 %v1986, 5
        %v1990 = vpop.permute.xlu0 %1989
        %vm1991 = vcmask 39936
        %v1993 = vsel %vm1991, 0, %v1988
        %v1995 = vsel %vm1991, 0, %v1990
        %vm1996 = vcmask 171008
        %v1997 = vsel %vm1996, %v1993, 0
        %v1999 = vsel %vm1996, %v1995, 0
        %v2001 = vld [vmem:[%s10] sm:$0xf]
        %vm2002 = vcmask 261120
        %v2004 = vsel %vm2002, %v2001, 0
        %2006 = vmatprep.subr.bf16.mxu0 0
        %2007 = vmatpush1.bf16.msra.mxu0 0
        %2008 = vmatprep.subr.bf16.mxu0 0
        %2009 = vmatpush1.bf16.msra.mxu0 0
        %2010 = vmatprep.subr.bf16.mxu0 0
        %2011 = vmatpush1.bf16.msra.mxu0 0
        %2012 = vmatprep.subr.bf16.mxu0 0
        %2013 = vmatpush1.bf16.msra.mxu0 0
        %2014 = vmatprep.subr.bf16.mxu0 0
        %2015 = vmatpush1.bf16.msra.mxu0 0
        %2016 = vmatprep.subr.bf16.mxu0 0
        %2017 = vmatpush1.bf16.msra.mxu0 0
        %2018 = vmatprep.subr.bf16.mxu0 0
        %2019 = vmatpush1.bf16.msra.mxu0 %v1999
        %2020 = vmatprep.subr.bf16.mxu0 0
        %2021 = vmatpush1.bf16.msra.mxu0 %v1997
        %2022 = vmatprep.subr.bf16.mxu0 0
        %2023 = vmatpush2.bf16.msra.mxu0 0
        %2024 = vmatprep.subr.bf16.mxu0 0
        %2025 = vmatpush2.bf16.msra.mxu0 0
        %2026 = vmatprep.subr.bf16.mxu0 0
        %2027 = vmatpush2.bf16.msra.mxu0 0
        %2028 = vmatprep.subr.bf16.mxu0 0
        %2029 = vmatpush2.bf16.msra.mxu0 0
        %2030 = vmatprep.subr.bf16.mxu0 0
        %2031 = vmatpush2.bf16.msra.mxu0 0
        %2032 = vmatprep.subr.bf16.mxu0 0
        %2033 = vmatpush2.bf16.msra.mxu0 0
        %2034 = vmatprep.subr.bf16.mxu0 0
        %2035 = vmatpush2.bf16.msra.mxu0 0
        %2036 = vmatprep.subr.bf16.mxu0 0
        %2037 = vmatpush2.bf16.msra.mxu0 0
        %2038 = vmatprep.mubr.bf16.mxu0 0
        %2039 = vmatmul.mubr.bf16.gmra.mxu0 %v2004
        %v2040 = vpop.f32.mrf.mxu0
        %v2041 = vadd.f32 0.0, %v2040
        %v2042 = vpop.f32.mrf.mxu0
        %v2043 = vpop.f32.mrf.mxu0
        %v2044 = vpop.f32.mrf.mxu0
        %2045 = vdwg.mxu0
        %v2046 = vld [vmem:[#allocation7] sm:$0x1]
        %v2047 = vlaneseq
        %v2048 = vshrl.u32 %v2047, 7
        %v2049 = vsub.s32 0, %v2048
        %v2050 = vrot.slane %v2046, %v2049
        %v2051 = vmul.f32 %v2041, %v2050
        %s2052 = scalar_lea.vmem %s10, 4
        %v2053 = vld [vmem:[%s2052] sm:$0xf]
        %2056 = vrot.lane.b32.xlu0 %v1997, 127
        %v2057 = vpop.permute.xlu0 %2056
        %2058 = vrot.lane.b32.xlu0 %v1999, 127
        %v2059 = vpop.permute.xlu0 %2058
        %v2063 = vsel %vm2002, %v2053, 0
        %2065 = vmatprep.subr.bf16.mxu0 0
        %2066 = vmatpush1.bf16.msra.mxu0 0
        %2067 = vmatprep.subr.bf16.mxu0 0
        %2068 = vmatpush1.bf16.msra.mxu0 0
        %2069 = vmatprep.subr.bf16.mxu0 0
        %2070 = vmatpush1.bf16.msra.mxu0 0
        %2071 = vmatprep.subr.bf16.mxu0 0
        %2072 = vmatpush1.bf16.msra.mxu0 0
        %2073 = vmatprep.subr.bf16.mxu0 0
        %2074 = vmatpush1.bf16.msra.mxu0 0
        %2075 = vmatprep.subr.bf16.mxu0 0
        %2076 = vmatpush1.bf16.msra.mxu0 0
        %2077 = vmatprep.subr.bf16.mxu0 0
        %2078 = vmatpush1.bf16.msra.mxu0 %v2059
        %2079 = vmatprep.subr.bf16.mxu0 0
        %2080 = vmatpush1.bf16.msra.mxu0 %v2057
        %2081 = vmatprep.subr.bf16.mxu0 0
        %2082 = vmatpush2.bf16.msra.mxu0 0
        %2083 = vmatprep.subr.bf16.mxu0 0
        %2084 = vmatpush2.bf16.msra.mxu0 0
        %2085 = vmatprep.subr.bf16.mxu0 0
        %2086 = vmatpush2.bf16.msra.mxu0 0
        %2087 = vmatprep.subr.bf16.mxu0 0
        %2088 = vmatpush2.bf16.msra.mxu0 0
        %2089 = vmatprep.subr.bf16.mxu0 0
        %2090 = vmatpush2.bf16.msra.mxu0 0
        %2091 = vmatprep.subr.bf16.mxu0 0
        %2092 = vmatpush2.bf16.msra.mxu0 0
        %2093 = vmatprep.subr.bf16.mxu0 0
        %2094 = vmatpush2.bf16.msra.mxu0 0
        %2095 = vmatprep.subr.bf16.mxu0 0
        %2096 = vmatpush2.bf16.msra.mxu0 0
        %2097 = vmatprep.mubr.bf16.mxu0 0
        %2098 = vmatmul.mubr.bf16.gmra.mxu0 %v2063
        %v2099 = vpop.f32.mrf.mxu0
        %v2100 = vadd.f32 0.0, %v2099
        %v2101 = vpop.f32.mrf.mxu0
        %v2102 = vpop.f32.mrf.mxu0
        %v2103 = vpop.f32.mrf.mxu0
        %2104 = vdwg.mxu0
        %v2105 = vld [vmem:[#allocation7 + $0x1] sm:$0x1]
        %v2106 = vlaneseq
        %v2107 = vshrl.u32 %v2106, 7
        %v2108 = vsub.s32 0, %v2107
        %v2109 = vrot.slane %v2105, %v2108
        %v2110 = vmul.f32 %v2100, %v2109
        %v2111 = vadd.f32 %v2051, %v2110
        %s2112 = scalar_lea.vmem %s10, 8
        %v2113 = vld [vmem:[%s2112] sm:$0xf]
        %2114 = vrot.lane.b32.xlu0 %v1997, 126
        %v2115 = vpop.permute.xlu0 %2114
        %2116 = vrot.lane.b32.xlu0 %v1999, 126
        %v2117 = vpop.permute.xlu0 %2116
        %v2121 = vsel %vm2002, %v2113, 0
        %2123 = vmatprep.subr.bf16.mxu0 0
        %2124 = vmatpush1.bf16.msra.mxu0 0
        %2125 = vmatprep.subr.bf16.mxu0 0
        %2126 = vmatpush1.bf16.msra.mxu0 0
        %2127 = vmatprep.subr.bf16.mxu0 0
        %2128 = vmatpush1.bf16.msra.mxu0 0
        %2129 = vmatprep.subr.bf16.mxu0 0
        %2130 = vmatpush1.bf16.msra.mxu0 0
        %2131 = vmatprep.subr.bf16.mxu0 0
        %2132 = vmatpush1.bf16.msra.mxu0 0
        %2133 = vmatprep.subr.bf16.mxu0 0
        %2134 = vmatpush1.bf16.msra.mxu0 0
        %2135 = vmatprep.subr.bf16.mxu0 0
        %2136 = vmatpush1.bf16.msra.mxu0 %v2117
        %2137 = vmatprep.subr.bf16.mxu0 0
        %2138 = vmatpush1.bf16.msra.mxu0 %v2115
        %2139 = vmatprep.subr.bf16.mxu0 0
        %2140 = vmatpush2.bf16.msra.mxu0 0
        %2141 = vmatprep.subr.bf16.mxu0 0
        %2142 = vmatpush2.bf16.msra.mxu0 0
        %2143 = vmatprep.subr.bf16.mxu0 0
        %2144 = vmatpush2.bf16.msra.mxu0 0
        %2145 = vmatprep.subr.bf16.mxu0 0
        %2146 = vmatpush2.bf16.msra.mxu0 0
        %2147 = vmatprep.subr.bf16.mxu0 0
        %2148 = vmatpush2.bf16.msra.mxu0 0
        %2149 = vmatprep.subr.bf16.mxu0 0
        %2150 = vmatpush2.bf16.msra.mxu0 0
        %2151 = vmatprep.subr.bf16.mxu0 0
        %2152 = vmatpush2.bf16.msra.mxu0 0
        %2153 = vmatprep.subr.bf16.mxu0 0
        %2154 = vmatpush2.bf16.msra.mxu0 0
        %2155 = vmatprep.mubr.bf16.mxu0 0
        %2156 = vmatmul.mubr.bf16.gmra.mxu0 %v2121
        %v2157 = vpop.f32.mrf.mxu0
        %v2158 = vadd.f32 0.0, %v2157
        %v2159 = vpop.f32.mrf.mxu0
        %v2160 = vpop.f32.mrf.mxu0
        %v2161 = vpop.f32.mrf.mxu0
        %2162 = vdwg.mxu0
        %v2163 = vld [vmem:[#allocation7 + $0x2] sm:$0x1]
        %v2164 = vlaneseq
        %v2165 = vshrl.u32 %v2164, 7
        %v2166 = vsub.s32 0, %v2165
        %v2167 = vrot.slane %v2163, %v2166
        %v2168 = vmul.f32 %v2158, %v2167
        %v2169 = vadd.f32 %v2111, %v2168
        %s2170 = scalar_lea.vmem %s10, 12
        %v2171 = vld [vmem:[%s2170] sm:$0xf]
        %2172 = vrot.lane.b32.xlu0 %v1997, 124
        %v2173 = vpop.permute.xlu0 %2172
        %2174 = vrot.lane.b32.xlu0 %v1999, 124
        %v2175 = vpop.permute.xlu0 %2174
        %v2179 = vsel %vm2002, %v2171, 0
        %2181 = vmatprep.subr.bf16.mxu0 0
        %2182 = vmatpush1.bf16.msra.mxu0 0
        %2183 = vmatprep.subr.bf16.mxu0 0
        %2184 = vmatpush1.bf16.msra.mxu0 0
        %2185 = vmatprep.subr.bf16.mxu0 0
        %2186 = vmatpush1.bf16.msra.mxu0 0
        %2187 = vmatprep.subr.bf16.mxu0 0
        %2188 = vmatpush1.bf16.msra.mxu0 0
        %2189 = vmatprep.subr.bf16.mxu0 0
        %2190 = vmatpush1.bf16.msra.mxu0 0
        %2191 = vmatprep.subr.bf16.mxu0 0
        %2192 = vmatpush1.bf16.msra.mxu0 0
        %2193 = vmatprep.subr.bf16.mxu0 0
        %2194 = vmatpush1.bf16.msra.mxu0 %v2175
        %2195 = vmatprep.subr.bf16.mxu0 0
        %2196 = vmatpush1.bf16.msra.mxu0 %v2173
        %2197 = vmatprep.subr.bf16.mxu0 0
        %2198 = vmatpush2.bf16.msra.mxu0 0
        %2199 = vmatprep.subr.bf16.mxu0 0
        %2200 = vmatpush2.bf16.msra.mxu0 0
        %2201 = vmatprep.subr.bf16.mxu0 0
        %2202 = vmatpush2.bf16.msra.mxu0 0
        %2203 = vmatprep.subr.bf16.mxu0 0
        %2204 = vmatpush2.bf16.msra.mxu0 0
        %2205 = vmatprep.subr.bf16.mxu0 0
        %2206 = vmatpush2.bf16.msra.mxu0 0
        %2207 = vmatprep.subr.bf16.mxu0 0
        %2208 = vmatpush2.bf16.msra.mxu0 0
        %2209 = vmatprep.subr.bf16.mxu0 0
        %2210 = vmatpush2.bf16.msra.mxu0 0
        %2211 = vmatprep.subr.bf16.mxu0 0
        %2212 = vmatpush2.bf16.msra.mxu0 0
        %2213 = vmatprep.mubr.bf16.mxu0 0
        %2214 = vmatmul.mubr.bf16.gmra.mxu0 %v2179
        %v2215 = vpop.f32.mrf.mxu0
        %v2216 = vadd.f32 0.0, %v2215
        %v2217 = vpop.f32.mrf.mxu0
        %v2218 = vpop.f32.mrf.mxu0
        %v2219 = vpop.f32.mrf.mxu0
        %2220 = vdwg.mxu0
        %v2221 = vld [vmem:[#allocation7 + $0x3] sm:$0x1]
        %v2222 = vlaneseq
        %v2223 = vshrl.u32 %v2222, 7
        %v2224 = vsub.s32 0, %v2223
        %v2225 = vrot.slane %v2221, %v2224
        %v2226 = vmul.f32 %v2216, %v2225
        %v2227 = vadd.f32 %v2169, %v2226
        %s2228 = scalar_lea.vmem %s10, 16
        %v2229 = vld [vmem:[%s2228] sm:$0xf]
        %2230 = vrot.lane.b32.xlu0 %v1997, 123
        %v2231 = vpop.permute.xlu0 %2230
        %2232 = vrot.lane.b32.xlu0 %v1999, 123
        %v2233 = vpop.permute.xlu0 %2232
        %v2237 = vsel %vm2002, %v2229, 0
        %2239 = vmatprep.subr.bf16.mxu0 0
        %2240 = vmatpush1.bf16.msra.mxu0 0
        %2241 = vmatprep.subr.bf16.mxu0 0
        %2242 = vmatpush1.bf16.msra.mxu0 0
        %2243 = vmatprep.subr.bf16.mxu0 0
        %2244 = vmatpush1.bf16.msra.mxu0 0
        %2245 = vmatprep.subr.bf16.mxu0 0
        %2246 = vmatpush1.bf16.msra.mxu0 0
        %2247 = vmatprep.subr.bf16.mxu0 0
        %2248 = vmatpush1.bf16.msra.mxu0 0
        %2249 = vmatprep.subr.bf16.mxu0 0
        %2250 = vmatpush1.bf16.msra.mxu0 0
        %2251 = vmatprep.subr.bf16.mxu0 0
        %2252 = vmatpush1.bf16.msra.mxu0 %v2233
        %2253 = vmatprep.subr.bf16.mxu0 0
        %2254 = vmatpush1.bf16.msra.mxu0 %v2231
        %2255 = vmatprep.subr.bf16.mxu0 0
        %2256 = vmatpush2.bf16.msra.mxu0 0
        %2257 = vmatprep.subr.bf16.mxu0 0
        %2258 = vmatpush2.bf16.msra.mxu0 0
        %2259 = vmatprep.subr.bf16.mxu0 0
        %2260 = vmatpush2.bf16.msra.mxu0 0
        %2261 = vmatprep.subr.bf16.mxu0 0
        %2262 = vmatpush2.bf16.msra.mxu0 0
        %2263 = vmatprep.subr.bf16.mxu0 0
        %2264 = vmatpush2.bf16.msra.mxu0 0
        %2265 = vmatprep.subr.bf16.mxu0 0
        %2266 = vmatpush2.bf16.msra.mxu0 0
        %2267 = vmatprep.subr.bf16.mxu0 0
        %2268 = vmatpush2.bf16.msra.mxu0 0
        %2269 = vmatprep.subr.bf16.mxu0 0
        %2270 = vmatpush2.bf16.msra.mxu0 0
        %2271 = vmatprep.mubr.bf16.mxu0 0
        %2272 = vmatmul.mubr.bf16.gmra.mxu0 %v2237
        %v2273 = vpop.f32.mrf.mxu0
        %v2274 = vadd.f32 0.0, %v2273
        %v2275 = vpop.f32.mrf.mxu0
        %v2276 = vpop.f32.mrf.mxu0
        %v2277 = vpop.f32.mrf.mxu0
        %2278 = vdwg.mxu0
        %v2279 = vadd.f32 %v2227, %v2274
        %s2280 = scalar_lea.vmem %s10, 20
        %v2281 = vld [vmem:[%s2280] sm:$0xf]
        %2282 = vrot.lane.b32.xlu0 %v1997, 122
        %v2283 = vpop.permute.xlu0 %2282
        %2284 = vrot.lane.b32.xlu0 %v1999, 122
        %v2285 = vpop.permute.xlu0 %2284
        %v2289 = vsel %vm2002, %v2281, 0
        %2291 = vmatprep.subr.bf16.mxu0 0
        %2292 = vmatpush1.bf16.msra.mxu0 0
        %2293 = vmatprep.subr.bf16.mxu0 0
        %2294 = vmatpush1.bf16.msra.mxu0 0
        %2295 = vmatprep.subr.bf16.mxu0 0
        %2296 = vmatpush1.bf16.msra.mxu0 0
        %2297 = vmatprep.subr.bf16.mxu0 0
        %2298 = vmatpush1.bf16.msra.mxu0 0
        %2299 = vmatprep.subr.bf16.mxu0 0
        %2300 = vmatpush1.bf16.msra.mxu0 0
        %2301 = vmatprep.subr.bf16.mxu0 0
        %2302 = vmatpush1.bf16.msra.mxu0 0
        %2303 = vmatprep.subr.bf16.mxu0 0
        %2304 = vmatpush1.bf16.msra.mxu0 %v2285
        %2305 = vmatprep.subr.bf16.mxu0 0
        %2306 = vmatpush1.bf16.msra.mxu0 %v2283
        %2307 = vmatprep.subr.bf16.mxu0 0
        %2308 = vmatpush2.bf16.msra.mxu0 0
        %2309 = vmatprep.subr.bf16.mxu0 0
        %2310 = vmatpush2.bf16.msra.mxu0 0
        %2311 = vmatprep.subr.bf16.mxu0 0
        %2312 = vmatpush2.bf16.msra.mxu0 0
        %2313 = vmatprep.subr.bf16.mxu0 0
        %2314 = vmatpush2.bf16.msra.mxu0 0
        %2315 = vmatprep.subr.bf16.mxu0 0
        %2316 = vmatpush2.bf16.msra.mxu0 0
        %2317 = vmatprep.subr.bf16.mxu0 0
        %2318 = vmatpush2.bf16.msra.mxu0 0
        %2319 = vmatprep.subr.bf16.mxu0 0
        %2320 = vmatpush2.bf16.msra.mxu0 0
        %2321 = vmatprep.subr.bf16.mxu0 0
        %2322 = vmatpush2.bf16.msra.mxu0 0
        %2323 = vmatprep.mubr.bf16.mxu0 0
        %2324 = vmatmul.mubr.bf16.gmra.mxu0 %v2289
        %v2325 = vpop.f32.mrf.mxu0
        %v2326 = vadd.f32 0.0, %v2325
        %v2327 = vpop.f32.mrf.mxu0
        %v2328 = vpop.f32.mrf.mxu0
        %v2329 = vpop.f32.mrf.mxu0
        %2330 = vdwg.mxu0
        %v2331 = vld [vmem:[#allocation7 + $0x5] sm:$0x1]
        %v2332 = vlaneseq
        %v2333 = vshrl.u32 %v2332, 7
        %v2334 = vsub.s32 0, %v2333
        %v2335 = vrot.slane %v2331, %v2334
        %v2336 = vmul.f32 %v2326, %v2335
        %v2337 = vadd.f32 %v2279, %v2336
        %s2338 = scalar_lea.vmem %s10, 24
        %v2339 = vld [vmem:[%s2338] sm:$0xf]
        %2340 = vrot.lane.b32.xlu0 %v1997, 120
        %v2341 = vpop.permute.xlu0 %2340
        %2342 = vrot.lane.b32.xlu0 %v1999, 120
        %v2343 = vpop.permute.xlu0 %2342
        %v2347 = vsel %vm2002, %v2339, 0
        %2349 = vmatprep.subr.bf16.mxu0 0
        %2350 = vmatpush1.bf16.msra.mxu0 0
        %2351 = vmatprep.subr.bf16.mxu0 0
        %2352 = vmatpush1.bf16.msra.mxu0 0
        %2353 = vmatprep.subr.bf16.mxu0 0
        %2354 = vmatpush1.bf16.msra.mxu0 0
        %2355 = vmatprep.subr.bf16.mxu0 0
        %2356 = vmatpush1.bf16.msra.mxu0 0
        %2357 = vmatprep.subr.bf16.mxu0 0
        %2358 = vmatpush1.bf16.msra.mxu0 0
        %2359 = vmatprep.subr.bf16.mxu0 0
        %2360 = vmatpush1.bf16.msra.mxu0 0
        %2361 = vmatprep.subr.bf16.mxu0 0
        %2362 = vmatpush1.bf16.msra.mxu0 %v2343
        %2363 = vmatprep.subr.bf16.mxu0 0
        %2364 = vmatpush1.bf16.msra.mxu0 %v2341
        %2365 = vmatprep.subr.bf16.mxu0 0
        %2366 = vmatpush2.bf16.msra.mxu0 0
        %2367 = vmatprep.subr.bf16.mxu0 0
        %2368 = vmatpush2.bf16.msra.mxu0 0
        %2369 = vmatprep.subr.bf16.mxu0 0
        %2370 = vmatpush2.bf16.msra.mxu0 0
        %2371 = vmatprep.subr.bf16.mxu0 0
        %2372 = vmatpush2.bf16.msra.mxu0 0
        %2373 = vmatprep.subr.bf16.mxu0 0
        %2374 = vmatpush2.bf16.msra.mxu0 0
        %2375 = vmatprep.subr.bf16.mxu0 0
        %2376 = vmatpush2.bf16.msra.mxu0 0
        %2377 = vmatprep.subr.bf16.mxu0 0
        %2378 = vmatpush2.bf16.msra.mxu0 0
        %2379 = vmatprep.subr.bf16.mxu0 0
        %2380 = vmatpush2.bf16.msra.mxu0 0
        %2381 = vmatprep.mubr.bf16.mxu0 0
        %2382 = vmatmul.mubr.bf16.gmra.mxu0 %v2347
        %v2383 = vpop.f32.mrf.mxu0
        %v2384 = vadd.f32 0.0, %v2383
        %v2385 = vpop.f32.mrf.mxu0
        %v2386 = vpop.f32.mrf.mxu0
        %v2387 = vpop.f32.mrf.mxu0
        %2388 = vdwg.mxu0
        %v2389 = vld [vmem:[#allocation7 + $0x6] sm:$0x1]
        %v2390 = vlaneseq
        %v2391 = vshrl.u32 %v2390, 7
        %v2392 = vsub.s32 0, %v2391
        %v2393 = vrot.slane %v2389, %v2392
        %v2394 = vmul.f32 %v2384, %v2393
        %v2395 = vadd.f32 %v2337, %v2394
        %s2396 = scalar_lea.vmem %s10, 28
        %v2397 = vld [vmem:[%s2396] sm:$0xf]
        %2398 = vrot.lane.b32.xlu0 %v1997, 119
        %v2399 = vpop.permute.xlu0 %2398
        %2400 = vrot.lane.b32.xlu0 %v1999, 119
        %v2401 = vpop.permute.xlu0 %2400
        %v2405 = vsel %vm2002, %v2397, 0
        %2407 = vmatprep.subr.bf16.mxu0 0
        %2408 = vmatpush1.bf16.msra.mxu0 0
        %2409 = vmatprep.subr.bf16.mxu0 0
        %2410 = vmatpush1.bf16.msra.mxu0 0
        %2411 = vmatprep.subr.bf16.mxu0 0
        %2412 = vmatpush1.bf16.msra.mxu0 0
        %2413 = vmatprep.subr.bf16.mxu0 0
        %2414 = vmatpush1.bf16.msra.mxu0 0
        %2415 = vmatprep.subr.bf16.mxu0 0
        %2416 = vmatpush1.bf16.msra.mxu0 0
        %2417 = vmatprep.subr.bf16.mxu0 0
        %2418 = vmatpush1.bf16.msra.mxu0 0
        %2419 = vmatprep.subr.bf16.mxu0 0
        %2420 = vmatpush1.bf16.msra.mxu0 %v2401
        %2421 = vmatprep.subr.bf16.mxu0 0
        %2422 = vmatpush1.bf16.msra.mxu0 %v2399
        %2423 = vmatprep.subr.bf16.mxu0 0
        %2424 = vmatpush2.bf16.msra.mxu0 0
        %2425 = vmatprep.subr.bf16.mxu0 0
        %2426 = vmatpush2.bf16.msra.mxu0 0
        %2427 = vmatprep.subr.bf16.mxu0 0
        %2428 = vmatpush2.bf16.msra.mxu0 0
        %2429 = vmatprep.subr.bf16.mxu0 0
        %2430 = vmatpush2.bf16.msra.mxu0 0
        %2431 = vmatprep.subr.bf16.mxu0 0
        %2432 = vmatpush2.bf16.msra.mxu0 0
        %2433 = vmatprep.subr.bf16.mxu0 0
        %2434 = vmatpush2.bf16.msra.mxu0 0
        %2435 = vmatprep.subr.bf16.mxu0 0
        %2436 = vmatpush2.bf16.msra.mxu0 0
        %2437 = vmatprep.subr.bf16.mxu0 0
        %2438 = vmatpush2.bf16.msra.mxu0 0
        %2439 = vmatprep.mubr.bf16.mxu0 0
        %2440 = vmatmul.mubr.bf16.gmra.mxu0 %v2405
        %v2441 = vpop.f32.mrf.mxu0
        %v2442 = vadd.f32 0.0, %v2441
        %v2443 = vpop.f32.mrf.mxu0
        %v2444 = vpop.f32.mrf.mxu0
        %v2445 = vpop.f32.mrf.mxu0
        %2446 = vdwg.mxu0
        %v2447 = vld [vmem:[#allocation7 + $0x7] sm:$0x1]
        %v2448 = vlaneseq
        %v2449 = vshrl.u32 %v2448, 7
        %v2450 = vsub.s32 0, %v2449
        %v2451 = vrot.slane %v2447, %v2450
        %v2452 = vmul.f32 %v2442, %v2451
        %v2453 = vadd.f32 %v2395, %v2452
        %s2454 = scalar_lea.vmem %s10, 32
        %v2455 = vld [vmem:[%s2454] sm:$0xf]
        %2456 = vrot.lane.b32.xlu0 %v1997, 118
        %v2457 = vpop.permute.xlu0 %2456
        %2458 = vrot.lane.b32.xlu0 %v1999, 118
        %v2459 = vpop.permute.xlu0 %2458
        %v2463 = vsel %vm2002, %v2455, 0
        %2465 = vmatprep.subr.bf16.mxu0 0
        %2466 = vmatpush1.bf16.msra.mxu0 0
        %2467 = vmatprep.subr.bf16.mxu0 0
        %2468 = vmatpush1.bf16.msra.mxu0 0
        %2469 = vmatprep.subr.bf16.mxu0 0
        %2470 = vmatpush1.bf16.msra.mxu0 0
        %2471 = vmatprep.subr.bf16.mxu0 0
        %2472 = vmatpush1.bf16.msra.mxu0 0
        %2473 = vmatprep.subr.bf16.mxu0 0
        %2474 = vmatpush1.bf16.msra.mxu0 0
        %2475 = vmatprep.subr.bf16.mxu0 0
        %2476 = vmatpush1.bf16.msra.mxu0 0
        %2477 = vmatprep.subr.bf16.mxu0 0
        %2478 = vmatpush1.bf16.msra.mxu0 %v2459
        %2479 = vmatprep.subr.bf16.mxu0 0
        %2480 = vmatpush1.bf16.msra.mxu0 %v2457
        %2481 = vmatprep.subr.bf16.mxu0 0
        %2482 = vmatpush2.bf16.msra.mxu0 0
        %2483 = vmatprep.subr.bf16.mxu0 0
        %2484 = vmatpush2.bf16.msra.mxu0 0
        %2485 = vmatprep.subr.bf16.mxu0 0
        %2486 = vmatpush2.bf16.msra.mxu0 0
        %2487 = vmatprep.subr.bf16.mxu0 0
        %2488 = vmatpush2.bf16.msra.mxu0 0
        %2489 = vmatprep.subr.bf16.mxu0 0
        %2490 = vmatpush2.bf16.msra.mxu0 0
        %2491 = vmatprep.subr.bf16.mxu0 0
        %2492 = vmatpush2.bf16.msra.mxu0 0
        %2493 = vmatprep.subr.bf16.mxu0 0
        %2494 = vmatpush2.bf16.msra.mxu0 0
        %2495 = vmatprep.subr.bf16.mxu0 0
        %2496 = vmatpush2.bf16.msra.mxu0 0
        %2497 = vmatprep.mubr.bf16.mxu0 0
        %2498 = vmatmul.mubr.bf16.gmra.mxu0 %v2463
        %v2499 = vpop.f32.mrf.mxu0
        %v2500 = vadd.f32 0.0, %v2499
        %v2501 = vpop.f32.mrf.mxu0
        %v2502 = vpop.f32.mrf.mxu0
        %v2503 = vpop.f32.mrf.mxu0
        %2504 = vdwg.mxu0
        %v2505 = vld [vmem:[#allocation7 + $0x8] sm:$0x1]
        %v2506 = vlaneseq
        %v2507 = vshrl.u32 %v2506, 7
        %v2508 = vsub.s32 0, %v2507
        %v2509 = vrot.slane %v2505, %v2508
        %v2510 = vmul.f32 %v2500, %v2509
        %v2511 = vadd.f32 %v2453, %v2510
        %v2512 = vld [vmem:[%s11] sm:$0xff]
        %2514 = vset.pattern.permute.xlu0 0
        %2515 = vperm.xlu0 %2514, %v2512
        %v2516 = vpop.permute.xlu0 %2515
        %v2518 = vadd.f32 %v2511, %v2516
        %v2519 = vmax.f32 %v2518, 0.0
        %v2520 = vpack.c.bf16 %v2519, %v2519
        %v2521 = vld [vmem:[#allocation8] sm:$0xff]
        %v2522 = vld [vmem:[#allocation8 + $0x8] sm:$0xff]
        %v2525 = vunpack.c.l.b16 %v2521
        %v2526 = vunpack.c.h.b16 %v2521
        %v2527 = vunpack.c.l.b16 %v2522
        %v2528 = vunpack.c.h.b16 %v2522
        %v2529 = vpack.c.b16 %v2527, %v2525
        %v2530 = vpack.c.b16 %v2528, %v2526
        %v2534 = vsel %vm682, %v2520, 0
        %2536 = vmatprep.subr.bf16.mxu0 0
        %2537 = vmatpush1.bf16.msra.mxu0 0
        %2538 = vmatprep.subr.bf16.mxu0 0
        %2539 = vmatpush1.bf16.msra.mxu0 0
        %2540 = vmatprep.subr.bf16.mxu0 0
        %2541 = vmatpush1.bf16.msra.mxu0 0
        %2542 = vmatprep.subr.bf16.mxu0 0
        %2543 = vmatpush1.bf16.msra.mxu0 0
        %2544 = vmatprep.subr.bf16.mxu0 0
        %2545 = vmatpush1.bf16.msra.mxu0 0
        %2546 = vmatprep.subr.bf16.mxu0 0
        %2547 = vmatpush1.bf16.msra.mxu0 0
        %2548 = vmatprep.subr.bf16.mxu0 0
        %2549 = vmatpush1.bf16.msra.mxu0 0
        %2550 = vmatprep.subr.bf16.mxu0 %v2530
        %2551 = vmatpush1.bf16.msra.mxu0 %v2529
        %2552 = vmatprep.subr.bf16.mxu0 0
        %2553 = vmatpush2.bf16.msra.mxu0 0
        %2554 = vmatprep.subr.bf16.mxu0 0
        %2555 = vmatpush2.bf16.msra.mxu0 0
        %2556 = vmatprep.subr.bf16.mxu0 0
        %2557 = vmatpush2.bf16.msra.mxu0 0
        %2558 = vmatprep.subr.bf16.mxu0 0
        %2559 = vmatpush2.bf16.msra.mxu0 0
        %2560 = vmatprep.subr.bf16.mxu0 0
        %2561 = vmatpush2.bf16.msra.mxu0 0
        %2562 = vmatprep.subr.bf16.mxu0 0
        %2563 = vmatpush2.bf16.msra.mxu0 0
        %2564 = vmatprep.subr.bf16.mxu0 0
        %2565 = vmatpush2.bf16.msra.mxu0 0
        %2566 = vmatprep.subr.bf16.mxu0 0
        %2567 = vmatpush2.bf16.msra.mxu0 0
        %2568 = vmatprep.mubr.bf16.mxu0 0
        %2569 = vmatmul.mubr.bf16.gmra.mxu0 %v2534
        %v2570 = vpop.f32.mrf.mxu0
        %v2571 = vadd.f32 %v1969, %v2570
        %v2572 = vpop.f32.mrf.mxu0
        %v2573 = vadd.f32 %v1970, %v2572
        %v2574 = vpop.f32.mrf.mxu0
        %v2575 = vpop.f32.mrf.mxu0
        %2576 = vdwg.mxu0
        %v2577 = vpack.c.bf16 %v2571, %v2571
        %v2578 = vpack.c.bf16 %v2573, %v2573
        %2581 = vrot.lane.b32.xlu0 %v2577, 17
        %v2582 = vpop.permute.xlu0 %2581
        %2583 = vrot.lane.b32.xlu0 %v2578, 17
        %v2584 = vpop.permute.xlu0 %2583
        %v2585 = vsel %vm1277, %v2582, %v2584
        %v2587 = vsel %vm1279, 0, %v2582
        %v2589 = vsel %vm1279, %v2584, 0
        %v2590 = vld [vmem:[%s14] sm:$0xf]
        %v2592 = vsel %vm1285, %v2590, 0
        %v2594 = vsel %vm1289, %v2587, 0
        %v2597 = vsel %vm1289, %v2585, 0
        %2599 = vmatprep.subr.bf16.mxu0 0
        %2600 = vmatpush1.bf16.msra.mxu0 0
        %2601 = vmatprep.subr.bf16.mxu0 0
        %2602 = vmatpush1.bf16.msra.mxu0 0
        %2603 = vmatprep.subr.bf16.mxu0 0
        %2604 = vmatpush1.bf16.msra.mxu0 0
        %2605 = vmatprep.subr.bf16.mxu0 0
        %2606 = vmatpush1.bf16.msra.mxu0 0
        %2607 = vmatprep.subr.bf16.mxu0 0
        %2608 = vmatpush1.bf16.msra.mxu0 0
        %2609 = vmatprep.subr.bf16.mxu0 0
        %2610 = vmatpush1.bf16.msra.mxu0 0
        %2611 = vmatprep.subr.bf16.mxu0 0
        %2612 = vmatpush1.bf16.msra.mxu0 0
        %2613 = vmatprep.subr.bf16.mxu0 %v2597
        %2614 = vmatpush1.bf16.msra.mxu0 %v2594
        %2615 = vmatprep.subr.bf16.mxu0 0
        %2616 = vmatpush2.bf16.msra.mxu0 0
        %2617 = vmatprep.subr.bf16.mxu0 0
        %2618 = vmatpush2.bf16.msra.mxu0 0
        %2619 = vmatprep.subr.bf16.mxu0 0
        %2620 = vmatpush2.bf16.msra.mxu0 0
        %2621 = vmatprep.subr.bf16.mxu0 0
        %2622 = vmatpush2.bf16.msra.mxu0 0
        %2623 = vmatprep.subr.bf16.mxu0 0
        %2624 = vmatpush2.bf16.msra.mxu0 0
        %2625 = vmatprep.subr.bf16.mxu0 0
        %2626 = vmatpush2.bf16.msra.mxu0 0
        %2627 = vmatprep.subr.bf16.mxu0 0
        %2628 = vmatpush2.bf16.msra.mxu0 0
        %2629 = vmatprep.subr.bf16.mxu0 0
        %2630 = vmatpush2.bf16.msra.mxu0 0
        %2631 = vmatprep.mubr.bf16.mxu0 0
        %2632 = vmatmul.mubr.bf16.gmra.mxu0 %v2592
        %v2633 = vpop.f32.mrf.mxu0
        %v2634 = vadd.f32 0.0, %v2633
        %v2635 = vpop.f32.mrf.mxu0
        %v2636 = vadd.f32 0.0, %v2635
        %v2637 = vpop.f32.mrf.mxu0
        %v2638 = vpop.f32.mrf.mxu0
        %2639 = vdwg.mxu0
        %v2640 = vld [vmem:[%s1] ss:$8 sm:$0x3]
        %v2642 = vlaneseq
        %v2643 = vshrl.u32 %v2642, 7
        %v2644 = vsub.s32 0, %v2643
        %v2645 = vrot.slane %v2640, %v2644
        %v2646 = vlaneseq
        %v2647 = vshrl.u32 %v2646, 7
        %v2648 = vsub.s32 1, %v2647
        %v2649 = vrot.slane %v2640, %v2648
        %v2652 = vmul.f32 %v2634, %v2645
        %v2653 = vmul.f32 %v2636, %v2649
        %s2654 = scalar_lea.vmem %s14, 4
        %v2655 = vld [vmem:[%s2654] sm:$0xf]
        %2658 = vrot.lane.b32.xlu0 %v2587, 127
        %v2659 = vpop.permute.xlu0 %2658
        %2660 = vrot.lane.b32.xlu0 %v2585, 127
        %v2661 = vpop.permute.xlu0 %2660
        %2662 = vrot.lane.b32.xlu0 %v2589, 127
        %v2663 = vpop.permute.xlu0 %2662
        %v2664 = vsel %vm1360, %v2659, %v2661
        %v2665 = vsel %vm1360, %v2661, %v2663
        %v2667 = vsel %vm1285, %v2655, 0
        %v2670 = vsel %vm1289, %v2664, 0
        %v2673 = vsel %vm1289, %v2665, 0
        %2675 = vmatprep.subr.bf16.mxu0 0
        %2676 = vmatpush1.bf16.msra.mxu0 0
        %2677 = vmatprep.subr.bf16.mxu0 0
        %2678 = vmatpush1.bf16.msra.mxu0 0
        %2679 = vmatprep.subr.bf16.mxu0 0
        %2680 = vmatpush1.bf16.msra.mxu0 0
        %2681 = vmatprep.subr.bf16.mxu0 0
        %2682 = vmatpush1.bf16.msra.mxu0 0
        %2683 = vmatprep.subr.bf16.mxu0 0
        %2684 = vmatpush1.bf16.msra.mxu0 0
        %2685 = vmatprep.subr.bf16.mxu0 0
        %2686 = vmatpush1.bf16.msra.mxu0 0
        %2687 = vmatprep.subr.bf16.mxu0 0
        %2688 = vmatpush1.bf16.msra.mxu0 0
        %2689 = vmatprep.subr.bf16.mxu0 %v2673
        %2690 = vmatpush1.bf16.msra.mxu0 %v2670
        %2691 = vmatprep.subr.bf16.mxu0 0
        %2692 = vmatpush2.bf16.msra.mxu0 0
        %2693 = vmatprep.subr.bf16.mxu0 0
        %2694 = vmatpush2.bf16.msra.mxu0 0
        %2695 = vmatprep.subr.bf16.mxu0 0
        %2696 = vmatpush2.bf16.msra.mxu0 0
        %2697 = vmatprep.subr.bf16.mxu0 0
        %2698 = vmatpush2.bf16.msra.mxu0 0
        %2699 = vmatprep.subr.bf16.mxu0 0
        %2700 = vmatpush2.bf16.msra.mxu0 0
        %2701 = vmatprep.subr.bf16.mxu0 0
        %2702 = vmatpush2.bf16.msra.mxu0 0
        %2703 = vmatprep.subr.bf16.mxu0 0
        %2704 = vmatpush2.bf16.msra.mxu0 0
        %2705 = vmatprep.subr.bf16.mxu0 0
        %2706 = vmatpush2.bf16.msra.mxu0 0
        %2707 = vmatprep.mubr.bf16.mxu0 0
        %2708 = vmatmul.mubr.bf16.gmra.mxu0 %v2667
        %v2709 = vpop.f32.mrf.mxu0
        %v2710 = vadd.f32 0.0, %v2709
        %v2711 = vpop.f32.mrf.mxu0
        %v2712 = vadd.f32 0.0, %v2711
        %v2713 = vpop.f32.mrf.mxu0
        %v2714 = vpop.f32.mrf.mxu0
        %2715 = vdwg.mxu0
        %v2716 = vld [vmem:[%s1413] ss:$8 sm:$0x3]
        %v2718 = vlaneseq
        %v2719 = vshrl.u32 %v2718, 7
        %v2720 = vsub.s32 0, %v2719
        %v2721 = vrot.slane %v2716, %v2720
        %v2722 = vlaneseq
        %v2723 = vshrl.u32 %v2722, 7
        %v2724 = vsub.s32 1, %v2723
        %v2725 = vrot.slane %v2716, %v2724
        %v2728 = vmul.f32 %v2710, %v2721
        %v2729 = vmul.f32 %v2712, %v2725
        %v2730 = vadd.f32 %v2652, %v2728
        %v2731 = vadd.f32 %v2653, %v2729
        %s2732 = scalar_lea.vmem %s14, 8
        %v2733 = vld [vmem:[%s2732] sm:$0xf]
        %2734 = vrot.lane.b32.xlu0 %v2587, 126
        %v2735 = vpop.permute.xlu0 %2734
        %2736 = vrot.lane.b32.xlu0 %v2585, 126
        %v2737 = vpop.permute.xlu0 %2736
        %2738 = vrot.lane.b32.xlu0 %v2589, 126
        %v2739 = vpop.permute.xlu0 %2738
        %v2740 = vsel %vm1438, %v2735, %v2737
        %v2741 = vsel %vm1438, %v2737, %v2739
        %v2743 = vsel %vm1285, %v2733, 0
        %v2746 = vsel %vm1289, %v2740, 0
        %v2749 = vsel %vm1289, %v2741, 0
        %2751 = vmatprep.subr.bf16.mxu0 0
        %2752 = vmatpush1.bf16.msra.mxu0 0
        %2753 = vmatprep.subr.bf16.mxu0 0
        %2754 = vmatpush1.bf16.msra.mxu0 0
        %2755 = vmatprep.subr.bf16.mxu0 0
        %2756 = vmatpush1.bf16.msra.mxu0 0
        %2757 = vmatprep.subr.bf16.mxu0 0
        %2758 = vmatpush1.bf16.msra.mxu0 0
        %2759 = vmatprep.subr.bf16.mxu0 0
        %2760 = vmatpush1.bf16.msra.mxu0 0
        %2761 = vmatprep.subr.bf16.mxu0 0
        %2762 = vmatpush1.bf16.msra.mxu0 0
        %2763 = vmatprep.subr.bf16.mxu0 0
        %2764 = vmatpush1.bf16.msra.mxu0 0
        %2765 = vmatprep.subr.bf16.mxu0 %v2749
        %2766 = vmatpush1.bf16.msra.mxu0 %v2746
        %2767 = vmatprep.subr.bf16.mxu0 0
        %2768 = vmatpush2.bf16.msra.mxu0 0
        %2769 = vmatprep.subr.bf16.mxu0 0
        %2770 = vmatpush2.bf16.msra.mxu0 0
        %2771 = vmatprep.subr.bf16.mxu0 0
        %2772 = vmatpush2.bf16.msra.mxu0 0
        %2773 = vmatprep.subr.bf16.mxu0 0
        %2774 = vmatpush2.bf16.msra.mxu0 0
        %2775 = vmatprep.subr.bf16.mxu0 0
        %2776 = vmatpush2.bf16.msra.mxu0 0
        %2777 = vmatprep.subr.bf16.mxu0 0
        %2778 = vmatpush2.bf16.msra.mxu0 0
        %2779 = vmatprep.subr.bf16.mxu0 0
        %2780 = vmatpush2.bf16.msra.mxu0 0
        %2781 = vmatprep.subr.bf16.mxu0 0
        %2782 = vmatpush2.bf16.msra.mxu0 0
        %2783 = vmatprep.mubr.bf16.mxu0 0
        %2784 = vmatmul.mubr.bf16.gmra.mxu0 %v2743
        %v2785 = vpop.f32.mrf.mxu0
        %v2786 = vadd.f32 0.0, %v2785
        %v2787 = vpop.f32.mrf.mxu0
        %v2788 = vadd.f32 0.0, %v2787
        %v2789 = vpop.f32.mrf.mxu0
        %v2790 = vpop.f32.mrf.mxu0
        %2791 = vdwg.mxu0
        %v2792 = vld [vmem:[%s1491] ss:$8 sm:$0x3]
        %v2794 = vlaneseq
        %v2795 = vshrl.u32 %v2794, 7
        %v2796 = vsub.s32 0, %v2795
        %v2797 = vrot.slane %v2792, %v2796
        %v2798 = vlaneseq
        %v2799 = vshrl.u32 %v2798, 7
        %v2800 = vsub.s32 1, %v2799
        %v2801 = vrot.slane %v2792, %v2800
        %v2804 = vmul.f32 %v2786, %v2797
        %v2805 = vmul.f32 %v2788, %v2801
        %v2806 = vadd.f32 %v2730, %v2804
        %v2807 = vadd.f32 %v2731, %v2805
        %s2808 = scalar_lea.vmem %s14, 12
        %v2809 = vld [vmem:[%s2808] sm:$0xf]
        %2810 = vrot.lane.b32.xlu0 %v2587, 112
        %v2811 = vpop.permute.xlu0 %2810
        %2812 = vrot.lane.b32.xlu0 %v2585, 112
        %v2813 = vpop.permute.xlu0 %2812
        %2814 = vrot.lane.b32.xlu0 %v2589, 112
        %v2815 = vpop.permute.xlu0 %2814
        %v2816 = vsel %vm1516, %v2811, %v2813
        %v2817 = vsel %vm1516, %v2813, %v2815
        %v2819 = vsel %vm1285, %v2809, 0
        %v2822 = vsel %vm1289, %v2816, 0
        %v2825 = vsel %vm1289, %v2817, 0
        %2827 = vmatprep.subr.bf16.mxu0 0
        %2828 = vmatpush1.bf16.msra.mxu0 0
        %2829 = vmatprep.subr.bf16.mxu0 0
        %2830 = vmatpush1.bf16.msra.mxu0 0
        %2831 = vmatprep.subr.bf16.mxu0 0
        %2832 = vmatpush1.bf16.msra.mxu0 0
        %2833 = vmatprep.subr.bf16.mxu0 0
        %2834 = vmatpush1.bf16.msra.mxu0 0
        %2835 = vmatprep.subr.bf16.mxu0 0
        %2836 = vmatpush1.bf16.msra.mxu0 0
        %2837 = vmatprep.subr.bf16.mxu0 0
        %2838 = vmatpush1.bf16.msra.mxu0 0
        %2839 = vmatprep.subr.bf16.mxu0 0
        %2840 = vmatpush1.bf16.msra.mxu0 0
        %2841 = vmatprep.subr.bf16.mxu0 %v2825
        %2842 = vmatpush1.bf16.msra.mxu0 %v2822
        %2843 = vmatprep.subr.bf16.mxu0 0
        %2844 = vmatpush2.bf16.msra.mxu0 0
        %2845 = vmatprep.subr.bf16.mxu0 0
        %2846 = vmatpush2.bf16.msra.mxu0 0
        %2847 = vmatprep.subr.bf16.mxu0 0
        %2848 = vmatpush2.bf16.msra.mxu0 0
        %2849 = vmatprep.subr.bf16.mxu0 0
        %2850 = vmatpush2.bf16.msra.mxu0 0
        %2851 = vmatprep.subr.bf16.mxu0 0
        %2852 = vmatpush2.bf16.msra.mxu0 0
        %2853 = vmatprep.subr.bf16.mxu0 0
        %2854 = vmatpush2.bf16.msra.mxu0 0
        %2855 = vmatprep.subr.bf16.mxu0 0
        %2856 = vmatpush2.bf16.msra.mxu0 0
        %2857 = vmatprep.subr.bf16.mxu0 0
        %2858 = vmatpush2.bf16.msra.mxu0 0
        %2859 = vmatprep.mubr.bf16.mxu0 0
        %2860 = vmatmul.mubr.bf16.gmra.mxu0 %v2819
        %v2861 = vpop.f32.mrf.mxu0
        %v2862 = vadd.f32 0.0, %v2861
        %v2863 = vpop.f32.mrf.mxu0
        %v2864 = vadd.f32 0.0, %v2863
        %v2865 = vpop.f32.mrf.mxu0
        %v2866 = vpop.f32.mrf.mxu0
        %2867 = vdwg.mxu0
        %v2868 = vld [vmem:[%s1569] ss:$8 sm:$0x3]
        %v2870 = vlaneseq
        %v2871 = vshrl.u32 %v2870, 7
        %v2872 = vsub.s32 0, %v2871
        %v2873 = vrot.slane %v2868, %v2872
        %v2874 = vlaneseq
        %v2875 = vshrl.u32 %v2874, 7
        %v2876 = vsub.s32 1, %v2875
        %v2877 = vrot.slane %v2868, %v2876
        %v2880 = vmul.f32 %v2862, %v2873
        %v2881 = vmul.f32 %v2864, %v2877
        %v2882 = vadd.f32 %v2806, %v2880
        %v2883 = vadd.f32 %v2807, %v2881
        %s2884 = scalar_lea.vmem %s14, 16
        %v2885 = vld [vmem:[%s2884] sm:$0xf]
        %2886 = vrot.lane.b32.xlu0 %v2587, 111
        %v2887 = vpop.permute.xlu0 %2886
        %2888 = vrot.lane.b32.xlu0 %v2585, 111
        %v2889 = vpop.permute.xlu0 %2888
        %2890 = vrot.lane.b32.xlu0 %v2589, 111
        %v2891 = vpop.permute.xlu0 %2890
        %v2892 = vsel %vm1594, %v2887, %v2889
        %v2893 = vsel %vm1594, %v2889, %v2891
        %v2895 = vsel %vm1285, %v2885, 0
        %v2898 = vsel %vm1289, %v2892, 0
        %v2901 = vsel %vm1289, %v2893, 0
        %2903 = vmatprep.subr.bf16.mxu0 0
        %2904 = vmatpush1.bf16.msra.mxu0 0
        %2905 = vmatprep.subr.bf16.mxu0 0
        %2906 = vmatpush1.bf16.msra.mxu0 0
        %2907 = vmatprep.subr.bf16.mxu0 0
        %2908 = vmatpush1.bf16.msra.mxu0 0
        %2909 = vmatprep.subr.bf16.mxu0 0
        %2910 = vmatpush1.bf16.msra.mxu0 0
        %2911 = vmatprep.subr.bf16.mxu0 0
        %2912 = vmatpush1.bf16.msra.mxu0 0
        %2913 = vmatprep.subr.bf16.mxu0 0
        %2914 = vmatpush1.bf16.msra.mxu0 0
        %2915 = vmatprep.subr.bf16.mxu0 0
        %2916 = vmatpush1.bf16.msra.mxu0 0
        %2917 = vmatprep.subr.bf16.mxu0 %v2901
        %2918 = vmatpush1.bf16.msra.mxu0 %v2898
        %2919 = vmatprep.subr.bf16.mxu0 0
        %2920 = vmatpush2.bf16.msra.mxu0 0
        %2921 = vmatprep.subr.bf16.mxu0 0
        %2922 = vmatpush2.bf16.msra.mxu0 0
        %2923 = vmatprep.subr.bf16.mxu0 0
        %2924 = vmatpush2.bf16.msra.mxu0 0
        %2925 = vmatprep.subr.bf16.mxu0 0
        %2926 = vmatpush2.bf16.msra.mxu0 0
        %2927 = vmatprep.subr.bf16.mxu0 0
        %2928 = vmatpush2.bf16.msra.mxu0 0
        %2929 = vmatprep.subr.bf16.mxu0 0
        %2930 = vmatpush2.bf16.msra.mxu0 0
        %2931 = vmatprep.subr.bf16.mxu0 0
        %2932 = vmatpush2.bf16.msra.mxu0 0
        %2933 = vmatprep.subr.bf16.mxu0 0
        %2934 = vmatpush2.bf16.msra.mxu0 0
        %2935 = vmatprep.mubr.bf16.mxu0 0
        %2936 = vmatmul.mubr.bf16.gmra.mxu0 %v2895
        %v2937 = vpop.f32.mrf.mxu0
        %v2938 = vadd.f32 0.0, %v2937
        %v2939 = vpop.f32.mrf.mxu0
        %v2940 = vadd.f32 0.0, %v2939
        %v2941 = vpop.f32.mrf.mxu0
        %v2942 = vpop.f32.mrf.mxu0
        %2943 = vdwg.mxu0
        %v2944 = vadd.f32 %v2882, %v2938
        %v2945 = vadd.f32 %v2883, %v2940
        %s2946 = scalar_lea.vmem %s14, 20
        %v2947 = vld [vmem:[%s2946] sm:$0xf]
        %2948 = vrot.lane.b32.xlu0 %v2587, 110
        %v2949 = vpop.permute.xlu0 %2948
        %2950 = vrot.lane.b32.xlu0 %v2585, 110
        %v2951 = vpop.permute.xlu0 %2950
        %2952 = vrot.lane.b32.xlu0 %v2589, 110
        %v2953 = vpop.permute.xlu0 %2952
        %v2954 = vsel %vm1657, %v2949, %v2951
        %v2955 = vsel %vm1657, %v2951, %v2953
        %v2957 = vsel %vm1285, %v2947, 0
        %v2960 = vsel %vm1289, %v2954, 0
        %v2963 = vsel %vm1289, %v2955, 0
        %2965 = vmatprep.subr.bf16.mxu0 0
        %2966 = vmatpush1.bf16.msra.mxu0 0
        %2967 = vmatprep.subr.bf16.mxu0 0
        %2968 = vmatpush1.bf16.msra.mxu0 0
        %2969 = vmatprep.subr.bf16.mxu0 0
        %2970 = vmatpush1.bf16.msra.mxu0 0
        %2971 = vmatprep.subr.bf16.mxu0 0
        %2972 = vmatpush1.bf16.msra.mxu0 0
        %2973 = vmatprep.subr.bf16.mxu0 0
        %2974 = vmatpush1.bf16.msra.mxu0 0
        %2975 = vmatprep.subr.bf16.mxu0 0
        %2976 = vmatpush1.bf16.msra.mxu0 0
        %2977 = vmatprep.subr.bf16.mxu0 0
        %2978 = vmatpush1.bf16.msra.mxu0 0
        %2979 = vmatprep.subr.bf16.mxu0 %v2963
        %2980 = vmatpush1.bf16.msra.mxu0 %v2960
        %2981 = vmatprep.subr.bf16.mxu0 0
        %2982 = vmatpush2.bf16.msra.mxu0 0
        %2983 = vmatprep.subr.bf16.mxu0 0
        %2984 = vmatpush2.bf16.msra.mxu0 0
        %2985 = vmatprep.subr.bf16.mxu0 0
        %2986 = vmatpush2.bf16.msra.mxu0 0
        %2987 = vmatprep.subr.bf16.mxu0 0
        %2988 = vmatpush2.bf16.msra.mxu0 0
        %2989 = vmatprep.subr.bf16.mxu0 0
        %2990 = vmatpush2.bf16.msra.mxu0 0
        %2991 = vmatprep.subr.bf16.mxu0 0
        %2992 = vmatpush2.bf16.msra.mxu0 0
        %2993 = vmatprep.subr.bf16.mxu0 0
        %2994 = vmatpush2.bf16.msra.mxu0 0
        %2995 = vmatprep.subr.bf16.mxu0 0
        %2996 = vmatpush2.bf16.msra.mxu0 0
        %2997 = vmatprep.mubr.bf16.mxu0 0
        %2998 = vmatmul.mubr.bf16.gmra.mxu0 %v2957
        %v2999 = vpop.f32.mrf.mxu0
        %v3000 = vadd.f32 0.0, %v2999
        %v3001 = vpop.f32.mrf.mxu0
        %v3002 = vadd.f32 0.0, %v3001
        %v3003 = vpop.f32.mrf.mxu0
        %v3004 = vpop.f32.mrf.mxu0
        %3005 = vdwg.mxu0
        %v3006 = vld [vmem:[%s1710] ss:$8 sm:$0x3]
        %v3008 = vlaneseq
        %v3009 = vshrl.u32 %v3008, 7
        %v3010 = vsub.s32 0, %v3009
        %v3011 = vrot.slane %v3006, %v3010
        %v3012 = vlaneseq
        %v3013 = vshrl.u32 %v3012, 7
        %v3014 = vsub.s32 1, %v3013
        %v3015 = vrot.slane %v3006, %v3014
        %v3018 = vmul.f32 %v3000, %v3011
        %v3019 = vmul.f32 %v3002, %v3015
        %v3020 = vadd.f32 %v2944, %v3018
        %v3021 = vadd.f32 %v2945, %v3019
        %s3022 = scalar_lea.vmem %s14, 24
        %v3023 = vld [vmem:[%s3022] sm:$0xf]
        %3024 = vrot.lane.b32.xlu0 %v2587, 96
        %v3025 = vpop.permute.xlu0 %3024
        %3026 = vrot.lane.b32.xlu0 %v2585, 96
        %v3027 = vpop.permute.xlu0 %3026
        %3028 = vrot.lane.b32.xlu0 %v2589, 96
        %v3029 = vpop.permute.xlu0 %3028
        %v3030 = vsel %vm1735, %v3025, %v3027
        %v3031 = vsel %vm1735, %v3027, %v3029
        %v3033 = vsel %vm1285, %v3023, 0
        %v3036 = vsel %vm1289, %v3030, 0
        %v3039 = vsel %vm1289, %v3031, 0
        %3041 = vmatprep.subr.bf16.mxu0 0
        %3042 = vmatpush1.bf16.msra.mxu0 0
        %3043 = vmatprep.subr.bf16.mxu0 0
        %3044 = vmatpush1.bf16.msra.mxu0 0
        %3045 = vmatprep.subr.bf16.mxu0 0
        %3046 = vmatpush1.bf16.msra.mxu0 0
        %3047 = vmatprep.subr.bf16.mxu0 0
        %3048 = vmatpush1.bf16.msra.mxu0 0
        %3049 = vmatprep.subr.bf16.mxu0 0
        %3050 = vmatpush1.bf16.msra.mxu0 0
        %3051 = vmatprep.subr.bf16.mxu0 0
        %3052 = vmatpush1.bf16.msra.mxu0 0
        %3053 = vmatprep.subr.bf16.mxu0 0
        %3054 = vmatpush1.bf16.msra.mxu0 0
        %3055 = vmatprep.subr.bf16.mxu0 %v3039
        %3056 = vmatpush1.bf16.msra.mxu0 %v3036
        %3057 = vmatprep.subr.bf16.mxu0 0
        %3058 = vmatpush2.bf16.msra.mxu0 0
        %3059 = vmatprep.subr.bf16.mxu0 0
        %3060 = vmatpush2.bf16.msra.mxu0 0
        %3061 = vmatprep.subr.bf16.mxu0 0
        %3062 = vmatpush2.bf16.msra.mxu0 0
        %3063 = vmatprep.subr.bf16.mxu0 0
        %3064 = vmatpush2.bf16.msra.mxu0 0
        %3065 = vmatprep.subr.bf16.mxu0 0
        %3066 = vmatpush2.bf16.msra.mxu0 0
        %3067 = vmatprep.subr.bf16.mxu0 0
        %3068 = vmatpush2.bf16.msra.mxu0 0
        %3069 = vmatprep.subr.bf16.mxu0 0
        %3070 = vmatpush2.bf16.msra.mxu0 0
        %3071 = vmatprep.subr.bf16.mxu0 0
        %3072 = vmatpush2.bf16.msra.mxu0 0
        %3073 = vmatprep.mubr.bf16.mxu0 0
        %3074 = vmatmul.mubr.bf16.gmra.mxu0 %v3033
        %v3075 = vpop.f32.mrf.mxu0
        %v3076 = vadd.f32 0.0, %v3075
        %v3077 = vpop.f32.mrf.mxu0
        %v3078 = vadd.f32 0.0, %v3077
        %v3079 = vpop.f32.mrf.mxu0
        %v3080 = vpop.f32.mrf.mxu0
        %3081 = vdwg.mxu0
        %v3082 = vld [vmem:[%s1788] ss:$8 sm:$0x3]
        %v3084 = vlaneseq
        %v3085 = vshrl.u32 %v3084, 7
        %v3086 = vsub.s32 0, %v3085
        %v3087 = vrot.slane %v3082, %v3086
        %v3088 = vlaneseq
        %v3089 = vshrl.u32 %v3088, 7
        %v3090 = vsub.s32 1, %v3089
        %v3091 = vrot.slane %v3082, %v3090
        %v3094 = vmul.f32 %v3076, %v3087
        %v3095 = vmul.f32 %v3078, %v3091
        %v3096 = vadd.f32 %v3020, %v3094
        %v3097 = vadd.f32 %v3021, %v3095
        %s3098 = scalar_lea.vmem %s14, 28
        %v3099 = vld [vmem:[%s3098] sm:$0xf]
        %3100 = vrot.lane.b32.xlu0 %v2587, 95
        %v3101 = vpop.permute.xlu0 %3100
        %3102 = vrot.lane.b32.xlu0 %v2585, 95
        %v3103 = vpop.permute.xlu0 %3102
        %3104 = vrot.lane.b32.xlu0 %v2589, 95
        %v3105 = vpop.permute.xlu0 %3104
        %v3106 = vsel %vm1813, %v3101, %v3103
        %v3107 = vsel %vm1813, %v3103, %v3105
        %v3109 = vsel %vm1285, %v3099, 0
        %v3112 = vsel %vm1289, %v3106, 0
        %v3115 = vsel %vm1289, %v3107, 0
        %3117 = vmatprep.subr.bf16.mxu0 0
        %3118 = vmatpush1.bf16.msra.mxu0 0
        %3119 = vmatprep.subr.bf16.mxu0 0
        %3120 = vmatpush1.bf16.msra.mxu0 0
        %3121 = vmatprep.subr.bf16.mxu0 0
        %3122 = vmatpush1.bf16.msra.mxu0 0
        %3123 = vmatprep.subr.bf16.mxu0 0
        %3124 = vmatpush1.bf16.msra.mxu0 0
        %3125 = vmatprep.subr.bf16.mxu0 0
        %3126 = vmatpush1.bf16.msra.mxu0 0
        %3127 = vmatprep.subr.bf16.mxu0 0
        %3128 = vmatpush1.bf16.msra.mxu0 0
        %3129 = vmatprep.subr.bf16.mxu0 0
        %3130 = vmatpush1.bf16.msra.mxu0 0
        %3131 = vmatprep.subr.bf16.mxu0 %v3115
        %3132 = vmatpush1.bf16.msra.mxu0 %v3112
        %3133 = vmatprep.subr.bf16.mxu0 0
        %3134 = vmatpush2.bf16.msra.mxu0 0
        %3135 = vmatprep.subr.bf16.mxu0 0
        %3136 = vmatpush2.bf16.msra.mxu0 0
        %3137 = vmatprep.subr.bf16.mxu0 0
        %3138 = vmatpush2.bf16.msra.mxu0 0
        %3139 = vmatprep.subr.bf16.mxu0 0
        %3140 = vmatpush2.bf16.msra.mxu0 0
        %3141 = vmatprep.subr.bf16.mxu0 0
        %3142 = vmatpush2.bf16.msra.mxu0 0
        %3143 = vmatprep.subr.bf16.mxu0 0
        %3144 = vmatpush2.bf16.msra.mxu0 0
        %3145 = vmatprep.subr.bf16.mxu0 0
        %3146 = vmatpush2.bf16.msra.mxu0 0
        %3147 = vmatprep.subr.bf16.mxu0 0
        %3148 = vmatpush2.bf16.msra.mxu0 0
        %3149 = vmatprep.mubr.bf16.mxu0 0
        %3150 = vmatmul.mubr.bf16.gmra.mxu0 %v3109
        %v3151 = vpop.f32.mrf.mxu0
        %v3152 = vadd.f32 0.0, %v3151
        %v3153 = vpop.f32.mrf.mxu0
        %v3154 = vadd.f32 0.0, %v3153
        %v3155 = vpop.f32.mrf.mxu0
        %v3156 = vpop.f32.mrf.mxu0
        %3157 = vdwg.mxu0
        %v3158 = vld [vmem:[%s1866] ss:$8 sm:$0x3]
        %v3160 = vlaneseq
        %v3161 = vshrl.u32 %v3160, 7
        %v3162 = vsub.s32 0, %v3161
        %v3163 = vrot.slane %v3158, %v3162
        %v3164 = vlaneseq
        %v3165 = vshrl.u32 %v3164, 7
        %v3166 = vsub.s32 1, %v3165
        %v3167 = vrot.slane %v3158, %v3166
        %v3170 = vmul.f32 %v3152, %v3163
        %v3171 = vmul.f32 %v3154, %v3167
        %v3172 = vadd.f32 %v3096, %v3170
        %v3173 = vadd.f32 %v3097, %v3171
        %s3174 = scalar_lea.vmem %s14, 32
        %v3175 = vld [vmem:[%s3174] sm:$0xf]
        %3176 = vrot.lane.b32.xlu0 %v2587, 94
        %v3177 = vpop.permute.xlu0 %3176
        %3178 = vrot.lane.b32.xlu0 %v2585, 94
        %v3179 = vpop.permute.xlu0 %3178
        %3180 = vrot.lane.b32.xlu0 %v2589, 94
        %v3181 = vpop.permute.xlu0 %3180
        %v3182 = vsel %vm1891, %v3177, %v3179
        %v3183 = vsel %vm1891, %v3179, %v3181
        %v3185 = vsel %vm1285, %v3175, 0
        %v3188 = vsel %vm1289, %v3182, 0
        %v3191 = vsel %vm1289, %v3183, 0
        %3193 = vmatprep.subr.bf16.mxu0 0
        %3194 = vmatpush1.bf16.msra.mxu0 0
        %3195 = vmatprep.subr.bf16.mxu0 0
        %3196 = vmatpush1.bf16.msra.mxu0 0
        %3197 = vmatprep.subr.bf16.mxu0 0
        %3198 = vmatpush1.bf16.msra.mxu0 0
        %3199 = vmatprep.subr.bf16.mxu0 0
        %3200 = vmatpush1.bf16.msra.mxu0 0
        %3201 = vmatprep.subr.bf16.mxu0 0
        %3202 = vmatpush1.bf16.msra.mxu0 0
        %3203 = vmatprep.subr.bf16.mxu0 0
        %3204 = vmatpush1.bf16.msra.mxu0 0
        %3205 = vmatprep.subr.bf16.mxu0 0
        %3206 = vmatpush1.bf16.msra.mxu0 0
        %3207 = vmatprep.subr.bf16.mxu0 %v3191
        %3208 = vmatpush1.bf16.msra.mxu0 %v3188
        %3209 = vmatprep.subr.bf16.mxu0 0
        %3210 = vmatpush2.bf16.msra.mxu0 0
        %3211 = vmatprep.subr.bf16.mxu0 0
        %3212 = vmatpush2.bf16.msra.mxu0 0
        %3213 = vmatprep.subr.bf16.mxu0 0
        %3214 = vmatpush2.bf16.msra.mxu0 0
        %3215 = vmatprep.subr.bf16.mxu0 0
        %3216 = vmatpush2.bf16.msra.mxu0 0
        %3217 = vmatprep.subr.bf16.mxu0 0
        %3218 = vmatpush2.bf16.msra.mxu0 0
        %3219 = vmatprep.subr.bf16.mxu0 0
        %3220 = vmatpush2.bf16.msra.mxu0 0
        %3221 = vmatprep.subr.bf16.mxu0 0
        %3222 = vmatpush2.bf16.msra.mxu0 0
        %3223 = vmatprep.subr.bf16.mxu0 0
        %3224 = vmatpush2.bf16.msra.mxu0 0
        %3225 = vmatprep.mubr.bf16.mxu0 0
        %3226 = vmatmul.mubr.bf16.gmra.mxu0 %v3185
        %v3227 = vpop.f32.mrf.mxu0
        %v3228 = vadd.f32 0.0, %v3227
        %v3229 = vpop.f32.mrf.mxu0
        %v3230 = vadd.f32 0.0, %v3229
        %v3231 = vpop.f32.mrf.mxu0
        %v3232 = vpop.f32.mrf.mxu0
        %3233 = vdwg.mxu0
        %v3234 = vld [vmem:[%s1944] ss:$8 sm:$0x3]
        %v3236 = vlaneseq
        %v3237 = vshrl.u32 %v3236, 7
        %v3238 = vsub.s32 0, %v3237
        %v3239 = vrot.slane %v3234, %v3238
        %v3240 = vlaneseq
        %v3241 = vshrl.u32 %v3240, 7
        %v3242 = vsub.s32 1, %v3241
        %v3243 = vrot.slane %v3234, %v3242
        %v3246 = vmul.f32 %v3228, %v3239
        %v3247 = vmul.f32 %v3230, %v3243
        %v3248 = vadd.f32 %v3172, %v3246
        %v3249 = vadd.f32 %v3173, %v3247
        %v3250 = vld [vmem:[%s15] sm:$0xff]
        %3252 = vset.pattern.permute.xlu0 0
        %3253 = vperm.xlu0 %3252, %v3250
        %v3254 = vpop.permute.xlu0 %3253
        %v3256 = vadd.f32 %v3248, %v3254
        %v3257 = vadd.f32 %v3249, %v3254
        %v3258 = vmax.f32 %v3256, 0.0
        %v3259 = vmax.f32 %v3257, 0.0
        %3260 = vst [vmem:[%s651] sm:$0xff] %v3258
        %3261 = vst [vmem:[%s651 + $0x8] sm:$0xff] %v3259
        %s3262 = sand.u32 %s399, 1
        %s3263 = scalar_lea.sflag [#allocation4], %s3262
        %s3264 = sand.u32 %s399, 1
        %s3265 = smul.addr %s3264, 16
        %s3266 = scalar_lea.vmem [#allocation10], %s3265
        %s3267 = sand.u32 %s425, 1
        %s3268 = scalar_lea.sflag [#allocation12], %s3267
        %s3269 = sand.u32 %s425, 1
        %s3270 = smul.addr %s3269, 16
        %s3271 = scalar_lea.vmem [#allocation11], %s3270
        // Predicated region
        $region101: #{tpu_custom_call.1} parent=83 // pred_check
          %p3272 = pneg %p409
        $region102: #{tpu_custom_call.1} parent=83 // pred_check_branch
          %3274 = sbr.rel (%p3272) target = $region104
        $region103: #{tpu_custom_call.1} parent=83 // pred_region
          %s3276 = ssub.s32 256, 256
          %3277 = vsyncadd %s3263, %s3276
          %s3278 = smul.addr %s40, 2
          %s3279 = smul.addr %s3278, 128
          %s3280 = scalar_lea.hbm %s16, %s3279
          %s3282 = sshll.u32 %s3266, 4
          %s3283 = int_to_ptr.vmem [resolvable:$true] %s3282
          %3285 = dma.vmem_to_hbm [thread:$0]  %s3283, 256, %s3280, %s3263
        $region104: #{tpu_custom_call.1} parent=83 // pred_fallthru
          _
        // Predicated region
        $region105: #{tpu_custom_call.1} parent=83 // pred_check
          %p3286 = pneg %p435
        $region106: #{tpu_custom_call.1} parent=83 // pred_check_branch
          %3288 = sbr.rel (%p3286) target = $region108
        $region107: #{tpu_custom_call.1} parent=83 // pred_region
          %s3290 = ssub.s32 256, 256
          %3291 = vsyncadd %s3268, %s3290
          %s3292 = smul.addr %s40, 2
          %s3293 = smul.addr %s3292, 128
          %s3294 = scalar_lea.hbm %s17, %s3293
          %s3296 = sshll.u32 %s3271, 4
          %s3297 = int_to_ptr.vmem [resolvable:$true] %s3296
          %3299 = dma.vmem_to_hbm [thread:$0]  %s3297, 256, %s3294, %s3268
        $region108: #{tpu_custom_call.1} parent=83 // pred_fallthru
          _
      $region84: #{tpu_custom_call.1} parent=5 // pred_fallthru
        _
      %p3300 = scmp.le.s32.totalorder 2, %s35
      // Predicated region
      $region109: #{tpu_custom_call.1} parent=5 // pred_check
        %p3301 = pneg %p3300
      $region110: #{tpu_custom_call.1} parent=5 // pred_check_branch
        %3303 = sbr.rel (%p3301) target = $region112
      $region111: #{tpu_custom_call.1} parent=5 // pred_region
        %s3304 = ssub.s32 %s35, 2
        // Predicated region
        $region113: #{tpu_custom_call.1} parent=111 // pred_check
          %p3305 = pneg %p415
        $region114: #{tpu_custom_call.1} parent=111 // pred_check_branch
          %3307 = sbr.rel (%p3305) target = $region116
        $region115: #{tpu_custom_call.1} parent=111 // pred_region
          %s3308 = sand.u32 %s400, 1
          %s3309 = scalar_lea.sflag [#allocation4], %s3308
          %s3310 = sand.u32 %s400, 1
          %s3311 = smul.addr %s3310, 16
          %s3312 = scalar_lea.vmem [#allocation10], %s3311
          %3313 = dma.done %s3309, 256
        $region116: #{tpu_custom_call.1} parent=111 // pred_fallthru
          _
        // Predicated region
        $region117: #{tpu_custom_call.1} parent=111 // pred_check
          %p3314 = pneg %p441
        $region118: #{tpu_custom_call.1} parent=111 // pred_check_branch
          %3316 = sbr.rel (%p3314) target = $region120
        $region119: #{tpu_custom_call.1} parent=111 // pred_region
          %s3317 = sand.u32 %s426, 1
          %s3318 = scalar_lea.sflag [#allocation12], %s3317
          %s3319 = sand.u32 %s426, 1
          %s3320 = smul.addr %s3319, 16
          %s3321 = scalar_lea.vmem [#allocation11], %s3320
          %3322 = dma.done %s3318, 256
        $region120: #{tpu_custom_call.1} parent=111 // pred_fallthru
          _
      $region112: #{tpu_custom_call.1} parent=5 // pred_fallthru
        _
    $region6: #{tpu_custom_call.1} parent=1 // loop_footer
      %s39 = sadd.s32 1, %s35
    $region7: #{tpu_custom_call.1} parent=1 // loop_footer_branch
      %34 = sbr.rel target = $region3
    $region8: #{tpu_custom_call.1} parent=1 // loop_exit
      _
    %3323 = vsyncpa [#allocation3], 1
    %s3324 = scalar_lea.sflag [#allocation3], 1
    %3325 = vsyncpa %s3324, 1
    %3326 = vsyncpa [#allocation6], 1
    %3327 = vsyncpa [#allocation9], 1
    %3328 = vsyncpa [#allocation4], 1
    %s3329 = scalar_lea.sflag [#allocation4], 1
    %3330 = vsyncpa %s3329, 1
    %3331 = vsyncpa [#allocation12], 1
    %s3332 = scalar_lea.sflag [#allocation12], 1
    %3333 = vsyncpa %s3332, 1

</llo_original>
